<compile_context>
chip_gen: v7x
topology: tpu7x:2x2x1
jax: 0.10.0
libtpu: 0.0.40
codegen_flags: <defaults>
</compile_context>

<pallas_src>
import jax
import jax.numpy as jnp
from jax.experimental import pallas as pl
from jax.experimental.pallas import tpu as pltpu

CFG_VGG11 = [64, 'M', 128, 'M', 256, 256, 'M', 512, 512, 'M', 512, 512]
NUM_CLASSES = 10
BN_EPS = 1e-5
FIRST_CIN = 8                      # pad 3 input channels -> 8 for lane layout
VMEM_LIMIT = 40 * 1024 * 1024      # sized for v7x's 64 MiB physical VMEM


# ---------------------------------------------------------------------------
# In-kernel helpers
# ---------------------------------------------------------------------------
def _pool2x2(x):
    """2x2 max-pool, stride 2, on an (H, W, C) value (pool is fused, tiny)."""
    H, W, C = x.shape
    x = x.reshape(H, W // 2, 2, C)
    x = jnp.max(x, axis=2)
    x = x.reshape(H // 2, 2, W // 2, C)
    x = jnp.max(x, axis=1)
    return x


def _make_group_kernel(num_convs, has_pool, has_head):
    """Fused [conv3x3+BN(folded)+ReLU]*k (+ maxpool2x2) (+ avgpool+Linear)."""

    def kernel(*args):
        n_in = 1 + 2 * num_convs + (2 if has_head else 0)
        x_ref = args[0]
        conv_args = args[1:1 + 2 * num_convs]
        if has_head:
            fcw_ref = args[1 + 2 * num_convs]
            fcb_ref = args[2 + 2 * num_convs]
        o_ref = args[n_in]
        scratch = args[n_in + 1:]

        cur = x_ref[0]                                  # (H, W, Cin) bf16

        for i in range(num_convs):
            w_ref = conv_args[2 * i]                    # (9*Cin, Cout) bf16
            b_ref = conv_args[2 * i + 1]                # (1, Cout)    f32
            pad_ref = scratch[2 * i]                    # (H+2, W+2, Cin) bf16
            col_ref = scratch[2 * i + 1]                # (H, W, 9*Cin)   bf16
            H, W, Cin = cur.shape

            # zero-padded halo built in VMEM (no HBM pad copy)
            pad_ref[...] = jnp.zeros_like(pad_ref)
            pad_ref[1:H + 1, 1:W + 1, :] = cur
            xp = pad_ref[...]                           # (H+2, W+2, Cin)

            # im2col: pack the 9 taps along the lane dim -> K = 9*Cin
            for ky in range(3):
                for kx in range(3):
                    t = 3 * ky + kx
                    col_ref[:, :, t * Cin:(t + 1) * Cin] = \
                        xp[ky:ky + H, kx:kx + W, :]

            # one MXU matmul per conv layer, f32 accumulation
            acc = jnp.einsum('hwk,ko->hwo', col_ref[...], w_ref[...],
                             preferred_element_type=jnp.float32)
            acc = acc + b_ref[...][:, None, :]          # folded BN bias
            cur = jnp.maximum(acc, 0.0).astype(jnp.bfloat16)

        if has_pool:
            cur = _pool2x2(cur)

        if has_head:
            Hc, Wc, _ = cur.shape
            v = cur.astype(jnp.float32)                 # (Hc, Wc, 512)
            s = jnp.sum(v, axis=0)                      # (Wc, 512)
            s = jnp.sum(s, axis=0, keepdims=True)       # (1, 512)
            pooled = s * (1.0 / float(Hc * Wc))         # adaptive avgpool (1,1)
            logits = jnp.dot(pooled, fcw_ref[...],
                             preferred_element_type=jnp.float32) + fcb_ref[...]
            o_ref[...] = logits.astype(o_ref.dtype)
        else:
            o_ref[0] = cur.astype(o_ref.dtype)

    return kernel


# ---------------------------------------------------------------------------
# pallas_call wrapper for one fused group
# ---------------------------------------------------------------------------
def _run_group(x_nhwc, convs, has_pool, has_head, head_params=None):
    N, H, W, Cin = x_nhwc.shape

    inputs = [x_nhwc]
    in_specs = [pl.BlockSpec((1, H, W, Cin), lambda n: (n, 0, 0, 0))]
    scratch = []
    c = Cin
    for (w9, b) in convs:
        K, Cout = w9.shape
        inputs += [w9, b]
        in_specs += [pl.BlockSpec((K, Cout), lambda n: (0, 0)),
                     pl.BlockSpec((1, Cout), lambda n: (0, 0))]
        scratch += [pltpu.VMEM((H + 2, W + 2, c), jnp.bfloat16),
                    pltpu.VMEM((H, W, 9 * c), jnp.bfloat16)]
        c = Cout

    if has_head:
        fc_w, fc_b = head_params
        ncls = fc_w.shape[-1]
        inputs += [fc_w, fc_b]
        in_specs += [pl.BlockSpec(fc_w.shape, lambda n: (0, 0)),
                     pl.BlockSpec(fc_b.shape, lambda n: (0, 0))]
        out_shape = jax.ShapeDtypeStruct((N, ncls), jnp.float32)
        out_spec = pl.BlockSpec((1, ncls), lambda n: (n, 0))
    else:
        Ho, Wo = (H // 2, W // 2) if has_pool else (H, W)
        out_shape = jax.ShapeDtypeStruct((N, Ho, Wo, c), jnp.bfloat16)
        out_spec = pl.BlockSpec((1, Ho, Wo, c), lambda n: (n, 0, 0, 0))

    kernel = _make_group_kernel(len(convs), has_pool, has_head)
    return pl.pallas_call(
        kernel,
        out_shape=out_shape,
        grid=(N,),
        in_specs=in_specs,
        out_specs=out_spec,
        scratch_shapes=scratch,
        compiler_params=pltpu.CompilerParams(
            dimension_semantics=("parallel",),
            vmem_limit_bytes=VMEM_LIMIT),
    )(*inputs)


# ---------------------------------------------------------------------------
# Parameter init (eval-mode BN folded into conv weights/bias), bf16 weights
# ---------------------------------------------------------------------------
def _parse_groups(cfg):
    groups, cur = [], []
    for item in cfg:
        if item == 'M':
            groups.append((cur, True))
            cur = []
        else:
            cur.append(item)
    if cur:
        groups.append((cur, False))
    return groups


def init_params(key):
    groups_cfg = _parse_groups(CFG_VGG11)
    in_c = 3
    first = True
    group_params = []
    for couts, has_pool in groups_cfg:
        convs = []
        for out_c in couts:
            key, k1, k2, k3, k4, k5, k6 = jax.random.split(key, 7)
            # torch layouts: Conv2d weight (Cout, Cin, 3, 3), bias (Cout,)
            w_t = jax.random.normal(k1, (out_c, in_c, 3, 3), jnp.float32) * 0.05
            conv_b = jax.random.normal(k2, (out_c,), jnp.float32) * 0.01
            gamma = 1.0 + 0.1 * jax.random.normal(k3, (out_c,), jnp.float32)
            beta = 0.1 * jax.random.normal(k4, (out_c,), jnp.float32)
            running_mean = 0.01 * jax.random.normal(k5, (out_c,), jnp.float32)
            running_var = 1.0 + 0.1 * jnp.abs(
                jax.random.normal(k6, (out_c,), jnp.float32))

            # fold eval-mode BN: scale into weights, shift into bias
            scale = gamma / jnp.sqrt(running_var + BN_EPS)
            w_f = w_t * scale[:, None, None, None]
            bias = beta + scale * (conv_b - running_mean)

            w_hwio = jnp.transpose(w_f, (2, 3, 1, 0))        # (3,3,Cin,Cout)
            if first:
                # pad Cin 3 -> FIRST_CIN with zero rows (matches padded input)
                w_hwio = jnp.pad(
                    w_hwio, ((0, 0), (0, 0), (0, FIRST_CIN - in_c), (0, 0)))
                cin_eff = FIRST_CIN
                first = False
            else:
                cin_eff = in_c
            w9 = w_hwio.reshape(9 * cin_eff, out_c).astype(jnp.bfloat16)
            convs.append((w9, bias.reshape(1, out_c)))
            in_c = out_c
        group_params.append((convs, has_pool))

    key, kw, kb = jax.random.split(key, 3)
    # torch Linear weight is (num_classes, 512); store its transpose.
    fc_w = jax.random.normal(kw, (512, NUM_CLASSES), jnp.float32) * 0.05
    fc_b = jax.random.normal(kb, (1, NUM_CLASSES), jnp.float32) * 0.01
    return group_params, (fc_w, fc_b)


# ---------------------------------------------------------------------------
# Forward
# ---------------------------------------------------------------------------
def vgg_forward(x_nchw, group_params, head_params):
    x = jnp.transpose(x_nchw, (0, 2, 3, 1))                  # NCHW -> NHWC
    # one-time zero-pad of the 3 input channels to FIRST_CIN (zero weights)
    x = jnp.pad(x, ((0, 0), (0, 0), (0, 0), (0, FIRST_CIN - x.shape[-1])))
    x = x.astype(jnp.bfloat16)

    n_groups = len(group_params)
    for gi, (convs, has_pool) in enumerate(group_params):
        has_head = (gi == n_groups - 1)
        x = _run_group(x, convs, has_pool, has_head,
                       head_params if has_head else None)
    return x


if __name__ == "__main__":
    key = jax.random.PRNGKey(0)
    key, pkey, xkey = jax.random.split(key, 3)
    group_params, head_params = init_params(pkey)

    x = jax.random.normal(xkey, (2, 3, 16, 16), jnp.float32)  # NCHW, like torch
    out = vgg_forward(x, group_params, head_params)
    out = jax.block_until_ready(out)

    assert out.shape == (2, NUM_CLASSES), out.shape
    assert out.dtype == jnp.float32
    assert bool(jnp.all(jnp.isfinite(out)))
    print("KERNEL_OK")
</pallas_src>

<mosaic_0001>
module attributes {stable_mosaic.version = 11 : i64} {
  func.func @kernel(%arg0: i32, %arg1: memref<1x16x16x8xbf16, #tpu.memory_space<vmem>>, %arg2: memref<72x64xbf16, #tpu.memory_space<vmem>>, %arg3: memref<1x64xf32, #tpu.memory_space<vmem>>, %arg4: memref<1x8x8x64xbf16, #tpu.memory_space<vmem>>, %arg5: memref<18x18x8xbf16, #tpu.memory_space<vmem>>, %arg6: memref<16x16x72xbf16, #tpu.memory_space<vmem>>) attributes {dimension_semantics = [#tpu.dimension_semantics<parallel>], iteration_bounds = array<i64: 2>, scalar_prefetch = 0 : i64, scratch_operands = 2 : i64, tpu.core_type = #tpu.core_type<tc>, window_params = [{transform_indices = @transform_0, window_bounds = array<i64: 1, 16, 16, 8>}, {pipeline_mode = #tpu.pipeline_mode<synchronous>, transform_indices = @transform_1, window_bounds = array<i64: 72, 64>}, {pipeline_mode = #tpu.pipeline_mode<synchronous>, transform_indices = @transform_2, window_bounds = array<i64: 1, 64>}, {transform_indices = @transform_3, window_bounds = array<i64: 1, 8, 8, 64>}]} {
    %c0 = arith.constant 0 : index
    %c0_0 = arith.constant 0 : index
    %c0_1 = arith.constant 0 : index
    %c0_2 = arith.constant 0 : index
    %0 = vector.load %arg1[%c0, %c0_0, %c0_1, %c0_2] : memref<1x16x16x8xbf16, #tpu.memory_space<vmem>>, vector<1x16x16x8xbf16>
    %1 = vector.shape_cast %0 : vector<1x16x16x8xbf16> to vector<16x16x8xbf16>
    %cst = arith.constant 0.000000e+00 : bf16
    %2 = vector.broadcast %cst : bf16 to vector<18x18x8xbf16>
    %c0_3 = arith.constant 0 : index
    %c0_4 = arith.constant 0 : index
    %c0_5 = arith.constant 0 : index
    %3 = vector.load %arg5[%c0_3, %c0_4, %c0_5] : memref<18x18x8xbf16, #tpu.memory_space<vmem>>, vector<18x18x8xbf16>
    tpu.vector_store %arg5[%c0_3, %c0_4, %c0_5], %2 {strides = array<i32>} : memref<18x18x8xbf16, #tpu.memory_space<vmem>>, vector<18x18x8xbf16>,
    %c1 = arith.constant 1 : index
    %c1_6 = arith.constant 1 : index
    %c0_7 = arith.constant 0 : index
    %4 = vector.load %arg5[%c1, %c1_6, %c0_7] : memref<18x18x8xbf16, #tpu.memory_space<vmem>>, vector<16x16x8xbf16>
    tpu.vector_store %arg5[%c1, %c1_6, %c0_7], %1 {strides = array<i32>} : memref<18x18x8xbf16, #tpu.memory_space<vmem>>, vector<16x16x8xbf16>,
    %c0_8 = arith.constant 0 : index
    %c0_9 = arith.constant 0 : index
    %c0_10 = arith.constant 0 : index
    %5 = vector.load %arg5[%c0_8, %c0_9, %c0_10] : memref<18x18x8xbf16, #tpu.memory_space<vmem>>, vector<18x18x8xbf16>
    %6 = vector.extract_strided_slice %5 {offsets = [0, 0, 0], sizes = [16, 16, 8], strides = [1, 1, 1]} : vector<18x18x8xbf16> to vector<16x16x8xbf16>
    %c0_11 = arith.constant 0 : index
    %c0_12 = arith.constant 0 : index
    %c0_13 = arith.constant 0 : index
    %7 = vector.load %arg6[%c0_11, %c0_12, %c0_13] : memref<16x16x72xbf16, #tpu.memory_space<vmem>>, vector<16x16x8xbf16>
    tpu.vector_store %arg6[%c0_11, %c0_12, %c0_13], %6 {strides = array<i32>} : memref<16x16x72xbf16, #tpu.memory_space<vmem>>, vector<16x16x8xbf16>,
    %8 = vector.extract_strided_slice %5 {offsets = [0, 1, 0], sizes = [16, 16, 8], strides = [1, 1, 1]} : vector<18x18x8xbf16> to vector<16x16x8xbf16>
    %c0_14 = arith.constant 0 : index
    %c0_15 = arith.constant 0 : index
    %c8 = arith.constant 8 : index
    %9 = vector.load %arg6[%c0_14, %c0_15, %c8] : memref<16x16x72xbf16, #tpu.memory_space<vmem>>, vector<16x16x8xbf16>
    tpu.vector_store %arg6[%c0_14, %c0_15, %c8], %8 {strides = array<i32>} : memref<16x16x72xbf16, #tpu.memory_space<vmem>>, vector<16x16x8xbf16>,
    %10 = vector.extract_strided_slice %5 {offsets = [0, 2, 0], sizes = [16, 16, 8], strides = [1, 1, 1]} : vector<18x18x8xbf16> to vector<16x16x8xbf16>
    %c0_16 = arith.constant 0 : index
    %c0_17 = arith.constant 0 : index
    %c16 = arith.constant 16 : index
    %11 = vector.load %arg6[%c0_16, %c0_17, %c16] : memref<16x16x72xbf16, #tpu.memory_space<vmem>>, vector<16x16x8xbf16>
    tpu.vector_store %arg6[%c0_16, %c0_17, %c16], %10 {strides = array<i32>} : memref<16x16x72xbf16, #tpu.memory_space<vmem>>, vector<16x16x8xbf16>,
    %12 = vector.extract_strided_slice %5 {offsets = [1, 0, 0], sizes = [16, 16, 8], strides = [1, 1, 1]} : vector<18x18x8xbf16> to vector<16x16x8xbf16>
    %c0_18 = arith.constant 0 : index
    %c0_19 = arith.constant 0 : index
    %c24 = arith.constant 24 : index
    %13 = vector.load %arg6[%c0_18, %c0_19, %c24] : memref<16x16x72xbf16, #tpu.memory_space<vmem>>, vector<16x16x8xbf16>
    tpu.vector_store %arg6[%c0_18, %c0_19, %c24], %12 {strides = array<i32>} : memref<16x16x72xbf16, #tpu.memory_space<vmem>>, vector<16x16x8xbf16>,
    %14 = vector.extract_strided_slice %5 {offsets = [1, 1, 0], sizes = [16, 16, 8], strides = [1, 1, 1]} : vector<18x18x8xbf16> to vector<16x16x8xbf16>
    %c0_20 = arith.constant 0 : index
    %c0_21 = arith.constant 0 : index
    %c32 = arith.constant 32 : index
    %15 = vector.load %arg6[%c0_20, %c0_21, %c32] : memref<16x16x72xbf16, #tpu.memory_space<vmem>>, vector<16x16x8xbf16>
    tpu.vector_store %arg6[%c0_20, %c0_21, %c32], %14 {strides = array<i32>} : memref<16x16x72xbf16, #tpu.memory_space<vmem>>, vector<16x16x8xbf16>,
    %16 = vector.extract_strided_slice %5 {offsets = [1, 2, 0], sizes = [16, 16, 8], strides = [1, 1, 1]} : vector<18x18x8xbf16> to vector<16x16x8xbf16>
    %c0_22 = arith.constant 0 : index
    %c0_23 = arith.constant 0 : index
    %c40 = arith.constant 40 : index
    %17 = vector.load %arg6[%c0_22, %c0_23, %c40] : memref<16x16x72xbf16, #tpu.memory_space<vmem>>, vector<16x16x8xbf16>
    tpu.vector_store %arg6[%c0_22, %c0_23, %c40], %16 {strides = array<i32>} : memref<16x16x72xbf16, #tpu.memory_space<vmem>>, vector<16x16x8xbf16>,
    %18 = vector.extract_strided_slice %5 {offsets = [2, 0, 0], sizes = [16, 16, 8], strides = [1, 1, 1]} : vector<18x18x8xbf16> to vector<16x16x8xbf16>
    %c0_24 = arith.constant 0 : index
    %c0_25 = arith.constant 0 : index
    %c48 = arith.constant 48 : index
    %19 = vector.load %arg6[%c0_24, %c0_25, %c48] : memref<16x16x72xbf16, #tpu.memory_space<vmem>>, vector<16x16x8xbf16>
    tpu.vector_store %arg6[%c0_24, %c0_25, %c48], %18 {strides = array<i32>} : memref<16x16x72xbf16, #tpu.memory_space<vmem>>, vector<16x16x8xbf16>,
    %20 = vector.extract_strided_slice %5 {offsets = [2, 1, 0], sizes = [16, 16, 8], strides = [1, 1, 1]} : vector<18x18x8xbf16> to vector<16x16x8xbf16>
    %c0_26 = arith.constant 0 : index
    %c0_27 = arith.constant 0 : index
    %c56 = arith.constant 56 : index
    %21 = vector.load %arg6[%c0_26, %c0_27, %c56] : memref<16x16x72xbf16, #tpu.memory_space<vmem>>, vector<16x16x8xbf16>
    tpu.vector_store %arg6[%c0_26, %c0_27, %c56], %20 {strides = array<i32>} : memref<16x16x72xbf16, #tpu.memory_space<vmem>>, vector<16x16x8xbf16>,
    %22 = vector.extract_strided_slice %5 {offsets = [2, 2, 0], sizes = [16, 16, 8], strides = [1, 1, 1]} : vector<18x18x8xbf16> to vector<16x16x8xbf16>
    %c0_28 = arith.constant 0 : index
    %c0_29 = arith.constant 0 : index
    %c64 = arith.constant 64 : index
    %23 = vector.load %arg6[%c0_28, %c0_29, %c64] : memref<16x16x72xbf16, #tpu.memory_space<vmem>>, vector<16x16x8xbf16>
    tpu.vector_store %arg6[%c0_28, %c0_29, %c64], %22 {strides = array<i32>} : memref<16x16x72xbf16, #tpu.memory_space<vmem>>, vector<16x16x8xbf16>,
    %c0_30 = arith.constant 0 : index
    %c0_31 = arith.constant 0 : index
    %c0_32 = arith.constant 0 : index
    %24 = vector.load %arg6[%c0_30, %c0_31, %c0_32] : memref<16x16x72xbf16, #tpu.memory_space<vmem>>, vector<16x16x72xbf16>
    %c0_33 = arith.constant 0 : index
    %c0_34 = arith.constant 0 : index
    %25 = vector.load %arg2[%c0_33, %c0_34] : memref<72x64xbf16, #tpu.memory_space<vmem>>, vector<72x64xbf16>
    "tpu.trace_start"() <{level = 10 : i32, message = "hwk,ko->hwo"}> : () -> ()
    %cst_35 = arith.constant dense<0.000000e+00> : vector<16x16x64xf32>
    %26 = tpu.matmul %24, %25, %cst_35 {dimension_numbers = #tpu.dot_dimension_numbers<[2], [0], [0, 1], [1], [0, 0, 0, 1, 1, 1], [], []>} : vector<16x16x72xbf16>, vector<72x64xbf16>, vector<16x16x64xf32> -> vector<16x16x64xf32>
    "tpu.trace_stop"() : () -> ()
    %c0_36 = arith.constant 0 : index
    %c0_37 = arith.constant 0 : index
    %27 = vector.load %arg3[%c0_36, %c0_37] : memref<1x64xf32, #tpu.memory_space<vmem>>, vector<1x64xf32>
    %28 = vector.shape_cast %27 : vector<1x64xf32> to vector<1x1x64xf32>
    %29 = vector.broadcast %28 : vector<1x1x64xf32> to vector<16x16x64xf32>
    %30 = arith.addf %26, %29 : vector<16x16x64xf32>
    %cst_38 = arith.constant 0.000000e+00 : f32
    %31 = vector.broadcast %cst_38 : f32 to vector<16x16x64xf32>
    %32 = arith.maximumf %30, %31 : vector<16x16x64xf32>
    %33 = arith.truncf %32 : vector<16x16x64xf32> to vector<16x16x64xbf16>
    %34 = vector.shape_cast %33 : vector<16x16x64xbf16> to vector<16x8x2x64xbf16>
    %cst_39 = arith.constant dense<0xFF80> : vector<16x8x64xbf16>
    %35 = vector.multi_reduction <maximumf>, %34, %cst_39 [2] : vector<16x8x2x64xbf16> to vector<16x8x64xbf16>
    %36 = vector.shape_cast %35 : vector<16x8x64xbf16> to vector<8x2x8x64xbf16>
    %cst_40 = arith.constant dense<0xFF80> : vector<8x8x64xbf16>
    %37 = vector.multi_reduction <maximumf>, %36, %cst_40 [1] : vector<8x2x8x64xbf16> to vector<8x8x64xbf16>
    %c0_41 = arith.constant 0 : index
    %c0_42 = arith.constant 0 : index
    %c0_43 = arith.constant 0 : index
    %c0_44 = arith.constant 0 : index
    %38 = vector.load %arg4[%c0_41, %c0_42, %c0_43, %c0_44] : memref<1x8x8x64xbf16, #tpu.memory_space<vmem>>, vector<1x8x8x64xbf16>
    %39 = vector.shape_cast %38 : vector<1x8x8x64xbf16> to vector<8x8x64xbf16>
    %40 = vector.shape_cast %37 : vector<8x8x64xbf16> to vector<1x8x8x64xbf16>
    tpu.vector_store %arg4[%c0_41, %c0_42, %c0_43, %c0_44], %40 {strides = array<i32>} : memref<1x8x8x64xbf16, #tpu.memory_space<vmem>>, vector<1x8x8x64xbf16>,
    return
  }
  func.func @transform_0(%arg0: i32) -> (i32, i32, i32, i32) {
    %c0_i32 = arith.constant 0 : i32
    %c0_i32_0 = arith.constant 0 : i32
    %c0_i32_1 = arith.constant 0 : i32
    %c0_i32_2 = arith.constant 0 : i32
    return %arg0, %c0_i32, %c0_i32_0, %c0_i32_1 : i32, i32, i32, i32
  }
  func.func @transform_1(%arg0: i32) -> (i32, i32) {
    %c0_i32 = arith.constant 0 : i32
    %c0_i32_0 = arith.constant 0 : i32
    %c0_i32_1 = arith.constant 0 : i32
    return %c0_i32, %c0_i32_0 : i32, i32
  }
  func.func @transform_2(%arg0: i32) -> (i32, i32) {
    %c0_i32 = arith.constant 0 : i32
    %c0_i32_0 = arith.constant 0 : i32
    %c0_i32_1 = arith.constant 0 : i32
    return %c0_i32, %c0_i32_0 : i32, i32
  }
  func.func @transform_3(%arg0: i32) -> (i32, i32, i32, i32) {
    %c0_i32 = arith.constant 0 : i32
    %c0_i32_0 = arith.constant 0 : i32
    %c0_i32_1 = arith.constant 0 : i32
    %c0_i32_2 = arith.constant 0 : i32
    return %arg0, %c0_i32, %c0_i32_0, %c0_i32_1 : i32, i32, i32, i32
  }
}

</mosaic_0001>

<llo_original>
// kernel: tpu_custom_call.1
$region0: #{tpu_custom_call.1}
  #allocation0 [shape = 'u32[]', space=smem, size = 0x4, offset = 0x4, fixed_abs, tag = 'smem constant byte address 0x4 - core index']
  #allocation1 [shape = 'u32[144,128]{1,0:T(1,128)}', space=vmem, size = 0x12000, scoped, tag = 'internal scratch']
  #allocation2 [shape = 'bf16[18,18,8]{2,1,0:T(8,128)(2,1)}', space=vmem, size = 0x1b000, scoped, tag = 'scratch operand']
  #allocation3 [shape = 'bf16[16,16,72]{2,1,0:T(16,128)(2,1)}', space=vmem, size = 0x10000, scoped, tag = 'scratch operand']
  %s0 = inlined_call_operand.vmem [shape: bf16[2,16,16,8], index: 0, kind: input, shape index: {}]
  %s1 = inlined_call_operand.vmem [shape: bf16[72,64], index: 1, kind: input, shape index: {}]
  %s2 = inlined_call_operand.vmem [shape: f32[1,64], index: 2, kind: input, shape index: {}]
  %s3 = inlined_call_operand.hbm [shape: bf16[2,8,8,64], index: 3, kind: output, shape index: {}]
  %s4 = sld [smem:[#allocation0]]
  $region45: #{tpu_custom_call.1} parent=0
    _
  %s6 = ssub.s32 1, %s4
  %s7 = scalar_select 0, %s6, %s4
  $region1: #{tpu_custom_call.1} parent=0
    #allocation4 [shape = 'u8[32768]{0}', space=vmem, size = 0x8000, scoped, tag = 'output window, operand 0']
    #allocation5 [shape = 's32[2]{0}', space=sflag, size = 0x8, scoped, tag = 'scoped memory for tpu_custom_call.1']
    %8 = vsyncpa [#allocation5], 0
    %s9 = scalar_lea.sflag [#allocation5], 1
    %10 = vsyncpa %s9, 0
    loop: start=0, step=1, limit=4
    $region2: #{tpu_custom_call.1} parent=1 // loop_pre_header
      _
    $region3: #{tpu_custom_call.1} parent=1 // loop_header
      %s12 = sphi 0, %s16
      %p13 = scmp.ge.s32.totalorder %s12, 4
      %s22 = sphi 0, %s24
      %s25 = sphi 0, %s22
      %s26 = sphi 0, %s25
      %s42 = sphi 0, %s26
      %s46 = sphi 0, %s46
      %s48 = sphi 0, %s46
      %s49 = sphi 0, %s48
      %s63 = sphi 0, %s49
      %s67 = sphi 0, %s67
      %s69 = sphi 0, %s67
      %s70 = sphi 0, %s69
      %s84 = sphi 0, %s70
      %s90 = sphi 0, %s92
      %s93 = sphi 0, %s90
      %s94 = sphi 0, %s93
      %s110 = sphi 0, %s94
    $region4: #{tpu_custom_call.1} parent=1 // loop_header_branch
      %15 = sbr.rel (%p13) target = $region8
    $region5: #{tpu_custom_call.1} parent=1 // loop_body
      %s17 = ssub.s32 %s12, 1
      %s18 = ssub.s32 %s12, 2
      %s19 = sadd.s32 %s12, 1
      %s20 = ssub.s32 %s12, %s19
      %p21 = scmp.eq.s32.totalorder %s20, 0
      %s23 = sadd.s32 %s22, 1
      %s24 = scalar_select %p21, %s22, %s23
      %p27 = pneg %p21
      %p28 = scmp.eq.s32.totalorder %s12, 1
      %p29 = por %p27, %p28
      %p30 = scmp.ne.s32.totalorder %s22, %s25
      %p31 = scmp.eq.s32.totalorder %s12, 0
      %p32 = por %p30, %p31
      %p33 = scmp.ne.s32.totalorder %s22, %s25
      %p34 = scmp.eq.s32.totalorder %s17, 1
      %p35 = por %p33, %p34
      %p36 = scmp.ne.s32.totalorder %s25, %s26
      %p37 = scmp.eq.s32.totalorder %s17, 0
      %p38 = por %p36, %p37
      %p39 = scmp.ne.s32.totalorder %s25, %s26
      %p40 = scmp.eq.s32.totalorder %s18, 1
      %p41 = por %p39, %p40
      %p43 = scmp.ne.s32.totalorder %s26, %s42
      %p44 = scmp.eq.s32.totalorder %s18, 0
      %p45 = por %p43, %p44
      %s47 = sadd.s32 %s46, 1
      %p50 = scmp.eq.s32.totalorder %s12, 1
      %p51 = scmp.ne.s32.totalorder %s46, %s48
      %p52 = scmp.eq.s32.totalorder %s12, 0
      %p53 = por %p51, %p52
      %p54 = scmp.ne.s32.totalorder %s46, %s48
      %p55 = scmp.eq.s32.totalorder %s17, 1
      %p56 = por %p54, %p55
      %p57 = scmp.ne.s32.totalorder %s48, %s49
      %p58 = scmp.eq.s32.totalorder %s17, 0
      %p59 = por %p57, %p58
      %p60 = scmp.ne.s32.totalorder %s48, %s49
      %p61 = scmp.eq.s32.totalorder %s18, 1
      %p62 = por %p60, %p61
      %p64 = scmp.ne.s32.totalorder %s49, %s63
      %p65 = scmp.eq.s32.totalorder %s18, 0
      %p66 = por %p64, %p65
      %s68 = sadd.s32 %s67, 1
      %p71 = scmp.eq.s32.totalorder %s12, 1
      %p72 = scmp.ne.s32.totalorder %s67, %s69
      %p73 = scmp.eq.s32.totalorder %s12, 0
      %p74 = por %p72, %p73
      %p75 = scmp.ne.s32.totalorder %s67, %s69
      %p76 = scmp.eq.s32.totalorder %s17, 1
      %p77 = por %p75, %p76
      %p78 = scmp.ne.s32.totalorder %s69, %s70
      %p79 = scmp.eq.s32.totalorder %s17, 0
      %p80 = por %p78, %p79
      %p81 = scmp.ne.s32.totalorder %s69, %s70
      %p82 = scmp.eq.s32.totalorder %s18, 1
      %p83 = por %p81, %p82
      %p85 = scmp.ne.s32.totalorder %s70, %s84
      %p86 = scmp.eq.s32.totalorder %s18, 0
      %p87 = por %p85, %p86
      %s88 = ssub.s32 %s12, %s19
      %p89 = scmp.eq.s32.totalorder %s88, 0
      %s91 = sadd.s32 %s90, 1
      %s92 = scalar_select %p89, %s90, %s91
      %p95 = pneg %p89
      %p96 = scmp.eq.s32.totalorder %s12, 1
      %p97 = por %p95, %p96
      %p98 = scmp.ne.s32.totalorder %s90, %s93
      %p99 = scmp.eq.s32.totalorder %s12, 0
      %p100 = por %p98, %p99
      %p101 = scmp.ne.s32.totalorder %s90, %s93
      %p102 = scmp.eq.s32.totalorder %s17, 1
      %p103 = por %p101, %p102
      %p104 = scmp.ne.s32.totalorder %s93, %s94
      %p105 = scmp.eq.s32.totalorder %s17, 0
      %p106 = por %p104, %p105
      %p107 = scmp.ne.s32.totalorder %s93, %s94
      %p108 = scmp.eq.s32.totalorder %s18, 1
      %p109 = por %p107, %p108
      %p111 = scmp.ne.s32.totalorder %s94, %s110
      %p112 = scmp.eq.s32.totalorder %s18, 0
      %p113 = por %p111, %p112
      %p114 = scmp.le.s32.totalorder 1, %s12
      %p115 = scmp.lt.s32.totalorder %s12, 3
      %p116 = pnand %p114, %p115
      %p117 = pneg %p116
      // Predicated region
      $region9: #{tpu_custom_call.1} parent=5 // pred_check
        _
      $region10: #{tpu_custom_call.1} parent=5 // pred_check_branch
        %119 = sbr.rel (%p116) target = $region12
      $region11: #{tpu_custom_call.1} parent=5 // pred_region
        %s120 = ssub.s32 %s12, 1
        // Predicated region
        $region13: #{tpu_custom_call.1} parent=11 // pred_check
          %p121 = pneg %p59
        $region14: #{tpu_custom_call.1} parent=11 // pred_check_branch
          %123 = sbr.rel (%p121) target = $region16
        $region15: #{tpu_custom_call.1} parent=11 // pred_region
          _
        $region16: #{tpu_custom_call.1} parent=11 // pred_fallthru
          _
        // Predicated region
        $region17: #{tpu_custom_call.1} parent=11 // pred_check
          %p124 = pneg %p80
        $region18: #{tpu_custom_call.1} parent=11 // pred_check_branch
          %126 = sbr.rel (%p124) target = $region20
        $region19: #{tpu_custom_call.1} parent=11 // pred_region
          _
        $region20: #{tpu_custom_call.1} parent=11 // pred_fallthru
          _
      $region12: #{tpu_custom_call.1} parent=5 // pred_fallthru
        _
      %p127 = scmp.lt.s32.totalorder %s12, 2
      // Predicated region
      $region21: #{tpu_custom_call.1} parent=5 // pred_check
        %p128 = pneg %p127
      $region22: #{tpu_custom_call.1} parent=5 // pred_check_branch
        %130 = sbr.rel (%p128) target = $region24
      $region23: #{tpu_custom_call.1} parent=5 // pred_region
        // Predicated region
        $region25: #{tpu_custom_call.1} parent=23 // pred_check
          %p131 = pneg %p32
        $region26: #{tpu_custom_call.1} parent=23 // pred_check_branch
          %133 = sbr.rel (%p131) target = $region28
        $region27: #{tpu_custom_call.1} parent=23 // pred_region
          %p134 = scmp.lt.s32.totalorder %s12, 1
          %s135 = scalar_select %p134, %s12, 1
          %s136 = smul.addr %s135, 32
          %s137 = smul.addr %s136, 4
          %s138 = scalar_lea.vmem %s0, %s137
        $region28: #{tpu_custom_call.1} parent=23 // pred_fallthru
          _
      $region24: #{tpu_custom_call.1} parent=5 // pred_fallthru
        _
      %p139 = scmp.le.s32.totalorder 1, %s12
      %p140 = scmp.lt.s32.totalorder %s12, 3
      %p141 = pnand %p139, %p140
      %p142 = pneg %p141
      // Predicated region
      $region29: #{tpu_custom_call.1} parent=5 // pred_check
        _
      $region30: #{tpu_custom_call.1} parent=5 // pred_check_branch
        %144 = sbr.rel (%p141) target = $region32
      $region31: #{tpu_custom_call.1} parent=5 // pred_region
        %s145 = ssub.s32 %s12, 1
        %p146 = scmp.lt.s32.totalorder %s17, 1
        %s147 = scalar_select %p146, %s17, 1
        %s148 = smul.addr %s147, 32
        %s149 = smul.addr %s148, 4
        %s150 = scalar_lea.vmem %s0, %s149
        %p151 = pneg %p38
        %p152 = pneg %p35
        %p153 = pneg %p59
        %p154 = pneg %p56
        %p155 = pneg %p80
        %p156 = pneg %p77
        %p157 = pneg %p106
        %p158 = pneg %p103
        %s159 = sand.u32 %s93, 1
        %s160 = scalar_lea.sflag [#allocation5], %s159
        %s161 = sand.u32 %s93, 1
        %s162 = smul.addr %s161, 32
        %s163 = scalar_lea.vmem [#allocation4], %s162
        %p164 = scmp.lt.s32.totalorder %s17, 1
        %s165 = scalar_select %p164, %s17, 1
        %s166 = smul.addr %s165, 32
        %s167 = smul.addr %s166, 4
        %s168 = scalar_lea.vmem %s0, %s167
        %v171 = vld [vmem:[%s168] sm:$0xf]
        %v172 = vld [vmem:[%s168 + $0x4] sm:$0xf]
        %v173 = vld [vmem:[%s168 + $0x8] sm:$0xf]
        %v174 = vld [vmem:[%s168 + $0xc] sm:$0xf]
        %v175 = vld [vmem:[%s168 + $0x10] sm:$0xf]
        %v176 = vld [vmem:[%s168 + $0x14] sm:$0xf]
        %v177 = vld [vmem:[%s168 + $0x18] sm:$0xf]
        %v178 = vld [vmem:[%s168 + $0x1c] sm:$0xf]
        %v179 = vld [vmem:[%s168 + $0x20] sm:$0xf]
        %v180 = vld [vmem:[%s168 + $0x24] sm:$0xf]
        %v181 = vld [vmem:[%s168 + $0x28] sm:$0xf]
        %v182 = vld [vmem:[%s168 + $0x2c] sm:$0xf]
        %v183 = vld [vmem:[%s168 + $0x30] sm:$0xf]
        %v184 = vld [vmem:[%s168 + $0x34] sm:$0xf]
        %v185 = vld [vmem:[%s168 + $0x38] sm:$0xf]
        %v186 = vld [vmem:[%s168 + $0x3c] sm:$0xf]
        %v187 = vld [vmem:[%s168 + $0x40] sm:$0xf]
        %v188 = vld [vmem:[%s168 + $0x44] sm:$0xf]
        %v189 = vld [vmem:[%s168 + $0x48] sm:$0xf]
        %v190 = vld [vmem:[%s168 + $0x4c] sm:$0xf]
        %v191 = vld [vmem:[%s168 + $0x50] sm:$0xf]
        %v192 = vld [vmem:[%s168 + $0x54] sm:$0xf]
        %v193 = vld [vmem:[%s168 + $0x58] sm:$0xf]
        %v194 = vld [vmem:[%s168 + $0x5c] sm:$0xf]
        %v195 = vld [vmem:[%s168 + $0x60] sm:$0xf]
        %v196 = vld [vmem:[%s168 + $0x64] sm:$0xf]
        %v197 = vld [vmem:[%s168 + $0x68] sm:$0xf]
        %v198 = vld [vmem:[%s168 + $0x6c] sm:$0xf]
        %v199 = vld [vmem:[%s168 + $0x70] sm:$0xf]
        %v200 = vld [vmem:[%s168 + $0x74] sm:$0xf]
        %v201 = vld [vmem:[%s168 + $0x78] sm:$0xf]
        %v202 = vld [vmem:[%s168 + $0x7c] sm:$0xf]
        %vm203 = vcmask 60416
        %204 = vst.msk [vmem:[#allocation2] sm:$0xf] %vm203, 0
        %205 = vst.msk [vmem:[#allocation2 + $0x4] sm:$0xf] %vm203, 0
        %vm206 = vcmask 57344
        %207 = vst.msk [vmem:[#allocation2 + $0x8] sm:$0x1] %vm206, 0
        %208 = vst.msk [vmem:[#allocation2 + $0xc] sm:$0xf] %vm203, 0
        %209 = vst.msk [vmem:[#allocation2 + $0x10] sm:$0xf] %vm203, 0
        %210 = vst.msk [vmem:[#allocation2 + $0x14] sm:$0x1] %vm206, 0
        %211 = vst.msk [vmem:[#allocation2 + $0x18] sm:$0xf] %vm203, 0
        %212 = vst.msk [vmem:[#allocation2 + $0x1c] sm:$0xf] %vm203, 0
        %213 = vst.msk [vmem:[#allocation2 + $0x20] sm:$0x1] %vm206, 0
        %214 = vst.msk [vmem:[#allocation2 + $0x24] sm:$0xf] %vm203, 0
        %215 = vst.msk [vmem:[#allocation2 + $0x28] sm:$0xf] %vm203, 0
        %216 = vst.msk [vmem:[#allocation2 + $0x2c] sm:$0x1] %vm206, 0
        %217 = vst.msk [vmem:[#allocation2 + $0x30] sm:$0xf] %vm203, 0
        %218 = vst.msk [vmem:[#allocation2 + $0x34] sm:$0xf] %vm203, 0
        %219 = vst.msk [vmem:[#allocation2 + $0x38] sm:$0x1] %vm206, 0
        %220 = vst.msk [vmem:[#allocation2 + $0x3c] sm:$0xf] %vm203, 0
        %221 = vst.msk [vmem:[#allocation2 + $0x40] sm:$0xf] %vm203, 0
        %222 = vst.msk [vmem:[#allocation2 + $0x44] sm:$0x1] %vm206, 0
        %223 = vst.msk [vmem:[#allocation2 + $0x48] sm:$0xf] %vm203, 0
        %224 = vst.msk [vmem:[#allocation2 + $0x4c] sm:$0xf] %vm203, 0
        %225 = vst.msk [vmem:[#allocation2 + $0x50] sm:$0x1] %vm206, 0
        %226 = vst.msk [vmem:[#allocation2 + $0x54] sm:$0xf] %vm203, 0
        %227 = vst.msk [vmem:[#allocation2 + $0x58] sm:$0xf] %vm203, 0
        %228 = vst.msk [vmem:[#allocation2 + $0x5c] sm:$0x1] %vm206, 0
        %229 = vst.msk [vmem:[#allocation2 + $0x60] sm:$0xf] %vm203, 0
        %230 = vst.msk [vmem:[#allocation2 + $0x64] sm:$0xf] %vm203, 0
        %231 = vst.msk [vmem:[#allocation2 + $0x68] sm:$0x1] %vm206, 0
        %232 = vst.msk [vmem:[#allocation2 + $0x6c] sm:$0xf] %vm203, 0
        %233 = vst.msk [vmem:[#allocation2 + $0x70] sm:$0xf] %vm203, 0
        %234 = vst.msk [vmem:[#allocation2 + $0x74] sm:$0x1] %vm206, 0
        %235 = vst.msk [vmem:[#allocation2 + $0x78] sm:$0xf] %vm203, 0
        %236 = vst.msk [vmem:[#allocation2 + $0x7c] sm:$0xf] %vm203, 0
        %237 = vst.msk [vmem:[#allocation2 + $0x80] sm:$0x1] %vm206, 0
        %238 = vst.msk [vmem:[#allocation2 + $0x84] sm:$0xf] %vm203, 0
        %239 = vst.msk [vmem:[#allocation2 + $0x88] sm:$0xf] %vm203, 0
        %240 = vst.msk [vmem:[#allocation2 + $0x8c] sm:$0x1] %vm206, 0
        %241 = vst.msk [vmem:[#allocation2 + $0x90] sm:$0xf] %vm203, 0
        %242 = vst.msk [vmem:[#allocation2 + $0x94] sm:$0xf] %vm203, 0
        %243 = vst.msk [vmem:[#allocation2 + $0x98] sm:$0x1] %vm206, 0
        %244 = vst.msk [vmem:[#allocation2 + $0x9c] sm:$0xf] %vm203, 0
        %245 = vst.msk [vmem:[#allocation2 + $0xa0] sm:$0xf] %vm203, 0
        %246 = vst.msk [vmem:[#allocation2 + $0xa4] sm:$0x1] %vm206, 0
        %247 = vst.msk [vmem:[#allocation2 + $0xa8] sm:$0xf] %vm203, 0
        %248 = vst.msk [vmem:[#allocation2 + $0xac] sm:$0xf] %vm203, 0
        %249 = vst.msk [vmem:[#allocation2 + $0xb0] sm:$0x1] %vm206, 0
        %250 = vst.msk [vmem:[#allocation2 + $0xb4] sm:$0xf] %vm203, 0
        %251 = vst.msk [vmem:[#allocation2 + $0xb8] sm:$0xf] %vm203, 0
        %252 = vst.msk [vmem:[#allocation2 + $0xbc] sm:$0x1] %vm206, 0
        %253 = vst.msk [vmem:[#allocation2 + $0xc0] sm:$0xf] %vm203, 0
        %254 = vst.msk [vmem:[#allocation2 + $0xc4] sm:$0xf] %vm203, 0
        %255 = vst.msk [vmem:[#allocation2 + $0xc8] sm:$0x1] %vm206, 0
        %256 = vst.msk [vmem:[#allocation2 + $0xcc] sm:$0xf] %vm203, 0
        %257 = vst.msk [vmem:[#allocation2 + $0xd0] sm:$0xf] %vm203, 0
        %258 = vst.msk [vmem:[#allocation2 + $0xd4] sm:$0x1] %vm206, 0
        %vm259 = vsmask.f32 256
        %vm260 = vsmask.f32 4368
        %vm261 = vmor %vm259, %vm260
        %v263 = vshrl.u32 %v171, 16
        %v265 = vrot.slane %v263, 7
        %v266 = vshll.u32 %v171, 16
        %v268 = vor.u32 %v265, %v266
        %v269 = vrot.slane %v265, 4
        %v271 = vshrl.u32 %v172, 16
        %v273 = vrot.slane %v271, 7
        %v274 = vshll.u32 %v172, 16
        %v276 = vor.u32 %v273, %v274
        %v277 = vsel %vm261, %v269, %v276
        %v278 = vrot.slane %v273, 4
        %v280 = vshrl.u32 %v173, 16
        %v282 = vrot.slane %v280, 7
        %v283 = vshll.u32 %v173, 16
        %v285 = vor.u32 %v282, %v283
        %v286 = vrot.slane %v282, 4
        %v288 = vshrl.u32 %v174, 16
        %v290 = vrot.slane %v288, 7
        %v291 = vshll.u32 %v174, 16
        %v293 = vor.u32 %v290, %v291
        %v294 = vsel %vm261, %v286, %v293
        %v295 = vrot.slane %v290, 4
        %v297 = vshrl.u32 %v175, 16
        %v299 = vrot.slane %v297, 7
        %v300 = vshll.u32 %v175, 16
        %v302 = vor.u32 %v299, %v300
        %v303 = vrot.slane %v299, 4
        %v305 = vshrl.u32 %v176, 16
        %v307 = vrot.slane %v305, 7
        %v308 = vshll.u32 %v176, 16
        %v310 = vor.u32 %v307, %v308
        %v311 = vsel %vm261, %v303, %v310
        %v312 = vrot.slane %v307, 4
        %v314 = vshrl.u32 %v177, 16
        %v316 = vrot.slane %v314, 7
        %v317 = vshll.u32 %v177, 16
        %v319 = vor.u32 %v316, %v317
        %v320 = vrot.slane %v316, 4
        %v322 = vshrl.u32 %v178, 16
        %v324 = vrot.slane %v322, 7
        %v325 = vshll.u32 %v178, 16
        %v327 = vor.u32 %v324, %v325
        %v328 = vsel %vm261, %v320, %v327
        %v329 = vrot.slane %v324, 4
        %v331 = vshrl.u32 %v179, 16
        %v333 = vrot.slane %v331, 7
        %v334 = vshll.u32 %v179, 16
        %v336 = vor.u32 %v333, %v334
        %v337 = vrot.slane %v333, 4
        %v339 = vshrl.u32 %v180, 16
        %v341 = vrot.slane %v339, 7
        %v342 = vshll.u32 %v180, 16
        %v344 = vor.u32 %v341, %v342
        %v345 = vsel %vm261, %v337, %v344
        %v346 = vrot.slane %v341, 4
        %v348 = vshrl.u32 %v181, 16
        %v350 = vrot.slane %v348, 7
        %v351 = vshll.u32 %v181, 16
        %v353 = vor.u32 %v350, %v351
        %v354 = vrot.slane %v350, 4
        %v356 = vshrl.u32 %v182, 16
        %v358 = vrot.slane %v356, 7
        %v359 = vshll.u32 %v182, 16
        %v361 = vor.u32 %v358, %v359
        %v362 = vsel %vm261, %v354, %v361
        %v363 = vrot.slane %v358, 4
        %v365 = vshrl.u32 %v183, 16
        %v367 = vrot.slane %v365, 7
        %v368 = vshll.u32 %v183, 16
        %v370 = vor.u32 %v367, %v368
        %v371 = vrot.slane %v367, 4
        %v373 = vshrl.u32 %v184, 16
        %v375 = vrot.slane %v373, 7
        %v376 = vshll.u32 %v184, 16
        %v378 = vor.u32 %v375, %v376
        %v379 = vsel %vm261, %v371, %v378
        %v380 = vrot.slane %v375, 4
        %v382 = vshrl.u32 %v185, 16
        %v384 = vrot.slane %v382, 7
        %v385 = vshll.u32 %v185, 16
        %v387 = vor.u32 %v384, %v385
        %v388 = vrot.slane %v384, 4
        %v390 = vshrl.u32 %v186, 16
        %v392 = vrot.slane %v390, 7
        %v393 = vshll.u32 %v186, 16
        %v395 = vor.u32 %v392, %v393
        %v396 = vsel %vm261, %v388, %v395
        %v397 = vrot.slane %v392, 4
        %v399 = vshrl.u32 %v187, 16
        %v401 = vrot.slane %v399, 7
        %v402 = vshll.u32 %v187, 16
        %v404 = vor.u32 %v401, %v402
        %v405 = vrot.slane %v401, 4
        %v407 = vshrl.u32 %v188, 16
        %v409 = vrot.slane %v407, 7
        %v410 = vshll.u32 %v188, 16
        %v412 = vor.u32 %v409, %v410
        %v413 = vsel %vm261, %v405, %v412
        %v414 = vrot.slane %v409, 4
        %v416 = vshrl.u32 %v189, 16
        %v418 = vrot.slane %v416, 7
        %v419 = vshll.u32 %v189, 16
        %v421 = vor.u32 %v418, %v419
        %v422 = vrot.slane %v418, 4
        %v424 = vshrl.u32 %v190, 16
        %v426 = vrot.slane %v424, 7
        %v427 = vshll.u32 %v190, 16
        %v429 = vor.u32 %v426, %v427
        %v430 = vsel %vm261, %v422, %v429
        %v431 = vrot.slane %v426, 4
        %v433 = vshrl.u32 %v191, 16
        %v435 = vrot.slane %v433, 7
        %v436 = vshll.u32 %v191, 16
        %v438 = vor.u32 %v435, %v436
        %v439 = vrot.slane %v435, 4
        %v441 = vshrl.u32 %v192, 16
        %v443 = vrot.slane %v441, 7
        %v444 = vshll.u32 %v192, 16
        %v446 = vor.u32 %v443, %v444
        %v447 = vsel %vm261, %v439, %v446
        %v448 = vrot.slane %v443, 4
        %v450 = vshrl.u32 %v193, 16
        %v452 = vrot.slane %v450, 7
        %v453 = vshll.u32 %v193, 16
        %v455 = vor.u32 %v452, %v453
        %v456 = vrot.slane %v452, 4
        %v458 = vshrl.u32 %v194, 16
        %v460 = vrot.slane %v458, 7
        %v461 = vshll.u32 %v194, 16
        %v463 = vor.u32 %v460, %v461
        %v464 = vsel %vm261, %v456, %v463
        %v465 = vrot.slane %v460, 4
        %v467 = vshrl.u32 %v195, 16
        %v469 = vrot.slane %v467, 7
        %v470 = vshll.u32 %v195, 16
        %v472 = vor.u32 %v469, %v470
        %v473 = vrot.slane %v469, 4
        %v475 = vshrl.u32 %v196, 16
        %v477 = vrot.slane %v475, 7
        %v478 = vshll.u32 %v196, 16
        %v480 = vor.u32 %v477, %v478
        %v481 = vsel %vm261, %v473, %v480
        %v482 = vrot.slane %v477, 4
        %v484 = vshrl.u32 %v197, 16
        %v486 = vrot.slane %v484, 7
        %v487 = vshll.u32 %v197, 16
        %v489 = vor.u32 %v486, %v487
        %v490 = vrot.slane %v486, 4
        %v492 = vshrl.u32 %v198, 16
        %v494 = vrot.slane %v492, 7
        %v495 = vshll.u32 %v198, 16
        %v497 = vor.u32 %v494, %v495
        %v498 = vsel %vm261, %v490, %v497
        %v499 = vrot.slane %v494, 4
        %v501 = vshrl.u32 %v199, 16
        %v503 = vrot.slane %v501, 7
        %v504 = vshll.u32 %v199, 16
        %v506 = vor.u32 %v503, %v504
        %v507 = vrot.slane %v503, 4
        %v509 = vshrl.u32 %v200, 16
        %v511 = vrot.slane %v509, 7
        %v512 = vshll.u32 %v200, 16
        %v514 = vor.u32 %v511, %v512
        %v515 = vsel %vm261, %v507, %v514
        %v516 = vrot.slane %v511, 4
        %v518 = vshrl.u32 %v201, 16
        %v520 = vrot.slane %v518, 7
        %v521 = vshll.u32 %v201, 16
        %v523 = vor.u32 %v520, %v521
        %v524 = vrot.slane %v520, 4
        %v526 = vshrl.u32 %v202, 16
        %v528 = vrot.slane %v526, 7
        %v529 = vshll.u32 %v202, 16
        %v531 = vor.u32 %v528, %v529
        %v532 = vsel %vm261, %v524, %v531
        %v533 = vrot.slane %v528, 4
        %s582 = scalar_lea.vmem [#allocation2], 12
        %vm583 = vcmask 60416
        %vm584 = vsmask.f32 7938
        %vm585 = vmand %vm583, %vm584
        %v586 = vld [vmem:[%s582] sm:$0xf]
        %v587 = vsel %vm585, %v268, %v586
        %588 = vst [vmem:[%s582] sm:$0xf] %v587
        %589 = vst.msk [vmem:[%s582 + $0x4] sm:$0xf] %vm203, %v277
        %vm590 = vcmask 57344
        %vm591 = vmand %vm590, %vm259
        %v592 = vld [vmem:[%s582 + $0x8] sm:$0x1]
        %v593 = vsel %vm591, %v278, %v592
        %594 = vst [vmem:[%s582 + $0x8] sm:$0x1] %v593
        %v595 = vld [vmem:[%s582 + $0xc] sm:$0xf]
        %v596 = vsel %vm585, %v285, %v595
        %597 = vst [vmem:[%s582 + $0xc] sm:$0xf] %v596
        %598 = vst.msk [vmem:[%s582 + $0x10] sm:$0xf] %vm203, %v294
        %v599 = vld [vmem:[%s582 + $0x14] sm:$0x1]
        %v600 = vsel %vm591, %v295, %v599
        %601 = vst [vmem:[%s582 + $0x14] sm:$0x1] %v600
        %v602 = vld [vmem:[%s582 + $0x18] sm:$0xf]
        %v603 = vsel %vm585, %v302, %v602
        %604 = vst [vmem:[%s582 + $0x18] sm:$0xf] %v603
        %605 = vst.msk [vmem:[%s582 + $0x1c] sm:$0xf] %vm203, %v311
        %v606 = vld [vmem:[%s582 + $0x20] sm:$0x1]
        %v607 = vsel %vm591, %v312, %v606
        %608 = vst [vmem:[%s582 + $0x20] sm:$0x1] %v607
        %v609 = vld [vmem:[%s582 + $0x24] sm:$0xf]
        %v610 = vsel %vm585, %v319, %v609
        %611 = vst [vmem:[%s582 + $0x24] sm:$0xf] %v610
        %612 = vst.msk [vmem:[%s582 + $0x28] sm:$0xf] %vm203, %v328
        %v613 = vld [vmem:[%s582 + $0x2c] sm:$0x1]
        %v614 = vsel %vm591, %v329, %v613
        %615 = vst [vmem:[%s582 + $0x2c] sm:$0x1] %v614
        %v616 = vld [vmem:[%s582 + $0x30] sm:$0xf]
        %v617 = vsel %vm585, %v336, %v616
        %618 = vst [vmem:[%s582 + $0x30] sm:$0xf] %v617
        %619 = vst.msk [vmem:[%s582 + $0x34] sm:$0xf] %vm203, %v345
        %v620 = vld [vmem:[%s582 + $0x38] sm:$0x1]
        %v621 = vsel %vm591, %v346, %v620
        %622 = vst [vmem:[%s582 + $0x38] sm:$0x1] %v621
        %v623 = vld [vmem:[%s582 + $0x3c] sm:$0xf]
        %v624 = vsel %vm585, %v353, %v623
        %625 = vst [vmem:[%s582 + $0x3c] sm:$0xf] %v624
        %626 = vst.msk [vmem:[%s582 + $0x40] sm:$0xf] %vm203, %v362
        %v627 = vld [vmem:[%s582 + $0x44] sm:$0x1]
        %v628 = vsel %vm591, %v363, %v627
        %629 = vst [vmem:[%s582 + $0x44] sm:$0x1] %v628
        %v630 = vld [vmem:[%s582 + $0x48] sm:$0xf]
        %v631 = vsel %vm585, %v370, %v630
        %632 = vst [vmem:[%s582 + $0x48] sm:$0xf] %v631
        %633 = vst.msk [vmem:[%s582 + $0x4c] sm:$0xf] %vm203, %v379
        %v634 = vld [vmem:[%s582 + $0x50] sm:$0x1]
        %v635 = vsel %vm591, %v380, %v634
        %636 = vst [vmem:[%s582 + $0x50] sm:$0x1] %v635
        %v637 = vld [vmem:[%s582 + $0x54] sm:$0xf]
        %v638 = vsel %vm585, %v387, %v637
        %639 = vst [vmem:[%s582 + $0x54] sm:$0xf] %v638
        %640 = vst.msk [vmem:[%s582 + $0x58] sm:$0xf] %vm203, %v396
        %v641 = vld [vmem:[%s582 + $0x5c] sm:$0x1]
        %v642 = vsel %vm591, %v397, %v641
        %643 = vst [vmem:[%s582 + $0x5c] sm:$0x1] %v642
        %v644 = vld [vmem:[%s582 + $0x60] sm:$0xf]
        %v645 = vsel %vm585, %v404, %v644
        %646 = vst [vmem:[%s582 + $0x60] sm:$0xf] %v645
        %647 = vst.msk [vmem:[%s582 + $0x64] sm:$0xf] %vm203, %v413
        %v648 = vld [vmem:[%s582 + $0x68] sm:$0x1]
        %v649 = vsel %vm591, %v414, %v648
        %650 = vst [vmem:[%s582 + $0x68] sm:$0x1] %v649
        %v651 = vld [vmem:[%s582 + $0x6c] sm:$0xf]
        %v652 = vsel %vm585, %v421, %v651
        %653 = vst [vmem:[%s582 + $0x6c] sm:$0xf] %v652
        %654 = vst.msk [vmem:[%s582 + $0x70] sm:$0xf] %vm203, %v430
        %v655 = vld [vmem:[%s582 + $0x74] sm:$0x1]
        %v656 = vsel %vm591, %v431, %v655
        %657 = vst [vmem:[%s582 + $0x74] sm:$0x1] %v656
        %v658 = vld [vmem:[%s582 + $0x78] sm:$0xf]
        %v659 = vsel %vm585, %v438, %v658
        %660 = vst [vmem:[%s582 + $0x78] sm:$0xf] %v659
        %661 = vst.msk [vmem:[%s582 + $0x7c] sm:$0xf] %vm203, %v447
        %v662 = vld [vmem:[%s582 + $0x80] sm:$0x1]
        %v663 = vsel %vm591, %v448, %v662
        %664 = vst [vmem:[%s582 + $0x80] sm:$0x1] %v663
        %v665 = vld [vmem:[%s582 + $0x84] sm:$0xf]
        %v666 = vsel %vm585, %v455, %v665
        %667 = vst [vmem:[%s582 + $0x84] sm:$0xf] %v666
        %668 = vst.msk [vmem:[%s582 + $0x88] sm:$0xf] %vm203, %v464
        %v669 = vld [vmem:[%s582 + $0x8c] sm:$0x1]
        %v670 = vsel %vm591, %v465, %v669
        %671 = vst [vmem:[%s582 + $0x8c] sm:$0x1] %v670
        %v672 = vld [vmem:[%s582 + $0x90] sm:$0xf]
        %v673 = vsel %vm585, %v472, %v672
        %674 = vst [vmem:[%s582 + $0x90] sm:$0xf] %v673
        %675 = vst.msk [vmem:[%s582 + $0x94] sm:$0xf] %vm203, %v481
        %v676 = vld [vmem:[%s582 + $0x98] sm:$0x1]
        %v677 = vsel %vm591, %v482, %v676
        %678 = vst [vmem:[%s582 + $0x98] sm:$0x1] %v677
        %v679 = vld [vmem:[%s582 + $0x9c] sm:$0xf]
        %v680 = vsel %vm585, %v489, %v679
        %681 = vst [vmem:[%s582 + $0x9c] sm:$0xf] %v680
        %682 = vst.msk [vmem:[%s582 + $0xa0] sm:$0xf] %vm203, %v498
        %v683 = vld [vmem:[%s582 + $0xa4] sm:$0x1]
        %v684 = vsel %vm591, %v499, %v683
        %685 = vst [vmem:[%s582 + $0xa4] sm:$0x1] %v684
        %v686 = vld [vmem:[%s582 + $0xa8] sm:$0xf]
        %v687 = vsel %vm585, %v506, %v686
        %688 = vst [vmem:[%s582 + $0xa8] sm:$0xf] %v687
        %689 = vst.msk [vmem:[%s582 + $0xac] sm:$0xf] %vm203, %v515
        %v690 = vld [vmem:[%s582 + $0xb0] sm:$0x1]
        %v691 = vsel %vm591, %v516, %v690
        %692 = vst [vmem:[%s582 + $0xb0] sm:$0x1] %v691
        %v693 = vld [vmem:[%s582 + $0xb4] sm:$0xf]
        %v694 = vsel %vm585, %v523, %v693
        %695 = vst [vmem:[%s582 + $0xb4] sm:$0xf] %v694
        %696 = vst.msk [vmem:[%s582 + $0xb8] sm:$0xf] %vm203, %v532
        %v697 = vld [vmem:[%s582 + $0xbc] sm:$0x1]
        %v698 = vsel %vm591, %v533, %v697
        %699 = vst [vmem:[%s582 + $0xbc] sm:$0x1] %v698
        %v700 = vld [vmem:[#allocation2] sm:$0xf]
        %v701 = vld [vmem:[#allocation2 + $0x4] sm:$0xf]
        %v702 = vld [vmem:[#allocation2 + $0x8] sm:$0x1]
        %v703 = vld [vmem:[#allocation2 + $0xc] sm:$0xf]
        %v704 = vld [vmem:[#allocation2 + $0x10] sm:$0xf]
        %v705 = vld [vmem:[#allocation2 + $0x14] sm:$0x1]
        %v706 = vld [vmem:[#allocation2 + $0x18] sm:$0xf]
        %v707 = vld [vmem:[#allocation2 + $0x1c] sm:$0xf]
        %v708 = vld [vmem:[#allocation2 + $0x20] sm:$0x1]
        %v709 = vld [vmem:[#allocation2 + $0x24] sm:$0xf]
        %v710 = vld [vmem:[#allocation2 + $0x28] sm:$0xf]
        %v711 = vld [vmem:[#allocation2 + $0x2c] sm:$0x1]
        %v712 = vld [vmem:[#allocation2 + $0x30] sm:$0xf]
        %v713 = vld [vmem:[#allocation2 + $0x34] sm:$0xf]
        %v714 = vld [vmem:[#allocation2 + $0x38] sm:$0x1]
        %v715 = vld [vmem:[#allocation2 + $0x3c] sm:$0xf]
        %v716 = vld [vmem:[#allocation2 + $0x40] sm:$0xf]
        %v717 = vld [vmem:[#allocation2 + $0x44] sm:$0x1]
        %v718 = vld [vmem:[#allocation2 + $0x48] sm:$0xf]
        %v719 = vld [vmem:[#allocation2 + $0x4c] sm:$0xf]
        %v720 = vld [vmem:[#allocation2 + $0x50] sm:$0x1]
        %v721 = vld [vmem:[#allocation2 + $0x54] sm:$0xf]
        %v722 = vld [vmem:[#allocation2 + $0x58] sm:$0xf]
        %v723 = vld [vmem:[#allocation2 + $0x5c] sm:$0x1]
        %v724 = vld [vmem:[#allocation2 + $0x60] sm:$0xf]
        %v725 = vld [vmem:[#allocation2 + $0x64] sm:$0xf]
        %v726 = vld [vmem:[#allocation2 + $0x68] sm:$0x1]
        %v727 = vld [vmem:[#allocation2 + $0x6c] sm:$0xf]
        %v728 = vld [vmem:[#allocation2 + $0x70] sm:$0xf]
        %v729 = vld [vmem:[#allocation2 + $0x74] sm:$0x1]
        %v730 = vld [vmem:[#allocation2 + $0x78] sm:$0xf]
        %v731 = vld [vmem:[#allocation2 + $0x7c] sm:$0xf]
        %v732 = vld [vmem:[#allocation2 + $0x80] sm:$0x1]
        %v733 = vld [vmem:[#allocation2 + $0x84] sm:$0xf]
        %v734 = vld [vmem:[#allocation2 + $0x88] sm:$0xf]
        %v735 = vld [vmem:[#allocation2 + $0x8c] sm:$0x1]
        %v736 = vld [vmem:[#allocation2 + $0x90] sm:$0xf]
        %v737 = vld [vmem:[#allocation2 + $0x94] sm:$0xf]
        %v738 = vld [vmem:[#allocation2 + $0x98] sm:$0x1]
        %v739 = vld [vmem:[#allocation2 + $0x9c] sm:$0xf]
        %v740 = vld [vmem:[#allocation2 + $0xa0] sm:$0xf]
        %v741 = vld [vmem:[#allocation2 + $0xa4] sm:$0x1]
        %v742 = vld [vmem:[#allocation2 + $0xa8] sm:$0xf]
        %v743 = vld [vmem:[#allocation2 + $0xac] sm:$0xf]
        %v744 = vld [vmem:[#allocation2 + $0xb0] sm:$0x1]
        %v745 = vld [vmem:[#allocation2 + $0xb4] sm:$0xf]
        %v746 = vld [vmem:[#allocation2 + $0xb8] sm:$0xf]
        %v747 = vld [vmem:[#allocation2 + $0xbc] sm:$0x1]
        %v748 = vld [vmem:[#allocation2 + $0xc0] sm:$0xf]
        %v749 = vld [vmem:[#allocation2 + $0xc4] sm:$0xf]
        %v750 = vld [vmem:[#allocation2 + $0xc8] sm:$0x1]
        %v751 = vld [vmem:[#allocation2 + $0xcc] sm:$0xf]
        %v752 = vld [vmem:[#allocation2 + $0xd0] sm:$0xf]
        %v753 = vld [vmem:[#allocation2 + $0xd4] sm:$0x1]
        %v786 = vunpack.c.l.b16 %v700
        %v787 = vunpack.c.l.b16 %v701
        %v788 = vunpack.c.l.b16 %v703
        %v789 = vunpack.c.l.b16 %v704
        %v790 = vunpack.c.l.b16 %v706
        %v791 = vunpack.c.l.b16 %v707
        %v792 = vunpack.c.l.b16 %v709
        %v793 = vunpack.c.l.b16 %v710
        %v794 = vunpack.c.l.b16 %v712
        %v795 = vunpack.c.l.b16 %v713
        %v796 = vunpack.c.l.b16 %v715
        %v797 = vunpack.c.l.b16 %v716
        %v798 = vunpack.c.l.b16 %v718
        %v799 = vunpack.c.l.b16 %v719
        %v800 = vunpack.c.l.b16 %v721
        %v801 = vunpack.c.l.b16 %v722
        %v802 = vunpack.c.l.b16 %v724
        %v803 = vunpack.c.l.b16 %v725
        %v804 = vunpack.c.l.b16 %v727
        %v805 = vunpack.c.l.b16 %v728
        %v806 = vunpack.c.l.b16 %v730
        %v807 = vunpack.c.l.b16 %v731
        %v808 = vunpack.c.l.b16 %v733
        %v809 = vunpack.c.l.b16 %v734
        %v810 = vunpack.c.l.b16 %v736
        %v811 = vunpack.c.l.b16 %v737
        %v812 = vunpack.c.l.b16 %v739
        %v813 = vunpack.c.l.b16 %v740
        %v814 = vunpack.c.l.b16 %v742
        %v815 = vunpack.c.l.b16 %v743
        %v816 = vunpack.c.l.b16 %v745
        %v817 = vunpack.c.l.b16 %v746
        %v818 = vpack.c.b16 %v787, %v786
        %v819 = vpack.c.b16 %v789, %v788
        %v820 = vpack.c.b16 %v791, %v790
        %v821 = vpack.c.b16 %v793, %v792
        %v822 = vpack.c.b16 %v795, %v794
        %v823 = vpack.c.b16 %v797, %v796
        %v824 = vpack.c.b16 %v799, %v798
        %v825 = vpack.c.b16 %v801, %v800
        %v826 = vpack.c.b16 %v803, %v802
        %v827 = vpack.c.b16 %v805, %v804
        %v828 = vpack.c.b16 %v807, %v806
        %v829 = vpack.c.b16 %v809, %v808
        %v830 = vpack.c.b16 %v811, %v810
        %v831 = vpack.c.b16 %v813, %v812
        %v832 = vpack.c.b16 %v815, %v814
        %v833 = vpack.c.b16 %v817, %v816
        %vm850 = vcmask 64512
        %851 = vst.msk [vmem:[#allocation3] sm:$0xff] %vm850, %v818
        %852 = vst.msk [vmem:[#allocation3 + $0x8] sm:$0xff] %vm850, %v819
        %853 = vst.msk [vmem:[#allocation3 + $0x10] sm:$0xff] %vm850, %v820
        %854 = vst.msk [vmem:[#allocation3 + $0x18] sm:$0xff] %vm850, %v821
        %855 = vst.msk [vmem:[#allocation3 + $0x20] sm:$0xff] %vm850, %v822
        %856 = vst.msk [vmem:[#allocation3 + $0x28] sm:$0xff] %vm850, %v823
        %857 = vst.msk [vmem:[#allocation3 + $0x30] sm:$0xff] %vm850, %v824
        %858 = vst.msk [vmem:[#allocation3 + $0x38] sm:$0xff] %vm850, %v825
        %859 = vst.msk [vmem:[#allocation3 + $0x40] sm:$0xff] %vm850, %v826
        %860 = vst.msk [vmem:[#allocation3 + $0x48] sm:$0xff] %vm850, %v827
        %861 = vst.msk [vmem:[#allocation3 + $0x50] sm:$0xff] %vm850, %v828
        %862 = vst.msk [vmem:[#allocation3 + $0x58] sm:$0xff] %vm850, %v829
        %863 = vst.msk [vmem:[#allocation3 + $0x60] sm:$0xff] %vm850, %v830
        %864 = vst.msk [vmem:[#allocation3 + $0x68] sm:$0xff] %vm850, %v831
        %865 = vst.msk [vmem:[#allocation3 + $0x70] sm:$0xff] %vm850, %v832
        %866 = vst.msk [vmem:[#allocation3 + $0x78] sm:$0xff] %vm850, %v833
        %v883 = vunpack.c.l.b16 %v702
        %v884 = vunpack.c.l.b16 %v705
        %v885 = vunpack.c.l.b16 %v708
        %v886 = vunpack.c.l.b16 %v711
        %v887 = vunpack.c.l.b16 %v714
        %v888 = vunpack.c.l.b16 %v717
        %v889 = vunpack.c.l.b16 %v720
        %v890 = vunpack.c.l.b16 %v723
        %v891 = vunpack.c.l.b16 %v726
        %v892 = vunpack.c.l.b16 %v729
        %v893 = vunpack.c.l.b16 %v732
        %v894 = vunpack.c.l.b16 %v735
        %v895 = vunpack.c.l.b16 %v738
        %v896 = vunpack.c.l.b16 %v741
        %v897 = vunpack.c.l.b16 %v744
        %v898 = vunpack.c.l.b16 %v747
        %v899 = vpack.c.b16 %v883, %v883
        %v900 = vpack.c.b16 %v884, %v884
        %v901 = vpack.c.b16 %v885, %v885
        %v902 = vpack.c.b16 %v886, %v886
        %v903 = vpack.c.b16 %v887, %v887
        %v904 = vpack.c.b16 %v888, %v888
        %v905 = vpack.c.b16 %v889, %v889
        %v906 = vpack.c.b16 %v890, %v890
        %v907 = vpack.c.b16 %v891, %v891
        %v908 = vpack.c.b16 %v892, %v892
        %v909 = vpack.c.b16 %v893, %v893
        %v910 = vpack.c.b16 %v894, %v894
        %v911 = vpack.c.b16 %v895, %v895
        %v912 = vpack.c.b16 %v896, %v896
        %v913 = vpack.c.b16 %v897, %v897
        %v914 = vpack.c.b16 %v898, %v898
        %vm915 = vsmask.f32 7424
        %v917 = vshrl.u32 %v818, 16
        %v919 = vshll.u32 %v818, 16
        %v921 = vrot.slane %v919, 1
        %v922 = vor.u32 %v917, %v921
        %v924 = vshll.u32 %v899, 16
        %v926 = vrot.slane %v924, 1
        %v927 = vsel %vm915, %v922, %v926
        %v929 = vshrl.u32 %v819, 16
        %v931 = vshll.u32 %v819, 16
        %v933 = vrot.slane %v931, 1
        %v934 = vor.u32 %v929, %v933
        %v936 = vshll.u32 %v900, 16
        %v938 = vrot.slane %v936, 1
        %v939 = vsel %vm915, %v934, %v938
        %v941 = vshrl.u32 %v820, 16
        %v943 = vshll.u32 %v820, 16
        %v945 = vrot.slane %v943, 1
        %v946 = vor.u32 %v941, %v945
        %v948 = vshll.u32 %v901, 16
        %v950 = vrot.slane %v948, 1
        %v951 = vsel %vm915, %v946, %v950
        %v953 = vshrl.u32 %v821, 16
        %v955 = vshll.u32 %v821, 16
        %v957 = vrot.slane %v955, 1
        %v958 = vor.u32 %v953, %v957
        %v960 = vshll.u32 %v902, 16
        %v962 = vrot.slane %v960, 1
        %v963 = vsel %vm915, %v958, %v962
        %v965 = vshrl.u32 %v822, 16
        %v967 = vshll.u32 %v822, 16
        %v969 = vrot.slane %v967, 1
        %v970 = vor.u32 %v965, %v969
        %v972 = vshll.u32 %v903, 16
        %v974 = vrot.slane %v972, 1
        %v975 = vsel %vm915, %v970, %v974
        %v977 = vshrl.u32 %v823, 16
        %v979 = vshll.u32 %v823, 16
        %v981 = vrot.slane %v979, 1
        %v982 = vor.u32 %v977, %v981
        %v984 = vshll.u32 %v904, 16
        %v986 = vrot.slane %v984, 1
        %v987 = vsel %vm915, %v982, %v986
        %v989 = vshrl.u32 %v824, 16
        %v991 = vshll.u32 %v824, 16
        %v993 = vrot.slane %v991, 1
        %v994 = vor.u32 %v989, %v993
        %v996 = vshll.u32 %v905, 16
        %v998 = vrot.slane %v996, 1
        %v999 = vsel %vm915, %v994, %v998
        %v1001 = vshrl.u32 %v825, 16
        %v1003 = vshll.u32 %v825, 16
        %v1005 = vrot.slane %v1003, 1
        %v1006 = vor.u32 %v1001, %v1005
        %v1008 = vshll.u32 %v906, 16
        %v1010 = vrot.slane %v1008, 1
        %v1011 = vsel %vm915, %v1006, %v1010
        %v1013 = vshrl.u32 %v826, 16
        %v1015 = vshll.u32 %v826, 16
        %v1017 = vrot.slane %v1015, 1
        %v1018 = vor.u32 %v1013, %v1017
        %v1020 = vshll.u32 %v907, 16
        %v1022 = vrot.slane %v1020, 1
        %v1023 = vsel %vm915, %v1018, %v1022
        %v1025 = vshrl.u32 %v827, 16
        %v1027 = vshll.u32 %v827, 16
        %v1029 = vrot.slane %v1027, 1
        %v1030 = vor.u32 %v1025, %v1029
        %v1032 = vshll.u32 %v908, 16
        %v1034 = vrot.slane %v1032, 1
        %v1035 = vsel %vm915, %v1030, %v1034
        %v1037 = vshrl.u32 %v828, 16
        %v1039 = vshll.u32 %v828, 16
        %v1041 = vrot.slane %v1039, 1
        %v1042 = vor.u32 %v1037, %v1041
        %v1044 = vshll.u32 %v909, 16
        %v1046 = vrot.slane %v1044, 1
        %v1047 = vsel %vm915, %v1042, %v1046
        %v1049 = vshrl.u32 %v829, 16
        %v1051 = vshll.u32 %v829, 16
        %v1053 = vrot.slane %v1051, 1
        %v1054 = vor.u32 %v1049, %v1053
        %v1056 = vshll.u32 %v910, 16
        %v1058 = vrot.slane %v1056, 1
        %v1059 = vsel %vm915, %v1054, %v1058
        %v1061 = vshrl.u32 %v830, 16
        %v1063 = vshll.u32 %v830, 16
        %v1065 = vrot.slane %v1063, 1
        %v1066 = vor.u32 %v1061, %v1065
        %v1068 = vshll.u32 %v911, 16
        %v1070 = vrot.slane %v1068, 1
        %v1071 = vsel %vm915, %v1066, %v1070
        %v1073 = vshrl.u32 %v831, 16
        %v1075 = vshll.u32 %v831, 16
        %v1077 = vrot.slane %v1075, 1
        %v1078 = vor.u32 %v1073, %v1077
        %v1080 = vshll.u32 %v912, 16
        %v1082 = vrot.slane %v1080, 1
        %v1083 = vsel %vm915, %v1078, %v1082
        %v1085 = vshrl.u32 %v832, 16
        %v1087 = vshll.u32 %v832, 16
        %v1089 = vrot.slane %v1087, 1
        %v1090 = vor.u32 %v1085, %v1089
        %v1092 = vshll.u32 %v913, 16
        %v1094 = vrot.slane %v1092, 1
        %v1095 = vsel %vm915, %v1090, %v1094
        %v1097 = vshrl.u32 %v833, 16
        %v1099 = vshll.u32 %v833, 16
        %v1101 = vrot.slane %v1099, 1
        %v1102 = vor.u32 %v1097, %v1101
        %v1104 = vshll.u32 %v914, 16
        %v1106 = vrot.slane %v1104, 1
        %v1107 = vsel %vm915, %v1102, %v1106
        %1108 = vrot.lane.b32.xlu0 %v927, 8
        %v1109 = vpop.permute.xlu0 %1108
        %1110 = vrot.lane.b32.xlu0 %v939, 8
        %v1111 = vpop.permute.xlu0 %1110
        %1112 = vrot.lane.b32.xlu0 %v951, 8
        %v1113 = vpop.permute.xlu0 %1112
        %1114 = vrot.lane.b32.xlu0 %v963, 8
        %v1115 = vpop.permute.xlu0 %1114
        %1116 = vrot.lane.b32.xlu0 %v975, 8
        %v1117 = vpop.permute.xlu0 %1116
        %1118 = vrot.lane.b32.xlu0 %v987, 8
        %v1119 = vpop.permute.xlu0 %1118
        %1120 = vrot.lane.b32.xlu0 %v999, 8
        %v1121 = vpop.permute.xlu0 %1120
        %1122 = vrot.lane.b32.xlu0 %v1011, 8
        %v1123 = vpop.permute.xlu0 %1122
        %1124 = vrot.lane.b32.xlu0 %v1023, 8
        %v1125 = vpop.permute.xlu0 %1124
        %1126 = vrot.lane.b32.xlu0 %v1035, 8
        %v1127 = vpop.permute.xlu0 %1126
        %1128 = vrot.lane.b32.xlu0 %v1047, 8
        %v1129 = vpop.permute.xlu0 %1128
        %1130 = vrot.lane.b32.xlu0 %v1059, 8
        %v1131 = vpop.permute.xlu0 %1130
        %1132 = vrot.lane.b32.xlu0 %v1071, 8
        %v1133 = vpop.permute.xlu0 %1132
        %1134 = vrot.lane.b32.xlu0 %v1083, 8
        %v1135 = vpop.permute.xlu0 %1134
        %1136 = vrot.lane.b32.xlu0 %v1095, 8
        %v1137 = vpop.permute.xlu0 %1136
        %1138 = vrot.lane.b32.xlu0 %v1107, 8
        %v1139 = vpop.permute.xlu0 %1138
        %vm1156 = vcmask 130112
        %1157 = vst.msk [vmem:[#allocation3] sm:$0xff] %vm1156, %v1109
        %1158 = vst.msk [vmem:[#allocation3 + $0x8] sm:$0xff] %vm1156, %v1111
        %1159 = vst.msk [vmem:[#allocation3 + $0x10] sm:$0xff] %vm1156, %v1113
        %1160 = vst.msk [vmem:[#allocation3 + $0x18] sm:$0xff] %vm1156, %v1115
        %1161 = vst.msk [vmem:[#allocation3 + $0x20] sm:$0xff] %vm1156, %v1117
        %1162 = vst.msk [vmem:[#allocation3 + $0x28] sm:$0xff] %vm1156, %v1119
        %1163 = vst.msk [vmem:[#allocation3 + $0x30] sm:$0xff] %vm1156, %v1121
        %1164 = vst.msk [vmem:[#allocation3 + $0x38] sm:$0xff] %vm1156, %v1123
        %1165 = vst.msk [vmem:[#allocation3 + $0x40] sm:$0xff] %vm1156, %v1125
        %1166 = vst.msk [vmem:[#allocation3 + $0x48] sm:$0xff] %vm1156, %v1127
        %1167 = vst.msk [vmem:[#allocation3 + $0x50] sm:$0xff] %vm1156, %v1129
        %1168 = vst.msk [vmem:[#allocation3 + $0x58] sm:$0xff] %vm1156, %v1131
        %1169 = vst.msk [vmem:[#allocation3 + $0x60] sm:$0xff] %vm1156, %v1133
        %1170 = vst.msk [vmem:[#allocation3 + $0x68] sm:$0xff] %vm1156, %v1135
        %1171 = vst.msk [vmem:[#allocation3 + $0x70] sm:$0xff] %vm1156, %v1137
        %1172 = vst.msk [vmem:[#allocation3 + $0x78] sm:$0xff] %vm1156, %v1139
        %vm1173 = vcmask 1046528
        %v1174 = vrot.slane %v818, 1
        %v1175 = vrot.slane %v899, 1
        %v1176 = vsel %vm1173, %v1174, %v1175
        %v1177 = vrot.slane %v819, 1
        %v1178 = vrot.slane %v900, 1
        %v1179 = vsel %vm1173, %v1177, %v1178
        %v1180 = vrot.slane %v820, 1
        %v1181 = vrot.slane %v901, 1
        %v1182 = vsel %vm1173, %v1180, %v1181
        %v1183 = vrot.slane %v821, 1
        %v1184 = vrot.slane %v902, 1
        %v1185 = vsel %vm1173, %v1183, %v1184
        %v1186 = vrot.slane %v822, 1
        %v1187 = vrot.slane %v903, 1
        %v1188 = vsel %vm1173, %v1186, %v1187
        %v1189 = vrot.slane %v823, 1
        %v1190 = vrot.slane %v904, 1
        %v1191 = vsel %vm1173, %v1189, %v1190
        %v1192 = vrot.slane %v824, 1
        %v1193 = vrot.slane %v905, 1
        %v1194 = vsel %vm1173, %v1192, %v1193
        %v1195 = vrot.slane %v825, 1
        %v1196 = vrot.slane %v906, 1
        %v1197 = vsel %vm1173, %v1195, %v1196
        %v1198 = vrot.slane %v826, 1
        %v1199 = vrot.slane %v907, 1
        %v1200 = vsel %vm1173, %v1198, %v1199
        %v1201 = vrot.slane %v827, 1
        %v1202 = vrot.slane %v908, 1
        %v1203 = vsel %vm1173, %v1201, %v1202
        %v1204 = vrot.slane %v828, 1
        %v1205 = vrot.slane %v909, 1
        %v1206 = vsel %vm1173, %v1204, %v1205
        %v1207 = vrot.slane %v829, 1
        %v1208 = vrot.slane %v910, 1
        %v1209 = vsel %vm1173, %v1207, %v1208
        %v1210 = vrot.slane %v830, 1
        %v1211 = vrot.slane %v911, 1
        %v1212 = vsel %vm1173, %v1210, %v1211
        %v1213 = vrot.slane %v831, 1
        %v1214 = vrot.slane %v912, 1
        %v1215 = vsel %vm1173, %v1213, %v1214
        %v1216 = vrot.slane %v832, 1
        %v1217 = vrot.slane %v913, 1
        %v1218 = vsel %vm1173, %v1216, %v1217
        %v1219 = vrot.slane %v833, 1
        %v1220 = vrot.slane %v914, 1
        %v1221 = vsel %vm1173, %v1219, %v1220
        %1222 = vrot.lane.b32.xlu0 %v1176, 16
        %v1223 = vpop.permute.xlu0 %1222
        %1224 = vrot.lane.b32.xlu0 %v1179, 16
        %v1225 = vpop.permute.xlu0 %1224
        %1226 = vrot.lane.b32.xlu0 %v1182, 16
        %v1227 = vpop.permute.xlu0 %1226
        %1228 = vrot.lane.b32.xlu0 %v1185, 16
        %v1229 = vpop.permute.xlu0 %1228
        %1230 = vrot.lane.b32.xlu0 %v1188, 16
        %v1231 = vpop.permute.xlu0 %1230
        %1232 = vrot.lane.b32.xlu0 %v1191, 16
        %v1233 = vpop.permute.xlu0 %1232
        %1234 = vrot.lane.b32.xlu0 %v1194, 16
        %v1235 = vpop.permute.xlu0 %1234
        %1236 = vrot.lane.b32.xlu0 %v1197, 16
        %v1237 = vpop.permute.xlu0 %1236
        %1238 = vrot.lane.b32.xlu0 %v1200, 16
        %v1239 = vpop.permute.xlu0 %1238
        %1240 = vrot.lane.b32.xlu0 %v1203, 16
        %v1241 = vpop.permute.xlu0 %1240
        %1242 = vrot.lane.b32.xlu0 %v1206, 16
        %v1243 = vpop.permute.xlu0 %1242
        %1244 = vrot.lane.b32.xlu0 %v1209, 16
        %v1245 = vpop.permute.xlu0 %1244
        %1246 = vrot.lane.b32.xlu0 %v1212, 16
        %v1247 = vpop.permute.xlu0 %1246
        %1248 = vrot.lane.b32.xlu0 %v1215, 16
        %v1249 = vpop.permute.xlu0 %1248
        %1250 = vrot.lane.b32.xlu0 %v1218, 16
        %v1251 = vpop.permute.xlu0 %1250
        %1252 = vrot.lane.b32.xlu0 %v1221, 16
        %v1253 = vpop.permute.xlu0 %1252
        %vm1270 = vcmask 195712
        %1271 = vst.msk [vmem:[#allocation3] sm:$0xff] %vm1270, %v1223
        %1272 = vst.msk [vmem:[#allocation3 + $0x8] sm:$0xff] %vm1270, %v1225
        %1273 = vst.msk [vmem:[#allocation3 + $0x10] sm:$0xff] %vm1270, %v1227
        %1274 = vst.msk [vmem:[#allocation3 + $0x18] sm:$0xff] %vm1270, %v1229
        %1275 = vst.msk [vmem:[#allocation3 + $0x20] sm:$0xff] %vm1270, %v1231
        %1276 = vst.msk [vmem:[#allocation3 + $0x28] sm:$0xff] %vm1270, %v1233
        %1277 = vst.msk [vmem:[#allocation3 + $0x30] sm:$0xff] %vm1270, %v1235
        %1278 = vst.msk [vmem:[#allocation3 + $0x38] sm:$0xff] %vm1270, %v1237
        %1279 = vst.msk [vmem:[#allocation3 + $0x40] sm:$0xff] %vm1270, %v1239
        %1280 = vst.msk [vmem:[#allocation3 + $0x48] sm:$0xff] %vm1270, %v1241
        %1281 = vst.msk [vmem:[#allocation3 + $0x50] sm:$0xff] %vm1270, %v1243
        %1282 = vst.msk [vmem:[#allocation3 + $0x58] sm:$0xff] %vm1270, %v1245
        %1283 = vst.msk [vmem:[#allocation3 + $0x60] sm:$0xff] %vm1270, %v1247
        %1284 = vst.msk [vmem:[#allocation3 + $0x68] sm:$0xff] %vm1270, %v1249
        %1285 = vst.msk [vmem:[#allocation3 + $0x70] sm:$0xff] %vm1270, %v1251
        %1286 = vst.msk [vmem:[#allocation3 + $0x78] sm:$0xff] %vm1270, %v1253
        %v1289 = vunpack.c.l.b16 %v748
        %v1290 = vunpack.c.l.b16 %v749
        %v1291 = vpack.c.b16 %v1290, %v1289
        %1292 = vrot.lane.b32.xlu0 %v819, 24
        %v1293 = vpop.permute.xlu0 %1292
        %1294 = vrot.lane.b32.xlu0 %v820, 24
        %v1295 = vpop.permute.xlu0 %1294
        %1296 = vrot.lane.b32.xlu0 %v821, 24
        %v1297 = vpop.permute.xlu0 %1296
        %1298 = vrot.lane.b32.xlu0 %v822, 24
        %v1299 = vpop.permute.xlu0 %1298
        %1300 = vrot.lane.b32.xlu0 %v823, 24
        %v1301 = vpop.permute.xlu0 %1300
        %1302 = vrot.lane.b32.xlu0 %v824, 24
        %v1303 = vpop.permute.xlu0 %1302
        %1304 = vrot.lane.b32.xlu0 %v825, 24
        %v1305 = vpop.permute.xlu0 %1304
        %1306 = vrot.lane.b32.xlu0 %v826, 24
        %v1307 = vpop.permute.xlu0 %1306
        %1308 = vrot.lane.b32.xlu0 %v827, 24
        %v1309 = vpop.permute.xlu0 %1308
        %1310 = vrot.lane.b32.xlu0 %v828, 24
        %v1311 = vpop.permute.xlu0 %1310
        %1312 = vrot.lane.b32.xlu0 %v829, 24
        %v1313 = vpop.permute.xlu0 %1312
        %1314 = vrot.lane.b32.xlu0 %v830, 24
        %v1315 = vpop.permute.xlu0 %1314
        %1316 = vrot.lane.b32.xlu0 %v831, 24
        %v1317 = vpop.permute.xlu0 %1316
        %1318 = vrot.lane.b32.xlu0 %v832, 24
        %v1319 = vpop.permute.xlu0 %1318
        %1320 = vrot.lane.b32.xlu0 %v833, 24
        %v1321 = vpop.permute.xlu0 %1320
        %1322 = vrot.lane.b32.xlu0 %v1291, 24
        %v1323 = vpop.permute.xlu0 %1322
        %vm1340 = vcmask 261312
        %1341 = vst.msk [vmem:[#allocation3] sm:$0xff] %vm1340, %v1293
        %1342 = vst.msk [vmem:[#allocation3 + $0x8] sm:$0xff] %vm1340, %v1295
        %1343 = vst.msk [vmem:[#allocation3 + $0x10] sm:$0xff] %vm1340, %v1297
        %1344 = vst.msk [vmem:[#allocation3 + $0x18] sm:$0xff] %vm1340, %v1299
        %1345 = vst.msk [vmem:[#allocation3 + $0x20] sm:$0xff] %vm1340, %v1301
        %1346 = vst.msk [vmem:[#allocation3 + $0x28] sm:$0xff] %vm1340, %v1303
        %1347 = vst.msk [vmem:[#allocation3 + $0x30] sm:$0xff] %vm1340, %v1305
        %1348 = vst.msk [vmem:[#allocation3 + $0x38] sm:$0xff] %vm1340, %v1307
        %1349 = vst.msk [vmem:[#allocation3 + $0x40] sm:$0xff] %vm1340, %v1309
        %1350 = vst.msk [vmem:[#allocation3 + $0x48] sm:$0xff] %vm1340, %v1311
        %1351 = vst.msk [vmem:[#allocation3 + $0x50] sm:$0xff] %vm1340, %v1313
        %1352 = vst.msk [vmem:[#allocation3 + $0x58] sm:$0xff] %vm1340, %v1315
        %1353 = vst.msk [vmem:[#allocation3 + $0x60] sm:$0xff] %vm1340, %v1317
        %1354 = vst.msk [vmem:[#allocation3 + $0x68] sm:$0xff] %vm1340, %v1319
        %1355 = vst.msk [vmem:[#allocation3 + $0x70] sm:$0xff] %vm1340, %v1321
        %1356 = vst.msk [vmem:[#allocation3 + $0x78] sm:$0xff] %vm1340, %v1323
        %v1358 = vunpack.c.l.b16 %v750
        %v1359 = vpack.c.b16 %v1358, %v1358
        %v1361 = vshrl.u32 %v1291, 16
        %v1363 = vshll.u32 %v1291, 16
        %v1365 = vrot.slane %v1363, 1
        %v1366 = vor.u32 %v1361, %v1365
        %v1368 = vshll.u32 %v1359, 16
        %v1370 = vrot.slane %v1368, 1
        %v1371 = vsel %vm915, %v1366, %v1370
        %1372 = vrot.lane.b32.xlu0 %v939, 32
        %v1373 = vpop.permute.xlu0 %1372
        %1374 = vrot.lane.b32.xlu0 %v951, 32
        %v1375 = vpop.permute.xlu0 %1374
        %1376 = vrot.lane.b32.xlu0 %v963, 32
        %v1377 = vpop.permute.xlu0 %1376
        %1378 = vrot.lane.b32.xlu0 %v975, 32
        %v1379 = vpop.permute.xlu0 %1378
        %1380 = vrot.lane.b32.xlu0 %v987, 32
        %v1381 = vpop.permute.xlu0 %1380
        %1382 = vrot.lane.b32.xlu0 %v999, 32
        %v1383 = vpop.permute.xlu0 %1382
        %1384 = vrot.lane.b32.xlu0 %v1011, 32
        %v1385 = vpop.permute.xlu0 %1384
        %1386 = vrot.lane.b32.xlu0 %v1023, 32
        %v1387 = vpop.permute.xlu0 %1386
        %1388 = vrot.lane.b32.xlu0 %v1035, 32
        %v1389 = vpop.permute.xlu0 %1388
        %1390 = vrot.lane.b32.xlu0 %v1047, 32
        %v1391 = vpop.permute.xlu0 %1390
        %1392 = vrot.lane.b32.xlu0 %v1059, 32
        %v1393 = vpop.permute.xlu0 %1392
        %1394 = vrot.lane.b32.xlu0 %v1071, 32
        %v1395 = vpop.permute.xlu0 %1394
        %1396 = vrot.lane.b32.xlu0 %v1083, 32
        %v1397 = vpop.permute.xlu0 %1396
        %1398 = vrot.lane.b32.xlu0 %v1095, 32
        %v1399 = vpop.permute.xlu0 %1398
        %1400 = vrot.lane.b32.xlu0 %v1107, 32
        %v1401 = vpop.permute.xlu0 %1400
        %1402 = vrot.lane.b32.xlu0 %v1371, 32
        %v1403 = vpop.permute.xlu0 %1402
        %vm1420 = vcmask 326912
        %1421 = vst.msk [vmem:[#allocation3] sm:$0xff] %vm1420, %v1373
        %1422 = vst.msk [vmem:[#allocation3 + $0x8] sm:$0xff] %vm1420, %v1375
        %1423 = vst.msk [vmem:[#allocation3 + $0x10] sm:$0xff] %vm1420, %v1377
        %1424 = vst.msk [vmem:[#allocation3 + $0x18] sm:$0xff] %vm1420, %v1379
        %1425 = vst.msk [vmem:[#allocation3 + $0x20] sm:$0xff] %vm1420, %v1381
        %1426 = vst.msk [vmem:[#allocation3 + $0x28] sm:$0xff] %vm1420, %v1383
        %1427 = vst.msk [vmem:[#allocation3 + $0x30] sm:$0xff] %vm1420, %v1385
        %1428 = vst.msk [vmem:[#allocation3 + $0x38] sm:$0xff] %vm1420, %v1387
        %1429 = vst.msk [vmem:[#allocation3 + $0x40] sm:$0xff] %vm1420, %v1389
        %1430 = vst.msk [vmem:[#allocation3 + $0x48] sm:$0xff] %vm1420, %v1391
        %1431 = vst.msk [vmem:[#allocation3 + $0x50] sm:$0xff] %vm1420, %v1393
        %1432 = vst.msk [vmem:[#allocation3 + $0x58] sm:$0xff] %vm1420, %v1395
        %1433 = vst.msk [vmem:[#allocation3 + $0x60] sm:$0xff] %vm1420, %v1397
        %1434 = vst.msk [vmem:[#allocation3 + $0x68] sm:$0xff] %vm1420, %v1399
        %1435 = vst.msk [vmem:[#allocation3 + $0x70] sm:$0xff] %vm1420, %v1401
        %1436 = vst.msk [vmem:[#allocation3 + $0x78] sm:$0xff] %vm1420, %v1403
        %v1437 = vrot.slane %v1291, 1
        %v1438 = vrot.slane %v1359, 1
        %v1439 = vsel %vm1173, %v1437, %v1438
        %1440 = vrot.lane.b32.xlu0 %v1179, 40
        %v1441 = vpop.permute.xlu0 %1440
        %1442 = vrot.lane.b32.xlu0 %v1182, 40
        %v1443 = vpop.permute.xlu0 %1442
        %1444 = vrot.lane.b32.xlu0 %v1185, 40
        %v1445 = vpop.permute.xlu0 %1444
        %1446 = vrot.lane.b32.xlu0 %v1188, 40
        %v1447 = vpop.permute.xlu0 %1446
        %1448 = vrot.lane.b32.xlu0 %v1191, 40
        %v1449 = vpop.permute.xlu0 %1448
        %1450 = vrot.lane.b32.xlu0 %v1194, 40
        %v1451 = vpop.permute.xlu0 %1450
        %1452 = vrot.lane.b32.xlu0 %v1197, 40
        %v1453 = vpop.permute.xlu0 %1452
        %1454 = vrot.lane.b32.xlu0 %v1200, 40
        %v1455 = vpop.permute.xlu0 %1454
        %1456 = vrot.lane.b32.xlu0 %v1203, 40
        %v1457 = vpop.permute.xlu0 %1456
        %1458 = vrot.lane.b32.xlu0 %v1206, 40
        %v1459 = vpop.permute.xlu0 %1458
        %1460 = vrot.lane.b32.xlu0 %v1209, 40
        %v1461 = vpop.permute.xlu0 %1460
        %1462 = vrot.lane.b32.xlu0 %v1212, 40
        %v1463 = vpop.permute.xlu0 %1462
        %1464 = vrot.lane.b32.xlu0 %v1215, 40
        %v1465 = vpop.permute.xlu0 %1464
        %1466 = vrot.lane.b32.xlu0 %v1218, 40
        %v1467 = vpop.permute.xlu0 %1466
        %1468 = vrot.lane.b32.xlu0 %v1221, 40
        %v1469 = vpop.permute.xlu0 %1468
        %1470 = vrot.lane.b32.xlu0 %v1439, 40
        %v1471 = vpop.permute.xlu0 %1470
        %vm1488 = vcmask 392512
        %1489 = vst.msk [vmem:[#allocation3] sm:$0xff] %vm1488, %v1441
        %1490 = vst.msk [vmem:[#allocation3 + $0x8] sm:$0xff] %vm1488, %v1443
        %1491 = vst.msk [vmem:[#allocation3 + $0x10] sm:$0xff] %vm1488, %v1445
        %1492 = vst.msk [vmem:[#allocation3 + $0x18] sm:$0xff] %vm1488, %v1447
        %1493 = vst.msk [vmem:[#allocation3 + $0x20] sm:$0xff] %vm1488, %v1449
        %1494 = vst.msk [vmem:[#allocation3 + $0x28] sm:$0xff] %vm1488, %v1451
        %1495 = vst.msk [vmem:[#allocation3 + $0x30] sm:$0xff] %vm1488, %v1453
        %1496 = vst.msk [vmem:[#allocation3 + $0x38] sm:$0xff] %vm1488, %v1455
        %1497 = vst.msk [vmem:[#allocation3 + $0x40] sm:$0xff] %vm1488, %v1457
        %1498 = vst.msk [vmem:[#allocation3 + $0x48] sm:$0xff] %vm1488, %v1459
        %1499 = vst.msk [vmem:[#allocation3 + $0x50] sm:$0xff] %vm1488, %v1461
        %1500 = vst.msk [vmem:[#allocation3 + $0x58] sm:$0xff] %vm1488, %v1463
        %1501 = vst.msk [vmem:[#allocation3 + $0x60] sm:$0xff] %vm1488, %v1465
        %1502 = vst.msk [vmem:[#allocation3 + $0x68] sm:$0xff] %vm1488, %v1467
        %1503 = vst.msk [vmem:[#allocation3 + $0x70] sm:$0xff] %vm1488, %v1469
        %1504 = vst.msk [vmem:[#allocation3 + $0x78] sm:$0xff] %vm1488, %v1471
        %v1507 = vunpack.c.l.b16 %v751
        %v1508 = vunpack.c.l.b16 %v752
        %v1509 = vpack.c.b16 %v1508, %v1507
        %1510 = vrot.lane.b32.xlu0 %v820, 48
        %v1511 = vpop.permute.xlu0 %1510
        %1512 = vrot.lane.b32.xlu0 %v821, 48
        %v1513 = vpop.permute.xlu0 %1512
        %1514 = vrot.lane.b32.xlu0 %v822, 48
        %v1515 = vpop.permute.xlu0 %1514
        %1516 = vrot.lane.b32.xlu0 %v823, 48
        %v1517 = vpop.permute.xlu0 %1516
        %1518 = vrot.lane.b32.xlu0 %v824, 48
        %v1519 = vpop.permute.xlu0 %1518
        %1520 = vrot.lane.b32.xlu0 %v825, 48
        %v1521 = vpop.permute.xlu0 %1520
        %1522 = vrot.lane.b32.xlu0 %v826, 48
        %v1523 = vpop.permute.xlu0 %1522
        %1524 = vrot.lane.b32.xlu0 %v827, 48
        %v1525 = vpop.permute.xlu0 %1524
        %1526 = vrot.lane.b32.xlu0 %v828, 48
        %v1527 = vpop.permute.xlu0 %1526
        %1528 = vrot.lane.b32.xlu0 %v829, 48
        %v1529 = vpop.permute.xlu0 %1528
        %1530 = vrot.lane.b32.xlu0 %v830, 48
        %v1531 = vpop.permute.xlu0 %1530
        %1532 = vrot.lane.b32.xlu0 %v831, 48
        %v1533 = vpop.permute.xlu0 %1532
        %1534 = vrot.lane.b32.xlu0 %v832, 48
        %v1535 = vpop.permute.xlu0 %1534
        %1536 = vrot.lane.b32.xlu0 %v833, 48
        %v1537 = vpop.permute.xlu0 %1536
        %1538 = vrot.lane.b32.xlu0 %v1291, 48
        %v1539 = vpop.permute.xlu0 %1538
        %1540 = vrot.lane.b32.xlu0 %v1509, 48
        %v1541 = vpop.permute.xlu0 %1540
        %vm1558 = vcmask 458112
        %1559 = vst.msk [vmem:[#allocation3] sm:$0xff] %vm1558, %v1511
        %1560 = vst.msk [vmem:[#allocation3 + $0x8] sm:$0xff] %vm1558, %v1513
        %1561 = vst.msk [vmem:[#allocation3 + $0x10] sm:$0xff] %vm1558, %v1515
        %1562 = vst.msk [vmem:[#allocation3 + $0x18] sm:$0xff] %vm1558, %v1517
        %1563 = vst.msk [vmem:[#allocation3 + $0x20] sm:$0xff] %vm1558, %v1519
        %1564 = vst.msk [vmem:[#allocation3 + $0x28] sm:$0xff] %vm1558, %v1521
        %1565 = vst.msk [vmem:[#allocation3 + $0x30] sm:$0xff] %vm1558, %v1523
        %1566 = vst.msk [vmem:[#allocation3 + $0x38] sm:$0xff] %vm1558, %v1525
        %1567 = vst.msk [vmem:[#allocation3 + $0x40] sm:$0xff] %vm1558, %v1527
        %1568 = vst.msk [vmem:[#allocation3 + $0x48] sm:$0xff] %vm1558, %v1529
        %1569 = vst.msk [vmem:[#allocation3 + $0x50] sm:$0xff] %vm1558, %v1531
        %1570 = vst.msk [vmem:[#allocation3 + $0x58] sm:$0xff] %vm1558, %v1533
        %1571 = vst.msk [vmem:[#allocation3 + $0x60] sm:$0xff] %vm1558, %v1535
        %1572 = vst.msk [vmem:[#allocation3 + $0x68] sm:$0xff] %vm1558, %v1537
        %1573 = vst.msk [vmem:[#allocation3 + $0x70] sm:$0xff] %vm1558, %v1539
        %1574 = vst.msk [vmem:[#allocation3 + $0x78] sm:$0xff] %vm1558, %v1541
        %v1576 = vunpack.c.l.b16 %v753
        %v1577 = vpack.c.b16 %v1576, %v1576
        %v1579 = vshrl.u32 %v1509, 16
        %v1581 = vshll.u32 %v1509, 16
        %v1583 = vrot.slane %v1581, 1
        %v1584 = vor.u32 %v1579, %v1583
        %v1586 = vshll.u32 %v1577, 16
        %v1588 = vrot.slane %v1586, 1
        %v1589 = vsel %vm915, %v1584, %v1588
        %1590 = vrot.lane.b32.xlu0 %v951, 56
        %v1591 = vpop.permute.xlu0 %1590
        %1592 = vrot.lane.b32.xlu0 %v963, 56
        %v1593 = vpop.permute.xlu0 %1592
        %1594 = vrot.lane.b32.xlu0 %v975, 56
        %v1595 = vpop.permute.xlu0 %1594
        %1596 = vrot.lane.b32.xlu0 %v987, 56
        %v1597 = vpop.permute.xlu0 %1596
        %1598 = vrot.lane.b32.xlu0 %v999, 56
        %v1599 = vpop.permute.xlu0 %1598
        %1600 = vrot.lane.b32.xlu0 %v1011, 56
        %v1601 = vpop.permute.xlu0 %1600
        %1602 = vrot.lane.b32.xlu0 %v1023, 56
        %v1603 = vpop.permute.xlu0 %1602
        %1604 = vrot.lane.b32.xlu0 %v1035, 56
        %v1605 = vpop.permute.xlu0 %1604
        %1606 = vrot.lane.b32.xlu0 %v1047, 56
        %v1607 = vpop.permute.xlu0 %1606
        %1608 = vrot.lane.b32.xlu0 %v1059, 56
        %v1609 = vpop.permute.xlu0 %1608
        %1610 = vrot.lane.b32.xlu0 %v1071, 56
        %v1611 = vpop.permute.xlu0 %1610
        %1612 = vrot.lane.b32.xlu0 %v1083, 56
        %v1613 = vpop.permute.xlu0 %1612
        %1614 = vrot.lane.b32.xlu0 %v1095, 56
        %v1615 = vpop.permute.xlu0 %1614
        %1616 = vrot.lane.b32.xlu0 %v1107, 56
        %v1617 = vpop.permute.xlu0 %1616
        %1618 = vrot.lane.b32.xlu0 %v1371, 56
        %v1619 = vpop.permute.xlu0 %1618
        %1620 = vrot.lane.b32.xlu0 %v1589, 56
        %v1621 = vpop.permute.xlu0 %1620
        %vm1638 = vcmask 523712
        %1639 = vst.msk [vmem:[#allocation3] sm:$0xff] %vm1638, %v1591
        %1640 = vst.msk [vmem:[#allocation3 + $0x8] sm:$0xff] %vm1638, %v1593
        %1641 = vst.msk [vmem:[#allocation3 + $0x10] sm:$0xff] %vm1638, %v1595
        %1642 = vst.msk [vmem:[#allocation3 + $0x18] sm:$0xff] %vm1638, %v1597
        %1643 = vst.msk [vmem:[#allocation3 + $0x20] sm:$0xff] %vm1638, %v1599
        %1644 = vst.msk [vmem:[#allocation3 + $0x28] sm:$0xff] %vm1638, %v1601
        %1645 = vst.msk [vmem:[#allocation3 + $0x30] sm:$0xff] %vm1638, %v1603
        %1646 = vst.msk [vmem:[#allocation3 + $0x38] sm:$0xff] %vm1638, %v1605
        %1647 = vst.msk [vmem:[#allocation3 + $0x40] sm:$0xff] %vm1638, %v1607
        %1648 = vst.msk [vmem:[#allocation3 + $0x48] sm:$0xff] %vm1638, %v1609
        %1649 = vst.msk [vmem:[#allocation3 + $0x50] sm:$0xff] %vm1638, %v1611
        %1650 = vst.msk [vmem:[#allocation3 + $0x58] sm:$0xff] %vm1638, %v1613
        %1651 = vst.msk [vmem:[#allocation3 + $0x60] sm:$0xff] %vm1638, %v1615
        %1652 = vst.msk [vmem:[#allocation3 + $0x68] sm:$0xff] %vm1638, %v1617
        %1653 = vst.msk [vmem:[#allocation3 + $0x70] sm:$0xff] %vm1638, %v1619
        %1654 = vst.msk [vmem:[#allocation3 + $0x78] sm:$0xff] %vm1638, %v1621
        %v1655 = vrot.slane %v1509, 1
        %v1656 = vrot.slane %v1577, 1
        %v1657 = vsel %vm1173, %v1655, %v1656
        %1658 = vrot.lane.b32.xlu0 %v1182, 64
        %v1659 = vpop.permute.xlu0 %1658
        %1660 = vrot.lane.b32.xlu0 %v1185, 64
        %v1661 = vpop.permute.xlu0 %1660
        %1662 = vrot.lane.b32.xlu0 %v1188, 64
        %v1663 = vpop.permute.xlu0 %1662
        %1664 = vrot.lane.b32.xlu0 %v1191, 64
        %v1665 = vpop.permute.xlu0 %1664
        %1666 = vrot.lane.b32.xlu0 %v1194, 64
        %v1667 = vpop.permute.xlu0 %1666
        %1668 = vrot.lane.b32.xlu0 %v1197, 64
        %v1669 = vpop.permute.xlu0 %1668
        %1670 = vrot.lane.b32.xlu0 %v1200, 64
        %v1671 = vpop.permute.xlu0 %1670
        %1672 = vrot.lane.b32.xlu0 %v1203, 64
        %v1673 = vpop.permute.xlu0 %1672
        %1674 = vrot.lane.b32.xlu0 %v1206, 64
        %v1675 = vpop.permute.xlu0 %1674
        %1676 = vrot.lane.b32.xlu0 %v1209, 64
        %v1677 = vpop.permute.xlu0 %1676
        %1678 = vrot.lane.b32.xlu0 %v1212, 64
        %v1679 = vpop.permute.xlu0 %1678
        %1680 = vrot.lane.b32.xlu0 %v1215, 64
        %v1681 = vpop.permute.xlu0 %1680
        %1682 = vrot.lane.b32.xlu0 %v1218, 64
        %v1683 = vpop.permute.xlu0 %1682
        %1684 = vrot.lane.b32.xlu0 %v1221, 64
        %v1685 = vpop.permute.xlu0 %1684
        %1686 = vrot.lane.b32.xlu0 %v1439, 64
        %v1687 = vpop.permute.xlu0 %1686
        %1688 = vrot.lane.b32.xlu0 %v1657, 64
        %v1689 = vpop.permute.xlu0 %1688
        %vm1706 = vcmask 589312
        %1707 = vst.msk [vmem:[#allocation3] sm:$0xff] %vm1706, %v1659
        %1708 = vst.msk [vmem:[#allocation3 + $0x8] sm:$0xff] %vm1706, %v1661
        %1709 = vst.msk [vmem:[#allocation3 + $0x10] sm:$0xff] %vm1706, %v1663
        %1710 = vst.msk [vmem:[#allocation3 + $0x18] sm:$0xff] %vm1706, %v1665
        %1711 = vst.msk [vmem:[#allocation3 + $0x20] sm:$0xff] %vm1706, %v1667
        %1712 = vst.msk [vmem:[#allocation3 + $0x28] sm:$0xff] %vm1706, %v1669
        %1713 = vst.msk [vmem:[#allocation3 + $0x30] sm:$0xff] %vm1706, %v1671
        %1714 = vst.msk [vmem:[#allocation3 + $0x38] sm:$0xff] %vm1706, %v1673
        %1715 = vst.msk [vmem:[#allocation3 + $0x40] sm:$0xff] %vm1706, %v1675
        %1716 = vst.msk [vmem:[#allocation3 + $0x48] sm:$0xff] %vm1706, %v1677
        %1717 = vst.msk [vmem:[#allocation3 + $0x50] sm:$0xff] %vm1706, %v1679
        %1718 = vst.msk [vmem:[#allocation3 + $0x58] sm:$0xff] %vm1706, %v1681
        %1719 = vst.msk [vmem:[#allocation3 + $0x60] sm:$0xff] %vm1706, %v1683
        %1720 = vst.msk [vmem:[#allocation3 + $0x68] sm:$0xff] %vm1706, %v1685
        %1721 = vst.msk [vmem:[#allocation3 + $0x70] sm:$0xff] %vm1706, %v1687
        %1722 = vst.msk [vmem:[#allocation3 + $0x78] sm:$0xff] %vm1706, %v1689
        %v1723 = vld [vmem:[#allocation3] sm:$0xff]
        %v1724 = vld [vmem:[#allocation3 + $0x8] sm:$0xff]
        %v1725 = vld [vmem:[#allocation3 + $0x10] sm:$0xff]
        %v1726 = vld [vmem:[#allocation3 + $0x18] sm:$0xff]
        %v1727 = vld [vmem:[#allocation3 + $0x20] sm:$0xff]
        %v1728 = vld [vmem:[#allocation3 + $0x28] sm:$0xff]
        %v1729 = vld [vmem:[#allocation3 + $0x30] sm:$0xff]
        %v1730 = vld [vmem:[#allocation3 + $0x38] sm:$0xff]
        %v1731 = vld [vmem:[#allocation3 + $0x40] sm:$0xff]
        %v1732 = vld [vmem:[#allocation3 + $0x48] sm:$0xff]
        %v1733 = vld [vmem:[#allocation3 + $0x50] sm:$0xff]
        %v1734 = vld [vmem:[#allocation3 + $0x58] sm:$0xff]
        %v1735 = vld [vmem:[#allocation3 + $0x60] sm:$0xff]
        %v1736 = vld [vmem:[#allocation3 + $0x68] sm:$0xff]
        %v1737 = vld [vmem:[#allocation3 + $0x70] sm:$0xff]
        %v1738 = vld [vmem:[#allocation3 + $0x78] sm:$0xff]
        %v1739 = vld [vmem:[%s1] sm:$0xf]
        %v1740 = vld [vmem:[%s1 + $0x4] sm:$0xf]
        %v1741 = vld [vmem:[%s1 + $0x8] sm:$0xf]
        %v1742 = vld [vmem:[%s1 + $0xc] sm:$0xf]
        %v1743 = vld [vmem:[%s1 + $0x10] sm:$0xf]
        %v1744 = vld [vmem:[%s1 + $0x14] sm:$0xf]
        %v1745 = vld [vmem:[%s1 + $0x18] sm:$0xf]
        %v1746 = vld [vmem:[%s1 + $0x1c] sm:$0xf]
        %v1747 = vld [vmem:[%s1 + $0x20] sm:$0xf]
        %v1748 = vld [vmem:[%s2] sm:$0x1]
        %v1750 = vlaneseq
        %v1751 = vshrl.u32 %v1750, 7
        %v1752 = vsub.s32 0, %v1751
        %v1753 = vrot.slane %v1748, %v1752
        %v1764 = vunpack.c.l.b16 %v1739
        %v1765 = vunpack.c.l.b16 %v1740
        %v1766 = vunpack.c.l.b16 %v1741
        %v1767 = vunpack.c.l.b16 %v1742
        %v1768 = vunpack.c.l.b16 %v1743
        %v1769 = vunpack.c.l.b16 %v1744
        %v1770 = vunpack.c.l.b16 %v1745
        %v1771 = vunpack.c.l.b16 %v1746
        %v1772 = vunpack.c.l.b16 %v1747
        %v1773 = vpack.c.b16 %v1765, %v1764
        %v1774 = vpack.c.b16 %v1767, %v1766
        %v1775 = vpack.c.b16 %v1769, %v1768
        %v1776 = vpack.c.b16 %v1771, %v1770
        %v1777 = vpack.c.b16 %v1772, %v1772
        %vm1782 = vcmask 588800
        %v1784 = vsel %vm1782, %v1723, 0
        %v1787 = vsel %vm1782, %v1724, 0
        %v1790 = vsel %vm1782, %v1725, 0
        %v1793 = vsel %vm1782, %v1726, 0
        %v1796 = vsel %vm1782, %v1727, 0
        %v1799 = vsel %vm1782, %v1728, 0
        %v1802 = vsel %vm1782, %v1729, 0
        %v1805 = vsel %vm1782, %v1730, 0
        %v1808 = vsel %vm1782, %v1731, 0
        %v1811 = vsel %vm1782, %v1732, 0
        %v1814 = vsel %vm1782, %v1733, 0
        %v1817 = vsel %vm1782, %v1734, 0
        %v1820 = vsel %vm1782, %v1735, 0
        %v1823 = vsel %vm1782, %v1736, 0
        %v1826 = vsel %vm1782, %v1737, 0
        %v1829 = vsel %vm1782, %v1738, 0
        %vm1831 = vcmask 1043456
        %v1833 = vsel %vm1831, %v1777, 0
        %1835 = vmatprep.subr.bf16.mxu0 0
        %1836 = vmatpush1.bf16.msra.mxu0 %v1773
        %1837 = vmatprep.subr.bf16.mxu0 0
        %1838 = vmatpush1.bf16.msra.mxu0 %v1774
        %1839 = vmatprep.subr.bf16.mxu0 0
        %1840 = vmatpush1.bf16.msra.mxu0 %v1775
        %1841 = vmatprep.subr.bf16.mxu0 0
        %1842 = vmatpush1.bf16.msra.mxu0 %v1776
        %1843 = vmatprep.subr.bf16.mxu0 0
        %1844 = vmatpush1.bf16.msra.mxu0 %v1833
        %1845 = vmatprep.subr.bf16.mxu0 0
        %1846 = vmatpush1.bf16.msra.mxu0 0
        %1847 = vmatprep.subr.bf16.mxu0 0
        %1848 = vmatpush1.bf16.msra.mxu0 0
        %1849 = vmatprep.subr.bf16.mxu0 0
        %1850 = vmatpush1.bf16.msra.mxu0 0
        %1851 = vmatprep.subr.bf16.mxu0 0
        %1852 = vmatpush1.bf16.msra.mxu0 0
        %1853 = vmatprep.subr.bf16.mxu0 0
        %1854 = vmatpush1.bf16.msra.mxu0 0
        %1855 = vmatprep.subr.bf16.mxu0 0
        %1856 = vmatpush1.bf16.msra.mxu0 0
        %1857 = vmatprep.subr.bf16.mxu0 0
        %1858 = vmatpush1.bf16.msra.mxu0 0
        %1859 = vmatprep.subr.bf16.mxu0 0
        %1860 = vmatpush1.bf16.msra.mxu0 0
        %1861 = vmatprep.subr.bf16.mxu0 0
        %1862 = vmatpush1.bf16.msra.mxu0 0
        %1863 = vmatprep.subr.bf16.mxu0 0
        %1864 = vmatpush1.bf16.msra.mxu0 0
        %1865 = vmatprep.subr.bf16.mxu0 0
        %1866 = vmatpush1.bf16.msra.mxu0 0
        %1867 = vmatprep.mubr.bf16.mxu0 0
        %1868 = vmatmul.mubr.bf16.gmra.mrb[0].mxu0 %v1784
        %v1869 = vpop.f32.mrb[0].mxu0
        %v1870 = vadd.f32 %v1753, %v1869
        %v1871 = vpop.f32.mrb[0].mxu0
        %v1872 = vpop.f32.mrb[0].mxu0
        %v1873 = vadd.f32 %v1753, %v1872
        %v1874 = vpop.f32.mrb[0].mxu0
        %1875 = vmatprep.mubr.bf16.mxu0 0
        %1876 = vmatmul.mubr.bf16.gmra.mrb[0].mxu0 %v1787
        %v1877 = vpop.f32.mrb[0].mxu0
        %v1878 = vadd.f32 %v1753, %v1877
        %v1879 = vpop.f32.mrb[0].mxu0
        %v1880 = vpop.f32.mrb[0].mxu0
        %v1881 = vadd.f32 %v1753, %v1880
        %v1882 = vpop.f32.mrb[0].mxu0
        %1883 = vmatprep.mubr.bf16.mxu0 0
        %1884 = vmatmul.mubr.bf16.gmra.mrb[0].mxu0 %v1790
        %v1885 = vpop.f32.mrb[0].mxu0
        %v1886 = vadd.f32 %v1753, %v1885
        %v1887 = vpop.f32.mrb[0].mxu0
        %v1888 = vpop.f32.mrb[0].mxu0
        %v1889 = vadd.f32 %v1753, %v1888
        %v1890 = vpop.f32.mrb[0].mxu0
        %1891 = vmatprep.mubr.bf16.mxu0 0
        %1892 = vmatmul.mubr.bf16.gmra.mrb[0].mxu0 %v1793
        %v1893 = vpop.f32.mrb[0].mxu0
        %v1894 = vadd.f32 %v1753, %v1893
        %v1895 = vpop.f32.mrb[0].mxu0
        %v1896 = vpop.f32.mrb[0].mxu0
        %v1897 = vadd.f32 %v1753, %v1896
        %v1898 = vpop.f32.mrb[0].mxu0
        %1899 = vmatprep.mubr.bf16.mxu0 0
        %1900 = vmatmul.mubr.bf16.gmra.mrb[0].mxu0 %v1796
        %v1901 = vpop.f32.mrb[0].mxu0
        %v1902 = vadd.f32 %v1753, %v1901
        %v1903 = vpop.f32.mrb[0].mxu0
        %v1904 = vpop.f32.mrb[0].mxu0
        %v1905 = vadd.f32 %v1753, %v1904
        %v1906 = vpop.f32.mrb[0].mxu0
        %1907 = vmatprep.mubr.bf16.mxu0 0
        %1908 = vmatmul.mubr.bf16.gmra.mrb[0].mxu0 %v1799
        %v1909 = vpop.f32.mrb[0].mxu0
        %v1910 = vadd.f32 %v1753, %v1909
        %v1911 = vpop.f32.mrb[0].mxu0
        %v1912 = vpop.f32.mrb[0].mxu0
        %v1913 = vadd.f32 %v1753, %v1912
        %v1914 = vpop.f32.mrb[0].mxu0
        %1915 = vmatprep.mubr.bf16.mxu0 0
        %1916 = vmatmul.mubr.bf16.gmra.mrb[0].mxu0 %v1802
        %v1917 = vpop.f32.mrb[0].mxu0
        %v1918 = vadd.f32 %v1753, %v1917
        %v1919 = vpop.f32.mrb[0].mxu0
        %v1920 = vpop.f32.mrb[0].mxu0
        %v1921 = vadd.f32 %v1753, %v1920
        %v1922 = vpop.f32.mrb[0].mxu0
        %1923 = vmatprep.mubr.bf16.mxu0 0
        %1924 = vmatmul.mubr.bf16.gmra.mrb[0].mxu0 %v1805
        %v1925 = vpop.f32.mrb[0].mxu0
        %v1926 = vadd.f32 %v1753, %v1925
        %v1927 = vpop.f32.mrb[0].mxu0
        %v1928 = vpop.f32.mrb[0].mxu0
        %v1929 = vadd.f32 %v1753, %v1928
        %v1930 = vpop.f32.mrb[0].mxu0
        %1931 = vmatprep.mubr.bf16.mxu0 0
        %1932 = vmatmul.mubr.bf16.gmra.mrb[0].mxu0 %v1808
        %v1933 = vpop.f32.mrb[0].mxu0
        %v1934 = vadd.f32 %v1753, %v1933
        %v1935 = vpop.f32.mrb[0].mxu0
        %v1936 = vpop.f32.mrb[0].mxu0
        %v1937 = vadd.f32 %v1753, %v1936
        %v1938 = vpop.f32.mrb[0].mxu0
        %1939 = vmatprep.mubr.bf16.mxu0 0
        %1940 = vmatmul.mubr.bf16.gmra.mrb[0].mxu0 %v1811
        %v1941 = vpop.f32.mrb[0].mxu0
        %v1942 = vadd.f32 %v1753, %v1941
        %v1943 = vpop.f32.mrb[0].mxu0
        %v1944 = vpop.f32.mrb[0].mxu0
        %v1945 = vadd.f32 %v1753, %v1944
        %v1946 = vpop.f32.mrb[0].mxu0
        %1947 = vmatprep.mubr.bf16.mxu0 0
        %1948 = vmatmul.mubr.bf16.gmra.mrb[0].mxu0 %v1814
        %v1949 = vpop.f32.mrb[0].mxu0
        %v1950 = vadd.f32 %v1753, %v1949
        %v1951 = vpop.f32.mrb[0].mxu0
        %v1952 = vpop.f32.mrb[0].mxu0
        %v1953 = vadd.f32 %v1753, %v1952
        %v1954 = vpop.f32.mrb[0].mxu0
        %1955 = vmatprep.mubr.bf16.mxu0 0
        %1956 = vmatmul.mubr.bf16.gmra.mrb[0].mxu0 %v1817
        %v1957 = vpop.f32.mrb[0].mxu0
        %v1958 = vadd.f32 %v1753, %v1957
        %v1959 = vpop.f32.mrb[0].mxu0
        %v1960 = vpop.f32.mrb[0].mxu0
        %v1961 = vadd.f32 %v1753, %v1960
        %v1962 = vpop.f32.mrb[0].mxu0
        %1963 = vmatprep.mubr.bf16.mxu0 0
        %1964 = vmatmul.mubr.bf16.gmra.mrb[0].mxu0 %v1820
        %v1965 = vpop.f32.mrb[0].mxu0
        %v1966 = vadd.f32 %v1753, %v1965
        %v1967 = vpop.f32.mrb[0].mxu0
        %v1968 = vpop.f32.mrb[0].mxu0
        %v1969 = vadd.f32 %v1753, %v1968
        %v1970 = vpop.f32.mrb[0].mxu0
        %1971 = vmatprep.mubr.bf16.mxu0 0
        %1972 = vmatmul.mubr.bf16.gmra.mrb[0].mxu0 %v1823
        %v1973 = vpop.f32.mrb[0].mxu0
        %v1974 = vadd.f32 %v1753, %v1973
        %v1975 = vpop.f32.mrb[0].mxu0
        %v1976 = vpop.f32.mrb[0].mxu0
        %v1977 = vadd.f32 %v1753, %v1976
        %v1978 = vpop.f32.mrb[0].mxu0
        %1979 = vmatprep.mubr.bf16.mxu0 0
        %1980 = vmatmul.mubr.bf16.gmra.mrb[0].mxu0 %v1826
        %v1981 = vpop.f32.mrb[0].mxu0
        %v1982 = vadd.f32 %v1753, %v1981
        %v1983 = vpop.f32.mrb[0].mxu0
        %v1984 = vpop.f32.mrb[0].mxu0
        %v1985 = vadd.f32 %v1753, %v1984
        %v1986 = vpop.f32.mrb[0].mxu0
        %1987 = vmatprep.mubr.bf16.mxu0 0
        %1988 = vmatmul.mubr.bf16.gmra.mrb[0].mxu0 %v1829
        %v1989 = vpop.f32.mrb[0].mxu0
        %v1990 = vadd.f32 %v1753, %v1989
        %v1991 = vpop.f32.mrb[0].mxu0
        %v1992 = vpop.f32.mrb[0].mxu0
        %v1993 = vadd.f32 %v1753, %v1992
        %v1994 = vpop.f32.mrb[0].mxu0
        %1995 = vdwg.mxu0
        %v1996 = vmax.f32 %v1870, 0.0
        %v1997 = vmax.f32 %v1873, 0.0
        %v1998 = vmax.f32 %v1878, 0.0
        %v1999 = vmax.f32 %v1881, 0.0
        %v2000 = vmax.f32 %v1886, 0.0
        %v2001 = vmax.f32 %v1889, 0.0
        %v2002 = vmax.f32 %v1894, 0.0
        %v2003 = vmax.f32 %v1897, 0.0
        %v2004 = vmax.f32 %v1902, 0.0
        %v2005 = vmax.f32 %v1905, 0.0
        %v2006 = vmax.f32 %v1910, 0.0
        %v2007 = vmax.f32 %v1913, 0.0
        %v2008 = vmax.f32 %v1918, 0.0
        %v2009 = vmax.f32 %v1921, 0.0
        %v2010 = vmax.f32 %v1926, 0.0
        %v2011 = vmax.f32 %v1929, 0.0
        %v2012 = vmax.f32 %v1934, 0.0
        %v2013 = vmax.f32 %v1937, 0.0
        %v2014 = vmax.f32 %v1942, 0.0
        %v2015 = vmax.f32 %v1945, 0.0
        %v2016 = vmax.f32 %v1950, 0.0
        %v2017 = vmax.f32 %v1953, 0.0
        %v2018 = vmax.f32 %v1958, 0.0
        %v2019 = vmax.f32 %v1961, 0.0
        %v2020 = vmax.f32 %v1966, 0.0
        %v2021 = vmax.f32 %v1969, 0.0
        %v2022 = vmax.f32 %v1974, 0.0
        %v2023 = vmax.f32 %v1977, 0.0
        %v2024 = vmax.f32 %v1982, 0.0
        %v2025 = vmax.f32 %v1985, 0.0
        %v2026 = vmax.f32 %v1990, 0.0
        %v2027 = vmax.f32 %v1993, 0.0
        %v2028 = vpack.c.bf16 %v1997, %v1996
        %v2029 = vpack.c.bf16 %v1999, %v1998
        %v2030 = vpack.c.bf16 %v2001, %v2000
        %v2031 = vpack.c.bf16 %v2003, %v2002
        %v2032 = vpack.c.bf16 %v2005, %v2004
        %v2033 = vpack.c.bf16 %v2007, %v2006
        %v2034 = vpack.c.bf16 %v2009, %v2008
        %v2035 = vpack.c.bf16 %v2011, %v2010
        %v2036 = vpack.c.bf16 %v2013, %v2012
        %v2037 = vpack.c.bf16 %v2015, %v2014
        %v2038 = vpack.c.bf16 %v2017, %v2016
        %v2039 = vpack.c.bf16 %v2019, %v2018
        %v2040 = vpack.c.bf16 %v2021, %v2020
        %v2041 = vpack.c.bf16 %v2023, %v2022
        %v2042 = vpack.c.bf16 %v2025, %v2024
        %v2043 = vpack.c.bf16 %v2027, %v2026
        %v2060 = vcombine.high %v2028, %v2028
        %v2062 = vunpack.c.l.s4 1966171168
        %v2063 = vunpack.c.0.s8 %v2062
        %v2064 = vlaneseq
        %v2065 = vshrl.u32 %v2064, 7
        %v2066 = vsub.s32 %v2063, %v2065
        %v2067 = vrot.slane %v2028, %v2066
        %v2069 = vunpack.c.l.s4 1966171168
        %v2070 = vunpack.c.0.s8 %v2069
        %v2071 = vlaneseq
        %v2072 = vshrl.u32 %v2071, 7
        %v2073 = vsub.s32 %v2070, %v2072
        %v2074 = vrot.slane %v2060, %v2073
        %v2075 = vcombine.high %v2067, %v2067
        %v2076 = vcombine.high %v2074, %v2074
        %v2078 = vunpack.c.l.s4 1966171168
        %v2079 = vunpack.c.0.s8 %v2078
        %v2080 = vlaneseq
        %v2081 = vshrl.u32 %v2080, 7
        %v2082 = vsub.s32 %v2079, %v2081
        %v2083 = vrot.slane %v2067, %v2082
        %v2085 = vunpack.c.l.s4 1966171168
        %v2086 = vunpack.c.0.s8 %v2085
        %v2087 = vlaneseq
        %v2088 = vshrl.u32 %v2087, 7
        %v2089 = vsub.s32 %v2086, %v2088
        %v2090 = vrot.slane %v2074, %v2089
        %v2092 = vunpack.c.l.s4 1966171168
        %v2093 = vunpack.c.0.s8 %v2092
        %v2094 = vlaneseq
        %v2095 = vshrl.u32 %v2094, 7
        %v2096 = vsub.s32 %v2093, %v2095
        %v2097 = vrot.slane %v2075, %v2096
        %v2099 = vunpack.c.l.s4 1966171168
        %v2100 = vunpack.c.0.s8 %v2099
        %v2101 = vlaneseq
        %v2102 = vshrl.u32 %v2101, 7
        %v2103 = vsub.s32 %v2100, %v2102
        %v2104 = vrot.slane %v2076, %v2103
        %v2105 = vcombine.high %v2083, %v2083
        %v2106 = vcombine.high %v2090, %v2090
        %v2107 = vcombine.high %v2097, %v2097
        %v2108 = vcombine.high %v2104, %v2104
        %v2109 = vcombine.high %v2029, %v2029
        %v2111 = vunpack.c.l.s4 1966171168
        %v2112 = vunpack.c.0.s8 %v2111
        %v2113 = vlaneseq
        %v2114 = vshrl.u32 %v2113, 7
        %v2115 = vsub.s32 %v2112, %v2114
        %v2116 = vrot.slane %v2029, %v2115
        %v2118 = vunpack.c.l.s4 1966171168
        %v2119 = vunpack.c.0.s8 %v2118
        %v2120 = vlaneseq
        %v2121 = vshrl.u32 %v2120, 7
        %v2122 = vsub.s32 %v2119, %v2121
        %v2123 = vrot.slane %v2109, %v2122
        %v2124 = vcombine.high %v2116, %v2116
        %v2125 = vcombine.high %v2123, %v2123
        %v2127 = vunpack.c.l.s4 1966171168
        %v2128 = vunpack.c.0.s8 %v2127
        %v2129 = vlaneseq
        %v2130 = vshrl.u32 %v2129, 7
        %v2131 = vsub.s32 %v2128, %v2130
        %v2132 = vrot.slane %v2116, %v2131
        %v2134 = vunpack.c.l.s4 1966171168
        %v2135 = vunpack.c.0.s8 %v2134
        %v2136 = vlaneseq
        %v2137 = vshrl.u32 %v2136, 7
        %v2138 = vsub.s32 %v2135, %v2137
        %v2139 = vrot.slane %v2123, %v2138
        %v2141 = vunpack.c.l.s4 1966171168
        %v2142 = vunpack.c.0.s8 %v2141
        %v2143 = vlaneseq
        %v2144 = vshrl.u32 %v2143, 7
        %v2145 = vsub.s32 %v2142, %v2144
        %v2146 = vrot.slane %v2124, %v2145
        %v2148 = vunpack.c.l.s4 1966171168
        %v2149 = vunpack.c.0.s8 %v2148
        %v2150 = vlaneseq
        %v2151 = vshrl.u32 %v2150, 7
        %v2152 = vsub.s32 %v2149, %v2151
        %v2153 = vrot.slane %v2125, %v2152
        %v2154 = vcombine.high %v2132, %v2132
        %v2155 = vcombine.high %v2139, %v2139
        %v2156 = vcombine.high %v2146, %v2146
        %v2157 = vcombine.high %v2153, %v2153
        %v2158 = vcombine.high %v2030, %v2030
        %v2160 = vunpack.c.l.s4 1966171168
        %v2161 = vunpack.c.0.s8 %v2160
        %v2162 = vlaneseq
        %v2163 = vshrl.u32 %v2162, 7
        %v2164 = vsub.s32 %v2161, %v2163
        %v2165 = vrot.slane %v2030, %v2164
        %v2167 = vunpack.c.l.s4 1966171168
        %v2168 = vunpack.c.0.s8 %v2167
        %v2169 = vlaneseq
        %v2170 = vshrl.u32 %v2169, 7
        %v2171 = vsub.s32 %v2168, %v2170
        %v2172 = vrot.slane %v2158, %v2171
        %v2173 = vcombine.high %v2165, %v2165
        %v2174 = vcombine.high %v2172, %v2172
        %v2176 = vunpack.c.l.s4 1966171168
        %v2177 = vunpack.c.0.s8 %v2176
        %v2178 = vlaneseq
        %v2179 = vshrl.u32 %v2178, 7
        %v2180 = vsub.s32 %v2177, %v2179
        %v2181 = vrot.slane %v2165, %v2180
        %v2183 = vunpack.c.l.s4 1966171168
        %v2184 = vunpack.c.0.s8 %v2183
        %v2185 = vlaneseq
        %v2186 = vshrl.u32 %v2185, 7
        %v2187 = vsub.s32 %v2184, %v2186
        %v2188 = vrot.slane %v2172, %v2187
        %v2190 = vunpack.c.l.s4 1966171168
        %v2191 = vunpack.c.0.s8 %v2190
        %v2192 = vlaneseq
        %v2193 = vshrl.u32 %v2192, 7
        %v2194 = vsub.s32 %v2191, %v2193
        %v2195 = vrot.slane %v2173, %v2194
        %v2197 = vunpack.c.l.s4 1966171168
        %v2198 = vunpack.c.0.s8 %v2197
        %v2199 = vlaneseq
        %v2200 = vshrl.u32 %v2199, 7
        %v2201 = vsub.s32 %v2198, %v2200
        %v2202 = vrot.slane %v2174, %v2201
        %v2203 = vcombine.high %v2181, %v2181
        %v2204 = vcombine.high %v2188, %v2188
        %v2205 = vcombine.high %v2195, %v2195
        %v2206 = vcombine.high %v2202, %v2202
        %v2207 = vcombine.high %v2031, %v2031
        %v2209 = vunpack.c.l.s4 1966171168
        %v2210 = vunpack.c.0.s8 %v2209
        %v2211 = vlaneseq
        %v2212 = vshrl.u32 %v2211, 7
        %v2213 = vsub.s32 %v2210, %v2212
        %v2214 = vrot.slane %v2031, %v2213
        %v2216 = vunpack.c.l.s4 1966171168
        %v2217 = vunpack.c.0.s8 %v2216
        %v2218 = vlaneseq
        %v2219 = vshrl.u32 %v2218, 7
        %v2220 = vsub.s32 %v2217, %v2219
        %v2221 = vrot.slane %v2207, %v2220
        %v2222 = vcombine.high %v2214, %v2214
        %v2223 = vcombine.high %v2221, %v2221
        %v2225 = vunpack.c.l.s4 1966171168
        %v2226 = vunpack.c.0.s8 %v2225
        %v2227 = vlaneseq
        %v2228 = vshrl.u32 %v2227, 7
        %v2229 = vsub.s32 %v2226, %v2228
        %v2230 = vrot.slane %v2214, %v2229
        %v2232 = vunpack.c.l.s4 1966171168
        %v2233 = vunpack.c.0.s8 %v2232
        %v2234 = vlaneseq
        %v2235 = vshrl.u32 %v2234, 7
        %v2236 = vsub.s32 %v2233, %v2235
        %v2237 = vrot.slane %v2221, %v2236
        %v2239 = vunpack.c.l.s4 1966171168
        %v2240 = vunpack.c.0.s8 %v2239
        %v2241 = vlaneseq
        %v2242 = vshrl.u32 %v2241, 7
        %v2243 = vsub.s32 %v2240, %v2242
        %v2244 = vrot.slane %v2222, %v2243
        %v2246 = vunpack.c.l.s4 1966171168
        %v2247 = vunpack.c.0.s8 %v2246
        %v2248 = vlaneseq
        %v2249 = vshrl.u32 %v2248, 7
        %v2250 = vsub.s32 %v2247, %v2249
        %v2251 = vrot.slane %v2223, %v2250
        %v2252 = vcombine.high %v2230, %v2230
        %v2253 = vcombine.high %v2237, %v2237
        %v2254 = vcombine.high %v2244, %v2244
        %v2255 = vcombine.high %v2251, %v2251
        %v2256 = vcombine.high %v2032, %v2032
        %v2258 = vunpack.c.l.s4 1966171168
        %v2259 = vunpack.c.0.s8 %v2258
        %v2260 = vlaneseq
        %v2261 = vshrl.u32 %v2260, 7
        %v2262 = vsub.s32 %v2259, %v2261
        %v2263 = vrot.slane %v2032, %v2262
        %v2265 = vunpack.c.l.s4 1966171168
        %v2266 = vunpack.c.0.s8 %v2265
        %v2267 = vlaneseq
        %v2268 = vshrl.u32 %v2267, 7
        %v2269 = vsub.s32 %v2266, %v2268
        %v2270 = vrot.slane %v2256, %v2269
        %v2271 = vcombine.high %v2263, %v2263
        %v2272 = vcombine.high %v2270, %v2270
        %v2274 = vunpack.c.l.s4 1966171168
        %v2275 = vunpack.c.0.s8 %v2274
        %v2276 = vlaneseq
        %v2277 = vshrl.u32 %v2276, 7
        %v2278 = vsub.s32 %v2275, %v2277
        %v2279 = vrot.slane %v2263, %v2278
        %v2281 = vunpack.c.l.s4 1966171168
        %v2282 = vunpack.c.0.s8 %v2281
        %v2283 = vlaneseq
        %v2284 = vshrl.u32 %v2283, 7
        %v2285 = vsub.s32 %v2282, %v2284
        %v2286 = vrot.slane %v2270, %v2285
        %v2288 = vunpack.c.l.s4 1966171168
        %v2289 = vunpack.c.0.s8 %v2288
        %v2290 = vlaneseq
        %v2291 = vshrl.u32 %v2290, 7
        %v2292 = vsub.s32 %v2289, %v2291
        %v2293 = vrot.slane %v2271, %v2292
        %v2295 = vunpack.c.l.s4 1966171168
        %v2296 = vunpack.c.0.s8 %v2295
        %v2297 = vlaneseq
        %v2298 = vshrl.u32 %v2297, 7
        %v2299 = vsub.s32 %v2296, %v2298
        %v2300 = vrot.slane %v2272, %v2299
        %v2301 = vcombine.high %v2279, %v2279
        %v2302 = vcombine.high %v2286, %v2286
        %v2303 = vcombine.high %v2293, %v2293
        %v2304 = vcombine.high %v2300, %v2300
        %v2305 = vcombine.high %v2033, %v2033
        %v2307 = vunpack.c.l.s4 1966171168
        %v2308 = vunpack.c.0.s8 %v2307
        %v2309 = vlaneseq
        %v2310 = vshrl.u32 %v2309, 7
        %v2311 = vsub.s32 %v2308, %v2310
        %v2312 = vrot.slane %v2033, %v2311
        %v2314 = vunpack.c.l.s4 1966171168
        %v2315 = vunpack.c.0.s8 %v2314
        %v2316 = vlaneseq
        %v2317 = vshrl.u32 %v2316, 7
        %v2318 = vsub.s32 %v2315, %v2317
        %v2319 = vrot.slane %v2305, %v2318
        %v2320 = vcombine.high %v2312, %v2312
        %v2321 = vcombine.high %v2319, %v2319
        %v2323 = vunpack.c.l.s4 1966171168
        %v2324 = vunpack.c.0.s8 %v2323
        %v2325 = vlaneseq
        %v2326 = vshrl.u32 %v2325, 7
        %v2327 = vsub.s32 %v2324, %v2326
        %v2328 = vrot.slane %v2312, %v2327
        %v2330 = vunpack.c.l.s4 1966171168
        %v2331 = vunpack.c.0.s8 %v2330
        %v2332 = vlaneseq
        %v2333 = vshrl.u32 %v2332, 7
        %v2334 = vsub.s32 %v2331, %v2333
        %v2335 = vrot.slane %v2319, %v2334
        %v2337 = vunpack.c.l.s4 1966171168
        %v2338 = vunpack.c.0.s8 %v2337
        %v2339 = vlaneseq
        %v2340 = vshrl.u32 %v2339, 7
        %v2341 = vsub.s32 %v2338, %v2340
        %v2342 = vrot.slane %v2320, %v2341
        %v2344 = vunpack.c.l.s4 1966171168
        %v2345 = vunpack.c.0.s8 %v2344
        %v2346 = vlaneseq
        %v2347 = vshrl.u32 %v2346, 7
        %v2348 = vsub.s32 %v2345, %v2347
        %v2349 = vrot.slane %v2321, %v2348
        %v2350 = vcombine.high %v2328, %v2328
        %v2351 = vcombine.high %v2335, %v2335
        %v2352 = vcombine.high %v2342, %v2342
        %v2353 = vcombine.high %v2349, %v2349
        %v2354 = vcombine.high %v2034, %v2034
        %v2356 = vunpack.c.l.s4 1966171168
        %v2357 = vunpack.c.0.s8 %v2356
        %v2358 = vlaneseq
        %v2359 = vshrl.u32 %v2358, 7
        %v2360 = vsub.s32 %v2357, %v2359
        %v2361 = vrot.slane %v2034, %v2360
        %v2363 = vunpack.c.l.s4 1966171168
        %v2364 = vunpack.c.0.s8 %v2363
        %v2365 = vlaneseq
        %v2366 = vshrl.u32 %v2365, 7
        %v2367 = vsub.s32 %v2364, %v2366
        %v2368 = vrot.slane %v2354, %v2367
        %v2369 = vcombine.high %v2361, %v2361
        %v2370 = vcombine.high %v2368, %v2368
        %v2372 = vunpack.c.l.s4 1966171168
        %v2373 = vunpack.c.0.s8 %v2372
        %v2374 = vlaneseq
        %v2375 = vshrl.u32 %v2374, 7
        %v2376 = vsub.s32 %v2373, %v2375
        %v2377 = vrot.slane %v2361, %v2376
        %v2379 = vunpack.c.l.s4 1966171168
        %v2380 = vunpack.c.0.s8 %v2379
        %v2381 = vlaneseq
        %v2382 = vshrl.u32 %v2381, 7
        %v2383 = vsub.s32 %v2380, %v2382
        %v2384 = vrot.slane %v2368, %v2383
        %v2386 = vunpack.c.l.s4 1966171168
        %v2387 = vunpack.c.0.s8 %v2386
        %v2388 = vlaneseq
        %v2389 = vshrl.u32 %v2388, 7
        %v2390 = vsub.s32 %v2387, %v2389
        %v2391 = vrot.slane %v2369, %v2390
        %v2393 = vunpack.c.l.s4 1966171168
        %v2394 = vunpack.c.0.s8 %v2393
        %v2395 = vlaneseq
        %v2396 = vshrl.u32 %v2395, 7
        %v2397 = vsub.s32 %v2394, %v2396
        %v2398 = vrot.slane %v2370, %v2397
        %v2399 = vcombine.high %v2377, %v2377
        %v2400 = vcombine.high %v2384, %v2384
        %v2401 = vcombine.high %v2391, %v2391
        %v2402 = vcombine.high %v2398, %v2398
        %v2403 = vcombine.high %v2035, %v2035
        %v2405 = vunpack.c.l.s4 1966171168
        %v2406 = vunpack.c.0.s8 %v2405
        %v2407 = vlaneseq
        %v2408 = vshrl.u32 %v2407, 7
        %v2409 = vsub.s32 %v2406, %v2408
        %v2410 = vrot.slane %v2035, %v2409
        %v2412 = vunpack.c.l.s4 1966171168
        %v2413 = vunpack.c.0.s8 %v2412
        %v2414 = vlaneseq
        %v2415 = vshrl.u32 %v2414, 7
        %v2416 = vsub.s32 %v2413, %v2415
        %v2417 = vrot.slane %v2403, %v2416
        %v2418 = vcombine.high %v2410, %v2410
        %v2419 = vcombine.high %v2417, %v2417
        %v2421 = vunpack.c.l.s4 1966171168
        %v2422 = vunpack.c.0.s8 %v2421
        %v2423 = vlaneseq
        %v2424 = vshrl.u32 %v2423, 7
        %v2425 = vsub.s32 %v2422, %v2424
        %v2426 = vrot.slane %v2410, %v2425
        %v2428 = vunpack.c.l.s4 1966171168
        %v2429 = vunpack.c.0.s8 %v2428
        %v2430 = vlaneseq
        %v2431 = vshrl.u32 %v2430, 7
        %v2432 = vsub.s32 %v2429, %v2431
        %v2433 = vrot.slane %v2417, %v2432
        %v2435 = vunpack.c.l.s4 1966171168
        %v2436 = vunpack.c.0.s8 %v2435
        %v2437 = vlaneseq
        %v2438 = vshrl.u32 %v2437, 7
        %v2439 = vsub.s32 %v2436, %v2438
        %v2440 = vrot.slane %v2418, %v2439
        %v2442 = vunpack.c.l.s4 1966171168
        %v2443 = vunpack.c.0.s8 %v2442
        %v2444 = vlaneseq
        %v2445 = vshrl.u32 %v2444, 7
        %v2446 = vsub.s32 %v2443, %v2445
        %v2447 = vrot.slane %v2419, %v2446
        %v2448 = vcombine.high %v2426, %v2426
        %v2449 = vcombine.high %v2433, %v2433
        %v2450 = vcombine.high %v2440, %v2440
        %v2451 = vcombine.high %v2447, %v2447
        %v2452 = vcombine.high %v2036, %v2036
        %v2454 = vunpack.c.l.s4 1966171168
        %v2455 = vunpack.c.0.s8 %v2454
        %v2456 = vlaneseq
        %v2457 = vshrl.u32 %v2456, 7
        %v2458 = vsub.s32 %v2455, %v2457
        %v2459 = vrot.slane %v2036, %v2458
        %v2461 = vunpack.c.l.s4 1966171168
        %v2462 = vunpack.c.0.s8 %v2461
        %v2463 = vlaneseq
        %v2464 = vshrl.u32 %v2463, 7
        %v2465 = vsub.s32 %v2462, %v2464
        %v2466 = vrot.slane %v2452, %v2465
        %v2467 = vcombine.high %v2459, %v2459
        %v2468 = vcombine.high %v2466, %v2466
        %v2470 = vunpack.c.l.s4 1966171168
        %v2471 = vunpack.c.0.s8 %v2470
        %v2472 = vlaneseq
        %v2473 = vshrl.u32 %v2472, 7
        %v2474 = vsub.s32 %v2471, %v2473
        %v2475 = vrot.slane %v2459, %v2474
        %v2477 = vunpack.c.l.s4 1966171168
        %v2478 = vunpack.c.0.s8 %v2477
        %v2479 = vlaneseq
        %v2480 = vshrl.u32 %v2479, 7
        %v2481 = vsub.s32 %v2478, %v2480
        %v2482 = vrot.slane %v2466, %v2481
        %v2484 = vunpack.c.l.s4 1966171168
        %v2485 = vunpack.c.0.s8 %v2484
        %v2486 = vlaneseq
        %v2487 = vshrl.u32 %v2486, 7
        %v2488 = vsub.s32 %v2485, %v2487
        %v2489 = vrot.slane %v2467, %v2488
        %v2491 = vunpack.c.l.s4 1966171168
        %v2492 = vunpack.c.0.s8 %v2491
        %v2493 = vlaneseq
        %v2494 = vshrl.u32 %v2493, 7
        %v2495 = vsub.s32 %v2492, %v2494
        %v2496 = vrot.slane %v2468, %v2495
        %v2497 = vcombine.high %v2475, %v2475
        %v2498 = vcombine.high %v2482, %v2482
        %v2499 = vcombine.high %v2489, %v2489
        %v2500 = vcombine.high %v2496, %v2496
        %v2501 = vcombine.high %v2037, %v2037
        %v2503 = vunpack.c.l.s4 1966171168
        %v2504 = vunpack.c.0.s8 %v2503
        %v2505 = vlaneseq
        %v2506 = vshrl.u32 %v2505, 7
        %v2507 = vsub.s32 %v2504, %v2506
        %v2508 = vrot.slane %v2037, %v2507
        %v2510 = vunpack.c.l.s4 1966171168
        %v2511 = vunpack.c.0.s8 %v2510
        %v2512 = vlaneseq
        %v2513 = vshrl.u32 %v2512, 7
        %v2514 = vsub.s32 %v2511, %v2513
        %v2515 = vrot.slane %v2501, %v2514
        %v2516 = vcombine.high %v2508, %v2508
        %v2517 = vcombine.high %v2515, %v2515
        %v2519 = vunpack.c.l.s4 1966171168
        %v2520 = vunpack.c.0.s8 %v2519
        %v2521 = vlaneseq
        %v2522 = vshrl.u32 %v2521, 7
        %v2523 = vsub.s32 %v2520, %v2522
        %v2524 = vrot.slane %v2508, %v2523
        %v2526 = vunpack.c.l.s4 1966171168
        %v2527 = vunpack.c.0.s8 %v2526
        %v2528 = vlaneseq
        %v2529 = vshrl.u32 %v2528, 7
        %v2530 = vsub.s32 %v2527, %v2529
        %v2531 = vrot.slane %v2515, %v2530
        %v2533 = vunpack.c.l.s4 1966171168
        %v2534 = vunpack.c.0.s8 %v2533
        %v2535 = vlaneseq
        %v2536 = vshrl.u32 %v2535, 7
        %v2537 = vsub.s32 %v2534, %v2536
        %v2538 = vrot.slane %v2516, %v2537
        %v2540 = vunpack.c.l.s4 1966171168
        %v2541 = vunpack.c.0.s8 %v2540
        %v2542 = vlaneseq
        %v2543 = vshrl.u32 %v2542, 7
        %v2544 = vsub.s32 %v2541, %v2543
        %v2545 = vrot.slane %v2517, %v2544
        %v2546 = vcombine.high %v2524, %v2524
        %v2547 = vcombine.high %v2531, %v2531
        %v2548 = vcombine.high %v2538, %v2538
        %v2549 = vcombine.high %v2545, %v2545
        %v2550 = vcombine.high %v2038, %v2038
        %v2552 = vunpack.c.l.s4 1966171168
        %v2553 = vunpack.c.0.s8 %v2552
        %v2554 = vlaneseq
        %v2555 = vshrl.u32 %v2554, 7
        %v2556 = vsub.s32 %v2553, %v2555
        %v2557 = vrot.slane %v2038, %v2556
        %v2559 = vunpack.c.l.s4 1966171168
        %v2560 = vunpack.c.0.s8 %v2559
        %v2561 = vlaneseq
        %v2562 = vshrl.u32 %v2561, 7
        %v2563 = vsub.s32 %v2560, %v2562
        %v2564 = vrot.slane %v2550, %v2563
        %v2565 = vcombine.high %v2557, %v2557
        %v2566 = vcombine.high %v2564, %v2564
        %v2568 = vunpack.c.l.s4 1966171168
        %v2569 = vunpack.c.0.s8 %v2568
        %v2570 = vlaneseq
        %v2571 = vshrl.u32 %v2570, 7
        %v2572 = vsub.s32 %v2569, %v2571
        %v2573 = vrot.slane %v2557, %v2572
        %v2575 = vunpack.c.l.s4 1966171168
        %v2576 = vunpack.c.0.s8 %v2575
        %v2577 = vlaneseq
        %v2578 = vshrl.u32 %v2577, 7
        %v2579 = vsub.s32 %v2576, %v2578
        %v2580 = vrot.slane %v2564, %v2579
        %v2582 = vunpack.c.l.s4 1966171168
        %v2583 = vunpack.c.0.s8 %v2582
        %v2584 = vlaneseq
        %v2585 = vshrl.u32 %v2584, 7
        %v2586 = vsub.s32 %v2583, %v2585
        %v2587 = vrot.slane %v2565, %v2586
        %v2589 = vunpack.c.l.s4 1966171168
        %v2590 = vunpack.c.0.s8 %v2589
        %v2591 = vlaneseq
        %v2592 = vshrl.u32 %v2591, 7
        %v2593 = vsub.s32 %v2590, %v2592
        %v2594 = vrot.slane %v2566, %v2593
        %v2595 = vcombine.high %v2573, %v2573
        %v2596 = vcombine.high %v2580, %v2580
        %v2597 = vcombine.high %v2587, %v2587
        %v2598 = vcombine.high %v2594, %v2594
        %v2599 = vcombine.high %v2039, %v2039
        %v2601 = vunpack.c.l.s4 1966171168
        %v2602 = vunpack.c.0.s8 %v2601
        %v2603 = vlaneseq
        %v2604 = vshrl.u32 %v2603, 7
        %v2605 = vsub.s32 %v2602, %v2604
        %v2606 = vrot.slane %v2039, %v2605
        %v2608 = vunpack.c.l.s4 1966171168
        %v2609 = vunpack.c.0.s8 %v2608
        %v2610 = vlaneseq
        %v2611 = vshrl.u32 %v2610, 7
        %v2612 = vsub.s32 %v2609, %v2611
        %v2613 = vrot.slane %v2599, %v2612
        %v2614 = vcombine.high %v2606, %v2606
        %v2615 = vcombine.high %v2613, %v2613
        %v2617 = vunpack.c.l.s4 1966171168
        %v2618 = vunpack.c.0.s8 %v2617
        %v2619 = vlaneseq
        %v2620 = vshrl.u32 %v2619, 7
        %v2621 = vsub.s32 %v2618, %v2620
        %v2622 = vrot.slane %v2606, %v2621
        %v2624 = vunpack.c.l.s4 1966171168
        %v2625 = vunpack.c.0.s8 %v2624
        %v2626 = vlaneseq
        %v2627 = vshrl.u32 %v2626, 7
        %v2628 = vsub.s32 %v2625, %v2627
        %v2629 = vrot.slane %v2613, %v2628
        %v2631 = vunpack.c.l.s4 1966171168
        %v2632 = vunpack.c.0.s8 %v2631
        %v2633 = vlaneseq
        %v2634 = vshrl.u32 %v2633, 7
        %v2635 = vsub.s32 %v2632, %v2634
        %v2636 = vrot.slane %v2614, %v2635
        %v2638 = vunpack.c.l.s4 1966171168
        %v2639 = vunpack.c.0.s8 %v2638
        %v2640 = vlaneseq
        %v2641 = vshrl.u32 %v2640, 7
        %v2642 = vsub.s32 %v2639, %v2641
        %v2643 = vrot.slane %v2615, %v2642
        %v2644 = vcombine.high %v2622, %v2622
        %v2645 = vcombine.high %v2629, %v2629
        %v2646 = vcombine.high %v2636, %v2636
        %v2647 = vcombine.high %v2643, %v2643
        %v2648 = vcombine.high %v2040, %v2040
        %v2650 = vunpack.c.l.s4 1966171168
        %v2651 = vunpack.c.0.s8 %v2650
        %v2652 = vlaneseq
        %v2653 = vshrl.u32 %v2652, 7
        %v2654 = vsub.s32 %v2651, %v2653
        %v2655 = vrot.slane %v2040, %v2654
        %v2657 = vunpack.c.l.s4 1966171168
        %v2658 = vunpack.c.0.s8 %v2657
        %v2659 = vlaneseq
        %v2660 = vshrl.u32 %v2659, 7
        %v2661 = vsub.s32 %v2658, %v2660
        %v2662 = vrot.slane %v2648, %v2661
        %v2663 = vcombine.high %v2655, %v2655
        %v2664 = vcombine.high %v2662, %v2662
        %v2666 = vunpack.c.l.s4 1966171168
        %v2667 = vunpack.c.0.s8 %v2666
        %v2668 = vlaneseq
        %v2669 = vshrl.u32 %v2668, 7
        %v2670 = vsub.s32 %v2667, %v2669
        %v2671 = vrot.slane %v2655, %v2670
        %v2673 = vunpack.c.l.s4 1966171168
        %v2674 = vunpack.c.0.s8 %v2673
        %v2675 = vlaneseq
        %v2676 = vshrl.u32 %v2675, 7
        %v2677 = vsub.s32 %v2674, %v2676
        %v2678 = vrot.slane %v2662, %v2677
        %v2680 = vunpack.c.l.s4 1966171168
        %v2681 = vunpack.c.0.s8 %v2680
        %v2682 = vlaneseq
        %v2683 = vshrl.u32 %v2682, 7
        %v2684 = vsub.s32 %v2681, %v2683
        %v2685 = vrot.slane %v2663, %v2684
        %v2687 = vunpack.c.l.s4 1966171168
        %v2688 = vunpack.c.0.s8 %v2687
        %v2689 = vlaneseq
        %v2690 = vshrl.u32 %v2689, 7
        %v2691 = vsub.s32 %v2688, %v2690
        %v2692 = vrot.slane %v2664, %v2691
        %v2693 = vcombine.high %v2671, %v2671
        %v2694 = vcombine.high %v2678, %v2678
        %v2695 = vcombine.high %v2685, %v2685
        %v2696 = vcombine.high %v2692, %v2692
        %v2697 = vcombine.high %v2041, %v2041
        %v2699 = vunpack.c.l.s4 1966171168
        %v2700 = vunpack.c.0.s8 %v2699
        %v2701 = vlaneseq
        %v2702 = vshrl.u32 %v2701, 7
        %v2703 = vsub.s32 %v2700, %v2702
        %v2704 = vrot.slane %v2041, %v2703
        %v2706 = vunpack.c.l.s4 1966171168
        %v2707 = vunpack.c.0.s8 %v2706
        %v2708 = vlaneseq
        %v2709 = vshrl.u32 %v2708, 7
        %v2710 = vsub.s32 %v2707, %v2709
        %v2711 = vrot.slane %v2697, %v2710
        %v2712 = vcombine.high %v2704, %v2704
        %v2713 = vcombine.high %v2711, %v2711
        %v2715 = vunpack.c.l.s4 1966171168
        %v2716 = vunpack.c.0.s8 %v2715
        %v2717 = vlaneseq
        %v2718 = vshrl.u32 %v2717, 7
        %v2719 = vsub.s32 %v2716, %v2718
        %v2720 = vrot.slane %v2704, %v2719
        %v2722 = vunpack.c.l.s4 1966171168
        %v2723 = vunpack.c.0.s8 %v2722
        %v2724 = vlaneseq
        %v2725 = vshrl.u32 %v2724, 7
        %v2726 = vsub.s32 %v2723, %v2725
        %v2727 = vrot.slane %v2711, %v2726
        %v2729 = vunpack.c.l.s4 1966171168
        %v2730 = vunpack.c.0.s8 %v2729
        %v2731 = vlaneseq
        %v2732 = vshrl.u32 %v2731, 7
        %v2733 = vsub.s32 %v2730, %v2732
        %v2734 = vrot.slane %v2712, %v2733
        %v2736 = vunpack.c.l.s4 1966171168
        %v2737 = vunpack.c.0.s8 %v2736
        %v2738 = vlaneseq
        %v2739 = vshrl.u32 %v2738, 7
        %v2740 = vsub.s32 %v2737, %v2739
        %v2741 = vrot.slane %v2713, %v2740
        %v2742 = vcombine.high %v2720, %v2720
        %v2743 = vcombine.high %v2727, %v2727
        %v2744 = vcombine.high %v2734, %v2734
        %v2745 = vcombine.high %v2741, %v2741
        %v2746 = vcombine.high %v2042, %v2042
        %v2748 = vunpack.c.l.s4 1966171168
        %v2749 = vunpack.c.0.s8 %v2748
        %v2750 = vlaneseq
        %v2751 = vshrl.u32 %v2750, 7
        %v2752 = vsub.s32 %v2749, %v2751
        %v2753 = vrot.slane %v2042, %v2752
        %v2755 = vunpack.c.l.s4 1966171168
        %v2756 = vunpack.c.0.s8 %v2755
        %v2757 = vlaneseq
        %v2758 = vshrl.u32 %v2757, 7
        %v2759 = vsub.s32 %v2756, %v2758
        %v2760 = vrot.slane %v2746, %v2759
        %v2761 = vcombine.high %v2753, %v2753
        %v2762 = vcombine.high %v2760, %v2760
        %v2764 = vunpack.c.l.s4 1966171168
        %v2765 = vunpack.c.0.s8 %v2764
        %v2766 = vlaneseq
        %v2767 = vshrl.u32 %v2766, 7
        %v2768 = vsub.s32 %v2765, %v2767
        %v2769 = vrot.slane %v2753, %v2768
        %v2771 = vunpack.c.l.s4 1966171168
        %v2772 = vunpack.c.0.s8 %v2771
        %v2773 = vlaneseq
        %v2774 = vshrl.u32 %v2773, 7
        %v2775 = vsub.s32 %v2772, %v2774
        %v2776 = vrot.slane %v2760, %v2775
        %v2778 = vunpack.c.l.s4 1966171168
        %v2779 = vunpack.c.0.s8 %v2778
        %v2780 = vlaneseq
        %v2781 = vshrl.u32 %v2780, 7
        %v2782 = vsub.s32 %v2779, %v2781
        %v2783 = vrot.slane %v2761, %v2782
        %v2785 = vunpack.c.l.s4 1966171168
        %v2786 = vunpack.c.0.s8 %v2785
        %v2787 = vlaneseq
        %v2788 = vshrl.u32 %v2787, 7
        %v2789 = vsub.s32 %v2786, %v2788
        %v2790 = vrot.slane %v2762, %v2789
        %v2791 = vcombine.high %v2769, %v2769
        %v2792 = vcombine.high %v2776, %v2776
        %v2793 = vcombine.high %v2783, %v2783
        %v2794 = vcombine.high %v2790, %v2790
        %v2795 = vcombine.high %v2043, %v2043
        %v2797 = vunpack.c.l.s4 1966171168
        %v2798 = vunpack.c.0.s8 %v2797
        %v2799 = vlaneseq
        %v2800 = vshrl.u32 %v2799, 7
        %v2801 = vsub.s32 %v2798, %v2800
        %v2802 = vrot.slane %v2043, %v2801
        %v2804 = vunpack.c.l.s4 1966171168
        %v2805 = vunpack.c.0.s8 %v2804
        %v2806 = vlaneseq
        %v2807 = vshrl.u32 %v2806, 7
        %v2808 = vsub.s32 %v2805, %v2807
        %v2809 = vrot.slane %v2795, %v2808
        %v2810 = vcombine.high %v2802, %v2802
        %v2811 = vcombine.high %v2809, %v2809
        %v2813 = vunpack.c.l.s4 1966171168
        %v2814 = vunpack.c.0.s8 %v2813
        %v2815 = vlaneseq
        %v2816 = vshrl.u32 %v2815, 7
        %v2817 = vsub.s32 %v2814, %v2816
        %v2818 = vrot.slane %v2802, %v2817
        %v2820 = vunpack.c.l.s4 1966171168
        %v2821 = vunpack.c.0.s8 %v2820
        %v2822 = vlaneseq
        %v2823 = vshrl.u32 %v2822, 7
        %v2824 = vsub.s32 %v2821, %v2823
        %v2825 = vrot.slane %v2809, %v2824
        %v2827 = vunpack.c.l.s4 1966171168
        %v2828 = vunpack.c.0.s8 %v2827
        %v2829 = vlaneseq
        %v2830 = vshrl.u32 %v2829, 7
        %v2831 = vsub.s32 %v2828, %v2830
        %v2832 = vrot.slane %v2810, %v2831
        %v2834 = vunpack.c.l.s4 1966171168
        %v2835 = vunpack.c.0.s8 %v2834
        %v2836 = vlaneseq
        %v2837 = vshrl.u32 %v2836, 7
        %v2838 = vsub.s32 %v2835, %v2837
        %v2839 = vrot.slane %v2811, %v2838
        %v2840 = vcombine.high %v2818, %v2818
        %v2841 = vcombine.high %v2825, %v2825
        %v2842 = vcombine.high %v2832, %v2832
        %v2843 = vcombine.high %v2839, %v2839
        %vm2844 = vcmask 516096
        %v2847 = vsel %vm2844, %v2083, 4286644096
        %v2849 = vunpack.i.l.bf16 %v2847
        %v2850 = vunpack.i.h.bf16 %v2847
        %v2851 = vmax.f32 %v2849, %v2850
        %v2852 = vrot.slane %v2851, 4
        %v2853 = vmax.f32 %v2851, %v2852
        %v2854 = vrot.slane %v2853, 2
        %v2855 = vmax.f32 %v2853, %v2854
        %v2856 = vrot.slane %v2855, 1
        %v2857 = vmax.f32 %v2855, %v2856
        %v2858 = vpack.i.bf16 %v2857, %v2857
        %v2860 = vsel %vm2844, %v2097, 4286644096
        %v2862 = vunpack.i.l.bf16 %v2860
        %v2863 = vunpack.i.h.bf16 %v2860
        %v2864 = vmax.f32 %v2862, %v2863
        %v2865 = vrot.slane %v2864, 4
        %v2866 = vmax.f32 %v2864, %v2865
        %v2867 = vrot.slane %v2866, 2
        %v2868 = vmax.f32 %v2866, %v2867
        %v2869 = vrot.slane %v2868, 1
        %v2870 = vmax.f32 %v2868, %v2869
        %v2871 = vpack.i.bf16 %v2870, %v2870
        %v2873 = vsel %vm2844, %v2105, 4286644096
        %v2875 = vunpack.i.l.bf16 %v2873
        %v2876 = vunpack.i.h.bf16 %v2873
        %v2877 = vmax.f32 %v2875, %v2876
        %v2878 = vrot.slane %v2877, 4
        %v2879 = vmax.f32 %v2877, %v2878
        %v2880 = vrot.slane %v2879, 2
        %v2881 = vmax.f32 %v2879, %v2880
        %v2882 = vrot.slane %v2881, 1
        %v2883 = vmax.f32 %v2881, %v2882
        %v2884 = vpack.i.bf16 %v2883, %v2883
        %v2886 = vsel %vm2844, %v2107, 4286644096
        %v2888 = vunpack.i.l.bf16 %v2886
        %v2889 = vunpack.i.h.bf16 %v2886
        %v2890 = vmax.f32 %v2888, %v2889
        %v2891 = vrot.slane %v2890, 4
        %v2892 = vmax.f32 %v2890, %v2891
        %v2893 = vrot.slane %v2892, 2
        %v2894 = vmax.f32 %v2892, %v2893
        %v2895 = vrot.slane %v2894, 1
        %v2896 = vmax.f32 %v2894, %v2895
        %v2897 = vpack.i.bf16 %v2896, %v2896
        %v2899 = vsel %vm2844, %v2090, 4286644096
        %v2901 = vunpack.i.l.bf16 %v2899
        %v2902 = vunpack.i.h.bf16 %v2899
        %v2903 = vmax.f32 %v2901, %v2902
        %v2904 = vrot.slane %v2903, 4
        %v2905 = vmax.f32 %v2903, %v2904
        %v2906 = vrot.slane %v2905, 2
        %v2907 = vmax.f32 %v2905, %v2906
        %v2908 = vrot.slane %v2907, 1
        %v2909 = vmax.f32 %v2907, %v2908
        %v2910 = vpack.i.bf16 %v2909, %v2909
        %v2912 = vsel %vm2844, %v2104, 4286644096
        %v2914 = vunpack.i.l.bf16 %v2912
        %v2915 = vunpack.i.h.bf16 %v2912
        %v2916 = vmax.f32 %v2914, %v2915
        %v2917 = vrot.slane %v2916, 4
        %v2918 = vmax.f32 %v2916, %v2917
        %v2919 = vrot.slane %v2918, 2
        %v2920 = vmax.f32 %v2918, %v2919
        %v2921 = vrot.slane %v2920, 1
        %v2922 = vmax.f32 %v2920, %v2921
        %v2923 = vpack.i.bf16 %v2922, %v2922
        %v2925 = vsel %vm2844, %v2106, 4286644096
        %v2927 = vunpack.i.l.bf16 %v2925
        %v2928 = vunpack.i.h.bf16 %v2925
        %v2929 = vmax.f32 %v2927, %v2928
        %v2930 = vrot.slane %v2929, 4
        %v2931 = vmax.f32 %v2929, %v2930
        %v2932 = vrot.slane %v2931, 2
        %v2933 = vmax.f32 %v2931, %v2932
        %v2934 = vrot.slane %v2933, 1
        %v2935 = vmax.f32 %v2933, %v2934
        %v2936 = vpack.i.bf16 %v2935, %v2935
        %v2938 = vsel %vm2844, %v2108, 4286644096
        %v2940 = vunpack.i.l.bf16 %v2938
        %v2941 = vunpack.i.h.bf16 %v2938
        %v2942 = vmax.f32 %v2940, %v2941
        %v2943 = vrot.slane %v2942, 4
        %v2944 = vmax.f32 %v2942, %v2943
        %v2945 = vrot.slane %v2944, 2
        %v2946 = vmax.f32 %v2944, %v2945
        %v2947 = vrot.slane %v2946, 1
        %v2948 = vmax.f32 %v2946, %v2947
        %v2949 = vpack.i.bf16 %v2948, %v2948
        %v2951 = vsel %vm2844, %v2132, 4286644096
        %v2953 = vunpack.i.l.bf16 %v2951
        %v2954 = vunpack.i.h.bf16 %v2951
        %v2955 = vmax.f32 %v2953, %v2954
        %v2956 = vrot.slane %v2955, 4
        %v2957 = vmax.f32 %v2955, %v2956
        %v2958 = vrot.slane %v2957, 2
        %v2959 = vmax.f32 %v2957, %v2958
        %v2960 = vrot.slane %v2959, 1
        %v2961 = vmax.f32 %v2959, %v2960
        %v2962 = vpack.i.bf16 %v2961, %v2961
        %v2964 = vsel %vm2844, %v2146, 4286644096
        %v2966 = vunpack.i.l.bf16 %v2964
        %v2967 = vunpack.i.h.bf16 %v2964
        %v2968 = vmax.f32 %v2966, %v2967
        %v2969 = vrot.slane %v2968, 4
        %v2970 = vmax.f32 %v2968, %v2969
        %v2971 = vrot.slane %v2970, 2
        %v2972 = vmax.f32 %v2970, %v2971
        %v2973 = vrot.slane %v2972, 1
        %v2974 = vmax.f32 %v2972, %v2973
        %v2975 = vpack.i.bf16 %v2974, %v2974
        %v2977 = vsel %vm2844, %v2154, 4286644096
        %v2979 = vunpack.i.l.bf16 %v2977
        %v2980 = vunpack.i.h.bf16 %v2977
        %v2981 = vmax.f32 %v2979, %v2980
        %v2982 = vrot.slane %v2981, 4
        %v2983 = vmax.f32 %v2981, %v2982
        %v2984 = vrot.slane %v2983, 2
        %v2985 = vmax.f32 %v2983, %v2984
        %v2986 = vrot.slane %v2985, 1
        %v2987 = vmax.f32 %v2985, %v2986
        %v2988 = vpack.i.bf16 %v2987, %v2987
        %v2990 = vsel %vm2844, %v2156, 4286644096
        %v2992 = vunpack.i.l.bf16 %v2990
        %v2993 = vunpack.i.h.bf16 %v2990
        %v2994 = vmax.f32 %v2992, %v2993
        %v2995 = vrot.slane %v2994, 4
        %v2996 = vmax.f32 %v2994, %v2995
        %v2997 = vrot.slane %v2996, 2
        %v2998 = vmax.f32 %v2996, %v2997
        %v2999 = vrot.slane %v2998, 1
        %v3000 = vmax.f32 %v2998, %v2999
        %v3001 = vpack.i.bf16 %v3000, %v3000
        %v3003 = vsel %vm2844, %v2139, 4286644096
        %v3005 = vunpack.i.l.bf16 %v3003
        %v3006 = vunpack.i.h.bf16 %v3003
        %v3007 = vmax.f32 %v3005, %v3006
        %v3008 = vrot.slane %v3007, 4
        %v3009 = vmax.f32 %v3007, %v3008
        %v3010 = vrot.slane %v3009, 2
        %v3011 = vmax.f32 %v3009, %v3010
        %v3012 = vrot.slane %v3011, 1
        %v3013 = vmax.f32 %v3011, %v3012
        %v3014 = vpack.i.bf16 %v3013, %v3013
        %v3016 = vsel %vm2844, %v2153, 4286644096
        %v3018 = vunpack.i.l.bf16 %v3016
        %v3019 = vunpack.i.h.bf16 %v3016
        %v3020 = vmax.f32 %v3018, %v3019
        %v3021 = vrot.slane %v3020, 4
        %v3022 = vmax.f32 %v3020, %v3021
        %v3023 = vrot.slane %v3022, 2
        %v3024 = vmax.f32 %v3022, %v3023
        %v3025 = vrot.slane %v3024, 1
        %v3026 = vmax.f32 %v3024, %v3025
        %v3027 = vpack.i.bf16 %v3026, %v3026
        %v3029 = vsel %vm2844, %v2155, 4286644096
        %v3031 = vunpack.i.l.bf16 %v3029
        %v3032 = vunpack.i.h.bf16 %v3029
        %v3033 = vmax.f32 %v3031, %v3032
        %v3034 = vrot.slane %v3033, 4
        %v3035 = vmax.f32 %v3033, %v3034
        %v3036 = vrot.slane %v3035, 2
        %v3037 = vmax.f32 %v3035, %v3036
        %v3038 = vrot.slane %v3037, 1
        %v3039 = vmax.f32 %v3037, %v3038
        %v3040 = vpack.i.bf16 %v3039, %v3039
        %v3042 = vsel %vm2844, %v2157, 4286644096
        %v3044 = vunpack.i.l.bf16 %v3042
        %v3045 = vunpack.i.h.bf16 %v3042
        %v3046 = vmax.f32 %v3044, %v3045
        %v3047 = vrot.slane %v3046, 4
        %v3048 = vmax.f32 %v3046, %v3047
        %v3049 = vrot.slane %v3048, 2
        %v3050 = vmax.f32 %v3048, %v3049
        %v3051 = vrot.slane %v3050, 1
        %v3052 = vmax.f32 %v3050, %v3051
        %v3053 = vpack.i.bf16 %v3052, %v3052
        %v3055 = vsel %vm2844, %v2181, 4286644096
        %v3057 = vunpack.i.l.bf16 %v3055
        %v3058 = vunpack.i.h.bf16 %v3055
        %v3059 = vmax.f32 %v3057, %v3058
        %v3060 = vrot.slane %v3059, 4
        %v3061 = vmax.f32 %v3059, %v3060
        %v3062 = vrot.slane %v3061, 2
        %v3063 = vmax.f32 %v3061, %v3062
        %v3064 = vrot.slane %v3063, 1
        %v3065 = vmax.f32 %v3063, %v3064
        %v3066 = vpack.i.bf16 %v3065, %v3065
        %v3068 = vsel %vm2844, %v2195, 4286644096
        %v3070 = vunpack.i.l.bf16 %v3068
        %v3071 = vunpack.i.h.bf16 %v3068
        %v3072 = vmax.f32 %v3070, %v3071
        %v3073 = vrot.slane %v3072, 4
        %v3074 = vmax.f32 %v3072, %v3073
        %v3075 = vrot.slane %v3074, 2
        %v3076 = vmax.f32 %v3074, %v3075
        %v3077 = vrot.slane %v3076, 1
        %v3078 = vmax.f32 %v3076, %v3077
        %v3079 = vpack.i.bf16 %v3078, %v3078
        %v3081 = vsel %vm2844, %v2203, 4286644096
        %v3083 = vunpack.i.l.bf16 %v3081
        %v3084 = vunpack.i.h.bf16 %v3081
        %v3085 = vmax.f32 %v3083, %v3084
        %v3086 = vrot.slane %v3085, 4
        %v3087 = vmax.f32 %v3085, %v3086
        %v3088 = vrot.slane %v3087, 2
        %v3089 = vmax.f32 %v3087, %v3088
        %v3090 = vrot.slane %v3089, 1
        %v3091 = vmax.f32 %v3089, %v3090
        %v3092 = vpack.i.bf16 %v3091, %v3091
        %v3094 = vsel %vm2844, %v2205, 4286644096
        %v3096 = vunpack.i.l.bf16 %v3094
        %v3097 = vunpack.i.h.bf16 %v3094
        %v3098 = vmax.f32 %v3096, %v3097
        %v3099 = vrot.slane %v3098, 4
        %v3100 = vmax.f32 %v3098, %v3099
        %v3101 = vrot.slane %v3100, 2
        %v3102 = vmax.f32 %v3100, %v3101
        %v3103 = vrot.slane %v3102, 1
        %v3104 = vmax.f32 %v3102, %v3103
        %v3105 = vpack.i.bf16 %v3104, %v3104
        %v3107 = vsel %vm2844, %v2188, 4286644096
        %v3109 = vunpack.i.l.bf16 %v3107
        %v3110 = vunpack.i.h.bf16 %v3107
        %v3111 = vmax.f32 %v3109, %v3110
        %v3112 = vrot.slane %v3111, 4
        %v3113 = vmax.f32 %v3111, %v3112
        %v3114 = vrot.slane %v3113, 2
        %v3115 = vmax.f32 %v3113, %v3114
        %v3116 = vrot.slane %v3115, 1
        %v3117 = vmax.f32 %v3115, %v3116
        %v3118 = vpack.i.bf16 %v3117, %v3117
        %v3120 = vsel %vm2844, %v2202, 4286644096
        %v3122 = vunpack.i.l.bf16 %v3120
        %v3123 = vunpack.i.h.bf16 %v3120
        %v3124 = vmax.f32 %v3122, %v3123
        %v3125 = vrot.slane %v3124, 4
        %v3126 = vmax.f32 %v3124, %v3125
        %v3127 = vrot.slane %v3126, 2
        %v3128 = vmax.f32 %v3126, %v3127
        %v3129 = vrot.slane %v3128, 1
        %v3130 = vmax.f32 %v3128, %v3129
        %v3131 = vpack.i.bf16 %v3130, %v3130
        %v3133 = vsel %vm2844, %v2204, 4286644096
        %v3135 = vunpack.i.l.bf16 %v3133
        %v3136 = vunpack.i.h.bf16 %v3133
        %v3137 = vmax.f32 %v3135, %v3136
        %v3138 = vrot.slane %v3137, 4
        %v3139 = vmax.f32 %v3137, %v3138
        %v3140 = vrot.slane %v3139, 2
        %v3141 = vmax.f32 %v3139, %v3140
        %v3142 = vrot.slane %v3141, 1
        %v3143 = vmax.f32 %v3141, %v3142
        %v3144 = vpack.i.bf16 %v3143, %v3143
        %v3146 = vsel %vm2844, %v2206, 4286644096
        %v3148 = vunpack.i.l.bf16 %v3146
        %v3149 = vunpack.i.h.bf16 %v3146
        %v3150 = vmax.f32 %v3148, %v3149
        %v3151 = vrot.slane %v3150, 4
        %v3152 = vmax.f32 %v3150, %v3151
        %v3153 = vrot.slane %v3152, 2
        %v3154 = vmax.f32 %v3152, %v3153
        %v3155 = vrot.slane %v3154, 1
        %v3156 = vmax.f32 %v3154, %v3155
        %v3157 = vpack.i.bf16 %v3156, %v3156
        %v3159 = vsel %vm2844, %v2230, 4286644096
        %v3161 = vunpack.i.l.bf16 %v3159
        %v3162 = vunpack.i.h.bf16 %v3159
        %v3163 = vmax.f32 %v3161, %v3162
        %v3164 = vrot.slane %v3163, 4
        %v3165 = vmax.f32 %v3163, %v3164
        %v3166 = vrot.slane %v3165, 2
        %v3167 = vmax.f32 %v3165, %v3166
        %v3168 = vrot.slane %v3167, 1
        %v3169 = vmax.f32 %v3167, %v3168
        %v3170 = vpack.i.bf16 %v3169, %v3169
        %v3172 = vsel %vm2844, %v2244, 4286644096
        %v3174 = vunpack.i.l.bf16 %v3172
        %v3175 = vunpack.i.h.bf16 %v3172
        %v3176 = vmax.f32 %v3174, %v3175
        %v3177 = vrot.slane %v3176, 4
        %v3178 = vmax.f32 %v3176, %v3177
        %v3179 = vrot.slane %v3178, 2
        %v3180 = vmax.f32 %v3178, %v3179
        %v3181 = vrot.slane %v3180, 1
        %v3182 = vmax.f32 %v3180, %v3181
        %v3183 = vpack.i.bf16 %v3182, %v3182
        %v3185 = vsel %vm2844, %v2252, 4286644096
        %v3187 = vunpack.i.l.bf16 %v3185
        %v3188 = vunpack.i.h.bf16 %v3185
        %v3189 = vmax.f32 %v3187, %v3188
        %v3190 = vrot.slane %v3189, 4
        %v3191 = vmax.f32 %v3189, %v3190
        %v3192 = vrot.slane %v3191, 2
        %v3193 = vmax.f32 %v3191, %v3192
        %v3194 = vrot.slane %v3193, 1
        %v3195 = vmax.f32 %v3193, %v3194
        %v3196 = vpack.i.bf16 %v3195, %v3195
        %v3198 = vsel %vm2844, %v2254, 4286644096
        %v3200 = vunpack.i.l.bf16 %v3198
        %v3201 = vunpack.i.h.bf16 %v3198
        %v3202 = vmax.f32 %v3200, %v3201
        %v3203 = vrot.slane %v3202, 4
        %v3204 = vmax.f32 %v3202, %v3203
        %v3205 = vrot.slane %v3204, 2
        %v3206 = vmax.f32 %v3204, %v3205
        %v3207 = vrot.slane %v3206, 1
        %v3208 = vmax.f32 %v3206, %v3207
        %v3209 = vpack.i.bf16 %v3208, %v3208
        %v3211 = vsel %vm2844, %v2237, 4286644096
        %v3213 = vunpack.i.l.bf16 %v3211
        %v3214 = vunpack.i.h.bf16 %v3211
        %v3215 = vmax.f32 %v3213, %v3214
        %v3216 = vrot.slane %v3215, 4
        %v3217 = vmax.f32 %v3215, %v3216
        %v3218 = vrot.slane %v3217, 2
        %v3219 = vmax.f32 %v3217, %v3218
        %v3220 = vrot.slane %v3219, 1
        %v3221 = vmax.f32 %v3219, %v3220
        %v3222 = vpack.i.bf16 %v3221, %v3221
        %v3224 = vsel %vm2844, %v2251, 4286644096
        %v3226 = vunpack.i.l.bf16 %v3224
        %v3227 = vunpack.i.h.bf16 %v3224
        %v3228 = vmax.f32 %v3226, %v3227
        %v3229 = vrot.slane %v3228, 4
        %v3230 = vmax.f32 %v3228, %v3229
        %v3231 = vrot.slane %v3230, 2
        %v3232 = vmax.f32 %v3230, %v3231
        %v3233 = vrot.slane %v3232, 1
        %v3234 = vmax.f32 %v3232, %v3233
        %v3235 = vpack.i.bf16 %v3234, %v3234
        %v3237 = vsel %vm2844, %v2253, 4286644096
        %v3239 = vunpack.i.l.bf16 %v3237
        %v3240 = vunpack.i.h.bf16 %v3237
        %v3241 = vmax.f32 %v3239, %v3240
        %v3242 = vrot.slane %v3241, 4
        %v3243 = vmax.f32 %v3241, %v3242
        %v3244 = vrot.slane %v3243, 2
        %v3245 = vmax.f32 %v3243, %v3244
        %v3246 = vrot.slane %v3245, 1
        %v3247 = vmax.f32 %v3245, %v3246
        %v3248 = vpack.i.bf16 %v3247, %v3247
        %v3250 = vsel %vm2844, %v2255, 4286644096
        %v3252 = vunpack.i.l.bf16 %v3250
        %v3253 = vunpack.i.h.bf16 %v3250
        %v3254 = vmax.f32 %v3252, %v3253
        %v3255 = vrot.slane %v3254, 4
        %v3256 = vmax.f32 %v3254, %v3255
        %v3257 = vrot.slane %v3256, 2
        %v3258 = vmax.f32 %v3256, %v3257
        %v3259 = vrot.slane %v3258, 1
        %v3260 = vmax.f32 %v3258, %v3259
        %v3261 = vpack.i.bf16 %v3260, %v3260
        %v3263 = vsel %vm2844, %v2279, 4286644096
        %v3265 = vunpack.i.l.bf16 %v3263
        %v3266 = vunpack.i.h.bf16 %v3263
        %v3267 = vmax.f32 %v3265, %v3266
        %v3268 = vrot.slane %v3267, 4
        %v3269 = vmax.f32 %v3267, %v3268
        %v3270 = vrot.slane %v3269, 2
        %v3271 = vmax.f32 %v3269, %v3270
        %v3272 = vrot.slane %v3271, 1
        %v3273 = vmax.f32 %v3271, %v3272
        %v3274 = vpack.i.bf16 %v3273, %v3273
        %v3276 = vsel %vm2844, %v2293, 4286644096
        %v3278 = vunpack.i.l.bf16 %v3276
        %v3279 = vunpack.i.h.bf16 %v3276
        %v3280 = vmax.f32 %v3278, %v3279
        %v3281 = vrot.slane %v3280, 4
        %v3282 = vmax.f32 %v3280, %v3281
        %v3283 = vrot.slane %v3282, 2
        %v3284 = vmax.f32 %v3282, %v3283
        %v3285 = vrot.slane %v3284, 1
        %v3286 = vmax.f32 %v3284, %v3285
        %v3287 = vpack.i.bf16 %v3286, %v3286
        %v3289 = vsel %vm2844, %v2301, 4286644096
        %v3291 = vunpack.i.l.bf16 %v3289
        %v3292 = vunpack.i.h.bf16 %v3289
        %v3293 = vmax.f32 %v3291, %v3292
        %v3294 = vrot.slane %v3293, 4
        %v3295 = vmax.f32 %v3293, %v3294
        %v3296 = vrot.slane %v3295, 2
        %v3297 = vmax.f32 %v3295, %v3296
        %v3298 = vrot.slane %v3297, 1
        %v3299 = vmax.f32 %v3297, %v3298
        %v3300 = vpack.i.bf16 %v3299, %v3299
        %v3302 = vsel %vm2844, %v2303, 4286644096
        %v3304 = vunpack.i.l.bf16 %v3302
        %v3305 = vunpack.i.h.bf16 %v3302
        %v3306 = vmax.f32 %v3304, %v3305
        %v3307 = vrot.slane %v3306, 4
        %v3308 = vmax.f32 %v3306, %v3307
        %v3309 = vrot.slane %v3308, 2
        %v3310 = vmax.f32 %v3308, %v3309
        %v3311 = vrot.slane %v3310, 1
        %v3312 = vmax.f32 %v3310, %v3311
        %v3313 = vpack.i.bf16 %v3312, %v3312
        %v3315 = vsel %vm2844, %v2286, 4286644096
        %v3317 = vunpack.i.l.bf16 %v3315
        %v3318 = vunpack.i.h.bf16 %v3315
        %v3319 = vmax.f32 %v3317, %v3318
        %v3320 = vrot.slane %v3319, 4
        %v3321 = vmax.f32 %v3319, %v3320
        %v3322 = vrot.slane %v3321, 2
        %v3323 = vmax.f32 %v3321, %v3322
        %v3324 = vrot.slane %v3323, 1
        %v3325 = vmax.f32 %v3323, %v3324
        %v3326 = vpack.i.bf16 %v3325, %v3325
        %v3328 = vsel %vm2844, %v2300, 4286644096
        %v3330 = vunpack.i.l.bf16 %v3328
        %v3331 = vunpack.i.h.bf16 %v3328
        %v3332 = vmax.f32 %v3330, %v3331
        %v3333 = vrot.slane %v3332, 4
        %v3334 = vmax.f32 %v3332, %v3333
        %v3335 = vrot.slane %v3334, 2
        %v3336 = vmax.f32 %v3334, %v3335
        %v3337 = vrot.slane %v3336, 1
        %v3338 = vmax.f32 %v3336, %v3337
        %v3339 = vpack.i.bf16 %v3338, %v3338
        %v3341 = vsel %vm2844, %v2302, 4286644096
        %v3343 = vunpack.i.l.bf16 %v3341
        %v3344 = vunpack.i.h.bf16 %v3341
        %v3345 = vmax.f32 %v3343, %v3344
        %v3346 = vrot.slane %v3345, 4
        %v3347 = vmax.f32 %v3345, %v3346
        %v3348 = vrot.slane %v3347, 2
        %v3349 = vmax.f32 %v3347, %v3348
        %v3350 = vrot.slane %v3349, 1
        %v3351 = vmax.f32 %v3349, %v3350
        %v3352 = vpack.i.bf16 %v3351, %v3351
        %v3354 = vsel %vm2844, %v2304, 4286644096
        %v3356 = vunpack.i.l.bf16 %v3354
        %v3357 = vunpack.i.h.bf16 %v3354
        %v3358 = vmax.f32 %v3356, %v3357
        %v3359 = vrot.slane %v3358, 4
        %v3360 = vmax.f32 %v3358, %v3359
        %v3361 = vrot.slane %v3360, 2
        %v3362 = vmax.f32 %v3360, %v3361
        %v3363 = vrot.slane %v3362, 1
        %v3364 = vmax.f32 %v3362, %v3363
        %v3365 = vpack.i.bf16 %v3364, %v3364
        %v3367 = vsel %vm2844, %v2328, 4286644096
        %v3369 = vunpack.i.l.bf16 %v3367
        %v3370 = vunpack.i.h.bf16 %v3367
        %v3371 = vmax.f32 %v3369, %v3370
        %v3372 = vrot.slane %v3371, 4
        %v3373 = vmax.f32 %v3371, %v3372
        %v3374 = vrot.slane %v3373, 2
        %v3375 = vmax.f32 %v3373, %v3374
        %v3376 = vrot.slane %v3375, 1
        %v3377 = vmax.f32 %v3375, %v3376
        %v3378 = vpack.i.bf16 %v3377, %v3377
        %v3380 = vsel %vm2844, %v2342, 4286644096
        %v3382 = vunpack.i.l.bf16 %v3380
        %v3383 = vunpack.i.h.bf16 %v3380
        %v3384 = vmax.f32 %v3382, %v3383
        %v3385 = vrot.slane %v3384, 4
        %v3386 = vmax.f32 %v3384, %v3385
        %v3387 = vrot.slane %v3386, 2
        %v3388 = vmax.f32 %v3386, %v3387
        %v3389 = vrot.slane %v3388, 1
        %v3390 = vmax.f32 %v3388, %v3389
        %v3391 = vpack.i.bf16 %v3390, %v3390
        %v3393 = vsel %vm2844, %v2350, 4286644096
        %v3395 = vunpack.i.l.bf16 %v3393
        %v3396 = vunpack.i.h.bf16 %v3393
        %v3397 = vmax.f32 %v3395, %v3396
        %v3398 = vrot.slane %v3397, 4
        %v3399 = vmax.f32 %v3397, %v3398
        %v3400 = vrot.slane %v3399, 2
        %v3401 = vmax.f32 %v3399, %v3400
        %v3402 = vrot.slane %v3401, 1
        %v3403 = vmax.f32 %v3401, %v3402
        %v3404 = vpack.i.bf16 %v3403, %v3403
        %v3406 = vsel %vm2844, %v2352, 4286644096
        %v3408 = vunpack.i.l.bf16 %v3406
        %v3409 = vunpack.i.h.bf16 %v3406
        %v3410 = vmax.f32 %v3408, %v3409
        %v3411 = vrot.slane %v3410, 4
        %v3412 = vmax.f32 %v3410, %v3411
        %v3413 = vrot.slane %v3412, 2
        %v3414 = vmax.f32 %v3412, %v3413
        %v3415 = vrot.slane %v3414, 1
        %v3416 = vmax.f32 %v3414, %v3415
        %v3417 = vpack.i.bf16 %v3416, %v3416
        %v3419 = vsel %vm2844, %v2335, 4286644096
        %v3421 = vunpack.i.l.bf16 %v3419
        %v3422 = vunpack.i.h.bf16 %v3419
        %v3423 = vmax.f32 %v3421, %v3422
        %v3424 = vrot.slane %v3423, 4
        %v3425 = vmax.f32 %v3423, %v3424
        %v3426 = vrot.slane %v3425, 2
        %v3427 = vmax.f32 %v3425, %v3426
        %v3428 = vrot.slane %v3427, 1
        %v3429 = vmax.f32 %v3427, %v3428
        %v3430 = vpack.i.bf16 %v3429, %v3429
        %v3432 = vsel %vm2844, %v2349, 4286644096
        %v3434 = vunpack.i.l.bf16 %v3432
        %v3435 = vunpack.i.h.bf16 %v3432
        %v3436 = vmax.f32 %v3434, %v3435
        %v3437 = vrot.slane %v3436, 4
        %v3438 = vmax.f32 %v3436, %v3437
        %v3439 = vrot.slane %v3438, 2
        %v3440 = vmax.f32 %v3438, %v3439
        %v3441 = vrot.slane %v3440, 1
        %v3442 = vmax.f32 %v3440, %v3441
        %v3443 = vpack.i.bf16 %v3442, %v3442
        %v3445 = vsel %vm2844, %v2351, 4286644096
        %v3447 = vunpack.i.l.bf16 %v3445
        %v3448 = vunpack.i.h.bf16 %v3445
        %v3449 = vmax.f32 %v3447, %v3448
        %v3450 = vrot.slane %v3449, 4
        %v3451 = vmax.f32 %v3449, %v3450
        %v3452 = vrot.slane %v3451, 2
        %v3453 = vmax.f32 %v3451, %v3452
        %v3454 = vrot.slane %v3453, 1
        %v3455 = vmax.f32 %v3453, %v3454
        %v3456 = vpack.i.bf16 %v3455, %v3455
        %v3458 = vsel %vm2844, %v2353, 4286644096
        %v3460 = vunpack.i.l.bf16 %v3458
        %v3461 = vunpack.i.h.bf16 %v3458
        %v3462 = vmax.f32 %v3460, %v3461
        %v3463 = vrot.slane %v3462, 4
        %v3464 = vmax.f32 %v3462, %v3463
        %v3465 = vrot.slane %v3464, 2
        %v3466 = vmax.f32 %v3464, %v3465
        %v3467 = vrot.slane %v3466, 1
        %v3468 = vmax.f32 %v3466, %v3467
        %v3469 = vpack.i.bf16 %v3468, %v3468
        %v3471 = vsel %vm2844, %v2377, 4286644096
        %v3473 = vunpack.i.l.bf16 %v3471
        %v3474 = vunpack.i.h.bf16 %v3471
        %v3475 = vmax.f32 %v3473, %v3474
        %v3476 = vrot.slane %v3475, 4
        %v3477 = vmax.f32 %v3475, %v3476
        %v3478 = vrot.slane %v3477, 2
        %v3479 = vmax.f32 %v3477, %v3478
        %v3480 = vrot.slane %v3479, 1
        %v3481 = vmax.f32 %v3479, %v3480
        %v3482 = vpack.i.bf16 %v3481, %v3481
        %v3484 = vsel %vm2844, %v2391, 4286644096
        %v3486 = vunpack.i.l.bf16 %v3484
        %v3487 = vunpack.i.h.bf16 %v3484
        %v3488 = vmax.f32 %v3486, %v3487
        %v3489 = vrot.slane %v3488, 4
        %v3490 = vmax.f32 %v3488, %v3489
        %v3491 = vrot.slane %v3490, 2
        %v3492 = vmax.f32 %v3490, %v3491
        %v3493 = vrot.slane %v3492, 1
        %v3494 = vmax.f32 %v3492, %v3493
        %v3495 = vpack.i.bf16 %v3494, %v3494
        %v3497 = vsel %vm2844, %v2399, 4286644096
        %v3499 = vunpack.i.l.bf16 %v3497
        %v3500 = vunpack.i.h.bf16 %v3497
        %v3501 = vmax.f32 %v3499, %v3500
        %v3502 = vrot.slane %v3501, 4
        %v3503 = vmax.f32 %v3501, %v3502
        %v3504 = vrot.slane %v3503, 2
        %v3505 = vmax.f32 %v3503, %v3504
        %v3506 = vrot.slane %v3505, 1
        %v3507 = vmax.f32 %v3505, %v3506
        %v3508 = vpack.i.bf16 %v3507, %v3507
        %v3510 = vsel %vm2844, %v2401, 4286644096
        %v3512 = vunpack.i.l.bf16 %v3510
        %v3513 = vunpack.i.h.bf16 %v3510
        %v3514 = vmax.f32 %v3512, %v3513
        %v3515 = vrot.slane %v3514, 4
        %v3516 = vmax.f32 %v3514, %v3515
        %v3517 = vrot.slane %v3516, 2
        %v3518 = vmax.f32 %v3516, %v3517
        %v3519 = vrot.slane %v3518, 1
        %v3520 = vmax.f32 %v3518, %v3519
        %v3521 = vpack.i.bf16 %v3520, %v3520
        %v3523 = vsel %vm2844, %v2384, 4286644096
        %v3525 = vunpack.i.l.bf16 %v3523
        %v3526 = vunpack.i.h.bf16 %v3523
        %v3527 = vmax.f32 %v3525, %v3526
        %v3528 = vrot.slane %v3527, 4
        %v3529 = vmax.f32 %v3527, %v3528
        %v3530 = vrot.slane %v3529, 2
        %v3531 = vmax.f32 %v3529, %v3530
        %v3532 = vrot.slane %v3531, 1
        %v3533 = vmax.f32 %v3531, %v3532
        %v3534 = vpack.i.bf16 %v3533, %v3533
        %v3536 = vsel %vm2844, %v2398, 4286644096
        %v3538 = vunpack.i.l.bf16 %v3536
        %v3539 = vunpack.i.h.bf16 %v3536
        %v3540 = vmax.f32 %v3538, %v3539
        %v3541 = vrot.slane %v3540, 4
        %v3542 = vmax.f32 %v3540, %v3541
        %v3543 = vrot.slane %v3542, 2
        %v3544 = vmax.f32 %v3542, %v3543
        %v3545 = vrot.slane %v3544, 1
        %v3546 = vmax.f32 %v3544, %v3545
        %v3547 = vpack.i.bf16 %v3546, %v3546
        %v3549 = vsel %vm2844, %v2400, 4286644096
        %v3551 = vunpack.i.l.bf16 %v3549
        %v3552 = vunpack.i.h.bf16 %v3549
        %v3553 = vmax.f32 %v3551, %v3552
        %v3554 = vrot.slane %v3553, 4
        %v3555 = vmax.f32 %v3553, %v3554
        %v3556 = vrot.slane %v3555, 2
        %v3557 = vmax.f32 %v3555, %v3556
        %v3558 = vrot.slane %v3557, 1
        %v3559 = vmax.f32 %v3557, %v3558
        %v3560 = vpack.i.bf16 %v3559, %v3559
        %v3562 = vsel %vm2844, %v2402, 4286644096
        %v3564 = vunpack.i.l.bf16 %v3562
        %v3565 = vunpack.i.h.bf16 %v3562
        %v3566 = vmax.f32 %v3564, %v3565
        %v3567 = vrot.slane %v3566, 4
        %v3568 = vmax.f32 %v3566, %v3567
        %v3569 = vrot.slane %v3568, 2
        %v3570 = vmax.f32 %v3568, %v3569
        %v3571 = vrot.slane %v3570, 1
        %v3572 = vmax.f32 %v3570, %v3571
        %v3573 = vpack.i.bf16 %v3572, %v3572
        %v3575 = vsel %vm2844, %v2426, 4286644096
        %v3577 = vunpack.i.l.bf16 %v3575
        %v3578 = vunpack.i.h.bf16 %v3575
        %v3579 = vmax.f32 %v3577, %v3578
        %v3580 = vrot.slane %v3579, 4
        %v3581 = vmax.f32 %v3579, %v3580
        %v3582 = vrot.slane %v3581, 2
        %v3583 = vmax.f32 %v3581, %v3582
        %v3584 = vrot.slane %v3583, 1
        %v3585 = vmax.f32 %v3583, %v3584
        %v3586 = vpack.i.bf16 %v3585, %v3585
        %v3588 = vsel %vm2844, %v2440, 4286644096
        %v3590 = vunpack.i.l.bf16 %v3588
        %v3591 = vunpack.i.h.bf16 %v3588
        %v3592 = vmax.f32 %v3590, %v3591
        %v3593 = vrot.slane %v3592, 4
        %v3594 = vmax.f32 %v3592, %v3593
        %v3595 = vrot.slane %v3594, 2
        %v3596 = vmax.f32 %v3594, %v3595
        %v3597 = vrot.slane %v3596, 1
        %v3598 = vmax.f32 %v3596, %v3597
        %v3599 = vpack.i.bf16 %v3598, %v3598
        %v3601 = vsel %vm2844, %v2448, 4286644096
        %v3603 = vunpack.i.l.bf16 %v3601
        %v3604 = vunpack.i.h.bf16 %v3601
        %v3605 = vmax.f32 %v3603, %v3604
        %v3606 = vrot.slane %v3605, 4
        %v3607 = vmax.f32 %v3605, %v3606
        %v3608 = vrot.slane %v3607, 2
        %v3609 = vmax.f32 %v3607, %v3608
        %v3610 = vrot.slane %v3609, 1
        %v3611 = vmax.f32 %v3609, %v3610
        %v3612 = vpack.i.bf16 %v3611, %v3611
        %v3614 = vsel %vm2844, %v2450, 4286644096
        %v3616 = vunpack.i.l.bf16 %v3614
        %v3617 = vunpack.i.h.bf16 %v3614
        %v3618 = vmax.f32 %v3616, %v3617
        %v3619 = vrot.slane %v3618, 4
        %v3620 = vmax.f32 %v3618, %v3619
        %v3621 = vrot.slane %v3620, 2
        %v3622 = vmax.f32 %v3620, %v3621
        %v3623 = vrot.slane %v3622, 1
        %v3624 = vmax.f32 %v3622, %v3623
        %v3625 = vpack.i.bf16 %v3624, %v3624
        %v3627 = vsel %vm2844, %v2433, 4286644096
        %v3629 = vunpack.i.l.bf16 %v3627
        %v3630 = vunpack.i.h.bf16 %v3627
        %v3631 = vmax.f32 %v3629, %v3630
        %v3632 = vrot.slane %v3631, 4
        %v3633 = vmax.f32 %v3631, %v3632
        %v3634 = vrot.slane %v3633, 2
        %v3635 = vmax.f32 %v3633, %v3634
        %v3636 = vrot.slane %v3635, 1
        %v3637 = vmax.f32 %v3635, %v3636
        %v3638 = vpack.i.bf16 %v3637, %v3637
        %v3640 = vsel %vm2844, %v2447, 4286644096
        %v3642 = vunpack.i.l.bf16 %v3640
        %v3643 = vunpack.i.h.bf16 %v3640
        %v3644 = vmax.f32 %v3642, %v3643
        %v3645 = vrot.slane %v3644, 4
        %v3646 = vmax.f32 %v3644, %v3645
        %v3647 = vrot.slane %v3646, 2
        %v3648 = vmax.f32 %v3646, %v3647
        %v3649 = vrot.slane %v3648, 1
        %v3650 = vmax.f32 %v3648, %v3649
        %v3651 = vpack.i.bf16 %v3650, %v3650
        %v3653 = vsel %vm2844, %v2449, 4286644096
        %v3655 = vunpack.i.l.bf16 %v3653
        %v3656 = vunpack.i.h.bf16 %v3653
        %v3657 = vmax.f32 %v3655, %v3656
        %v3658 = vrot.slane %v3657, 4
        %v3659 = vmax.f32 %v3657, %v3658
        %v3660 = vrot.slane %v3659, 2
        %v3661 = vmax.f32 %v3659, %v3660
        %v3662 = vrot.slane %v3661, 1
        %v3663 = vmax.f32 %v3661, %v3662
        %v3664 = vpack.i.bf16 %v3663, %v3663
        %v3666 = vsel %vm2844, %v2451, 4286644096
        %v3668 = vunpack.i.l.bf16 %v3666
        %v3669 = vunpack.i.h.bf16 %v3666
        %v3670 = vmax.f32 %v3668, %v3669
        %v3671 = vrot.slane %v3670, 4
        %v3672 = vmax.f32 %v3670, %v3671
        %v3673 = vrot.slane %v3672, 2
        %v3674 = vmax.f32 %v3672, %v3673
        %v3675 = vrot.slane %v3674, 1
        %v3676 = vmax.f32 %v3674, %v3675
        %v3677 = vpack.i.bf16 %v3676, %v3676
        %v3679 = vsel %vm2844, %v2475, 4286644096
        %v3681 = vunpack.i.l.bf16 %v3679
        %v3682 = vunpack.i.h.bf16 %v3679
        %v3683 = vmax.f32 %v3681, %v3682
        %v3684 = vrot.slane %v3683, 4
        %v3685 = vmax.f32 %v3683, %v3684
        %v3686 = vrot.slane %v3685, 2
        %v3687 = vmax.f32 %v3685, %v3686
        %v3688 = vrot.slane %v3687, 1
        %v3689 = vmax.f32 %v3687, %v3688
        %v3690 = vpack.i.bf16 %v3689, %v3689
        %v3692 = vsel %vm2844, %v2489, 4286644096
        %v3694 = vunpack.i.l.bf16 %v3692
        %v3695 = vunpack.i.h.bf16 %v3692
        %v3696 = vmax.f32 %v3694, %v3695
        %v3697 = vrot.slane %v3696, 4
        %v3698 = vmax.f32 %v3696, %v3697
        %v3699 = vrot.slane %v3698, 2
        %v3700 = vmax.f32 %v3698, %v3699
        %v3701 = vrot.slane %v3700, 1
        %v3702 = vmax.f32 %v3700, %v3701
        %v3703 = vpack.i.bf16 %v3702, %v3702
        %v3705 = vsel %vm2844, %v2497, 4286644096
        %v3707 = vunpack.i.l.bf16 %v3705
        %v3708 = vunpack.i.h.bf16 %v3705
        %v3709 = vmax.f32 %v3707, %v3708
        %v3710 = vrot.slane %v3709, 4
        %v3711 = vmax.f32 %v3709, %v3710
        %v3712 = vrot.slane %v3711, 2
        %v3713 = vmax.f32 %v3711, %v3712
        %v3714 = vrot.slane %v3713, 1
        %v3715 = vmax.f32 %v3713, %v3714
        %v3716 = vpack.i.bf16 %v3715, %v3715
        %v3718 = vsel %vm2844, %v2499, 4286644096
        %v3720 = vunpack.i.l.bf16 %v3718
        %v3721 = vunpack.i.h.bf16 %v3718
        %v3722 = vmax.f32 %v3720, %v3721
        %v3723 = vrot.slane %v3722, 4
        %v3724 = vmax.f32 %v3722, %v3723
        %v3725 = vrot.slane %v3724, 2
        %v3726 = vmax.f32 %v3724, %v3725
        %v3727 = vrot.slane %v3726, 1
        %v3728 = vmax.f32 %v3726, %v3727
        %v3729 = vpack.i.bf16 %v3728, %v3728
        %v3731 = vsel %vm2844, %v2482, 4286644096
        %v3733 = vunpack.i.l.bf16 %v3731
        %v3734 = vunpack.i.h.bf16 %v3731
        %v3735 = vmax.f32 %v3733, %v3734
        %v3736 = vrot.slane %v3735, 4
        %v3737 = vmax.f32 %v3735, %v3736
        %v3738 = vrot.slane %v3737, 2
        %v3739 = vmax.f32 %v3737, %v3738
        %v3740 = vrot.slane %v3739, 1
        %v3741 = vmax.f32 %v3739, %v3740
        %v3742 = vpack.i.bf16 %v3741, %v3741
        %v3744 = vsel %vm2844, %v2496, 4286644096
        %v3746 = vunpack.i.l.bf16 %v3744
        %v3747 = vunpack.i.h.bf16 %v3744
        %v3748 = vmax.f32 %v3746, %v3747
        %v3749 = vrot.slane %v3748, 4
        %v3750 = vmax.f32 %v3748, %v3749
        %v3751 = vrot.slane %v3750, 2
        %v3752 = vmax.f32 %v3750, %v3751
        %v3753 = vrot.slane %v3752, 1
        %v3754 = vmax.f32 %v3752, %v3753
        %v3755 = vpack.i.bf16 %v3754, %v3754
        %v3757 = vsel %vm2844, %v2498, 4286644096
        %v3759 = vunpack.i.l.bf16 %v3757
        %v3760 = vunpack.i.h.bf16 %v3757
        %v3761 = vmax.f32 %v3759, %v3760
        %v3762 = vrot.slane %v3761, 4
        %v3763 = vmax.f32 %v3761, %v3762
        %v3764 = vrot.slane %v3763, 2
        %v3765 = vmax.f32 %v3763, %v3764
        %v3766 = vrot.slane %v3765, 1
        %v3767 = vmax.f32 %v3765, %v3766
        %v3768 = vpack.i.bf16 %v3767, %v3767
        %v3770 = vsel %vm2844, %v2500, 4286644096
        %v3772 = vunpack.i.l.bf16 %v3770
        %v3773 = vunpack.i.h.bf16 %v3770
        %v3774 = vmax.f32 %v3772, %v3773
        %v3775 = vrot.slane %v3774, 4
        %v3776 = vmax.f32 %v3774, %v3775
        %v3777 = vrot.slane %v3776, 2
        %v3778 = vmax.f32 %v3776, %v3777
        %v3779 = vrot.slane %v3778, 1
        %v3780 = vmax.f32 %v3778, %v3779
        %v3781 = vpack.i.bf16 %v3780, %v3780
        %v3783 = vsel %vm2844, %v2524, 4286644096
        %v3785 = vunpack.i.l.bf16 %v3783
        %v3786 = vunpack.i.h.bf16 %v3783
        %v3787 = vmax.f32 %v3785, %v3786
        %v3788 = vrot.slane %v3787, 4
        %v3789 = vmax.f32 %v3787, %v3788
        %v3790 = vrot.slane %v3789, 2
        %v3791 = vmax.f32 %v3789, %v3790
        %v3792 = vrot.slane %v3791, 1
        %v3793 = vmax.f32 %v3791, %v3792
        %v3794 = vpack.i.bf16 %v3793, %v3793
        %v3796 = vsel %vm2844, %v2538, 4286644096
        %v3798 = vunpack.i.l.bf16 %v3796
        %v3799 = vunpack.i.h.bf16 %v3796
        %v3800 = vmax.f32 %v3798, %v3799
        %v3801 = vrot.slane %v3800, 4
        %v3802 = vmax.f32 %v3800, %v3801
        %v3803 = vrot.slane %v3802, 2
        %v3804 = vmax.f32 %v3802, %v3803
        %v3805 = vrot.slane %v3804, 1
        %v3806 = vmax.f32 %v3804, %v3805
        %v3807 = vpack.i.bf16 %v3806, %v3806
        %v3809 = vsel %vm2844, %v2546, 4286644096
        %v3811 = vunpack.i.l.bf16 %v3809
        %v3812 = vunpack.i.h.bf16 %v3809
        %v3813 = vmax.f32 %v3811, %v3812
        %v3814 = vrot.slane %v3813, 4
        %v3815 = vmax.f32 %v3813, %v3814
        %v3816 = vrot.slane %v3815, 2
        %v3817 = vmax.f32 %v3815, %v3816
        %v3818 = vrot.slane %v3817, 1
        %v3819 = vmax.f32 %v3817, %v3818
        %v3820 = vpack.i.bf16 %v3819, %v3819
        %v3822 = vsel %vm2844, %v2548, 4286644096
        %v3824 = vunpack.i.l.bf16 %v3822
        %v3825 = vunpack.i.h.bf16 %v3822
        %v3826 = vmax.f32 %v3824, %v3825
        %v3827 = vrot.slane %v3826, 4
        %v3828 = vmax.f32 %v3826, %v3827
        %v3829 = vrot.slane %v3828, 2
        %v3830 = vmax.f32 %v3828, %v3829
        %v3831 = vrot.slane %v3830, 1
        %v3832 = vmax.f32 %v3830, %v3831
        %v3833 = vpack.i.bf16 %v3832, %v3832
        %v3835 = vsel %vm2844, %v2531, 4286644096
        %v3837 = vunpack.i.l.bf16 %v3835
        %v3838 = vunpack.i.h.bf16 %v3835
        %v3839 = vmax.f32 %v3837, %v3838
        %v3840 = vrot.slane %v3839, 4
        %v3841 = vmax.f32 %v3839, %v3840
        %v3842 = vrot.slane %v3841, 2
        %v3843 = vmax.f32 %v3841, %v3842
        %v3844 = vrot.slane %v3843, 1
        %v3845 = vmax.f32 %v3843, %v3844
        %v3846 = vpack.i.bf16 %v3845, %v3845
        %v3848 = vsel %vm2844, %v2545, 4286644096
        %v3850 = vunpack.i.l.bf16 %v3848
        %v3851 = vunpack.i.h.bf16 %v3848
        %v3852 = vmax.f32 %v3850, %v3851
        %v3853 = vrot.slane %v3852, 4
        %v3854 = vmax.f32 %v3852, %v3853
        %v3855 = vrot.slane %v3854, 2
        %v3856 = vmax.f32 %v3854, %v3855
        %v3857 = vrot.slane %v3856, 1
        %v3858 = vmax.f32 %v3856, %v3857
        %v3859 = vpack.i.bf16 %v3858, %v3858
        %v3861 = vsel %vm2844, %v2547, 4286644096
        %v3863 = vunpack.i.l.bf16 %v3861
        %v3864 = vunpack.i.h.bf16 %v3861
        %v3865 = vmax.f32 %v3863, %v3864
        %v3866 = vrot.slane %v3865, 4
        %v3867 = vmax.f32 %v3865, %v3866
        %v3868 = vrot.slane %v3867, 2
        %v3869 = vmax.f32 %v3867, %v3868
        %v3870 = vrot.slane %v3869, 1
        %v3871 = vmax.f32 %v3869, %v3870
        %v3872 = vpack.i.bf16 %v3871, %v3871
        %v3874 = vsel %vm2844, %v2549, 4286644096
        %v3876 = vunpack.i.l.bf16 %v3874
        %v3877 = vunpack.i.h.bf16 %v3874
        %v3878 = vmax.f32 %v3876, %v3877
        %v3879 = vrot.slane %v3878, 4
        %v3880 = vmax.f32 %v3878, %v3879
        %v3881 = vrot.slane %v3880, 2
        %v3882 = vmax.f32 %v3880, %v3881
        %v3883 = vrot.slane %v3882, 1
        %v3884 = vmax.f32 %v3882, %v3883
        %v3885 = vpack.i.bf16 %v3884, %v3884
        %v3887 = vsel %vm2844, %v2573, 4286644096
        %v3889 = vunpack.i.l.bf16 %v3887
        %v3890 = vunpack.i.h.bf16 %v3887
        %v3891 = vmax.f32 %v3889, %v3890
        %v3892 = vrot.slane %v3891, 4
        %v3893 = vmax.f32 %v3891, %v3892
        %v3894 = vrot.slane %v3893, 2
        %v3895 = vmax.f32 %v3893, %v3894
        %v3896 = vrot.slane %v3895, 1
        %v3897 = vmax.f32 %v3895, %v3896
        %v3898 = vpack.i.bf16 %v3897, %v3897
        %v3900 = vsel %vm2844, %v2587, 4286644096
        %v3902 = vunpack.i.l.bf16 %v3900
        %v3903 = vunpack.i.h.bf16 %v3900
        %v3904 = vmax.f32 %v3902, %v3903
        %v3905 = vrot.slane %v3904, 4
        %v3906 = vmax.f32 %v3904, %v3905
        %v3907 = vrot.slane %v3906, 2
        %v3908 = vmax.f32 %v3906, %v3907
        %v3909 = vrot.slane %v3908, 1
        %v3910 = vmax.f32 %v3908, %v3909
        %v3911 = vpack.i.bf16 %v3910, %v3910
        %v3913 = vsel %vm2844, %v2595, 4286644096
        %v3915 = vunpack.i.l.bf16 %v3913
        %v3916 = vunpack.i.h.bf16 %v3913
        %v3917 = vmax.f32 %v3915, %v3916
        %v3918 = vrot.slane %v3917, 4
        %v3919 = vmax.f32 %v3917, %v3918
        %v3920 = vrot.slane %v3919, 2
        %v3921 = vmax.f32 %v3919, %v3920
        %v3922 = vrot.slane %v3921, 1
        %v3923 = vmax.f32 %v3921, %v3922
        %v3924 = vpack.i.bf16 %v3923, %v3923
        %v3926 = vsel %vm2844, %v2597, 4286644096
        %v3928 = vunpack.i.l.bf16 %v3926
        %v3929 = vunpack.i.h.bf16 %v3926
        %v3930 = vmax.f32 %v3928, %v3929
        %v3931 = vrot.slane %v3930, 4
        %v3932 = vmax.f32 %v3930, %v3931
        %v3933 = vrot.slane %v3932, 2
        %v3934 = vmax.f32 %v3932, %v3933
        %v3935 = vrot.slane %v3934, 1
        %v3936 = vmax.f32 %v3934, %v3935
        %v3937 = vpack.i.bf16 %v3936, %v3936
        %v3939 = vsel %vm2844, %v2580, 4286644096
        %v3941 = vunpack.i.l.bf16 %v3939
        %v3942 = vunpack.i.h.bf16 %v3939
        %v3943 = vmax.f32 %v3941, %v3942
        %v3944 = vrot.slane %v3943, 4
        %v3945 = vmax.f32 %v3943, %v3944
        %v3946 = vrot.slane %v3945, 2
        %v3947 = vmax.f32 %v3945, %v3946
        %v3948 = vrot.slane %v3947, 1
        %v3949 = vmax.f32 %v3947, %v3948
        %v3950 = vpack.i.bf16 %v3949, %v3949
        %v3952 = vsel %vm2844, %v2594, 4286644096
        %v3954 = vunpack.i.l.bf16 %v3952
        %v3955 = vunpack.i.h.bf16 %v3952
        %v3956 = vmax.f32 %v3954, %v3955
        %v3957 = vrot.slane %v3956, 4
        %v3958 = vmax.f32 %v3956, %v3957
        %v3959 = vrot.slane %v3958, 2
        %v3960 = vmax.f32 %v3958, %v3959
        %v3961 = vrot.slane %v3960, 1
        %v3962 = vmax.f32 %v3960, %v3961
        %v3963 = vpack.i.bf16 %v3962, %v3962
        %v3965 = vsel %vm2844, %v2596, 4286644096
        %v3967 = vunpack.i.l.bf16 %v3965
        %v3968 = vunpack.i.h.bf16 %v3965
        %v3969 = vmax.f32 %v3967, %v3968
        %v3970 = vrot.slane %v3969, 4
        %v3971 = vmax.f32 %v3969, %v3970
        %v3972 = vrot.slane %v3971, 2
        %v3973 = vmax.f32 %v3971, %v3972
        %v3974 = vrot.slane %v3973, 1
        %v3975 = vmax.f32 %v3973, %v3974
        %v3976 = vpack.i.bf16 %v3975, %v3975
        %v3978 = vsel %vm2844, %v2598, 4286644096
        %v3980 = vunpack.i.l.bf16 %v3978
        %v3981 = vunpack.i.h.bf16 %v3978
        %v3982 = vmax.f32 %v3980, %v3981
        %v3983 = vrot.slane %v3982, 4
        %v3984 = vmax.f32 %v3982, %v3983
        %v3985 = vrot.slane %v3984, 2
        %v3986 = vmax.f32 %v3984, %v3985
        %v3987 = vrot.slane %v3986, 1
        %v3988 = vmax.f32 %v3986, %v3987
        %v3989 = vpack.i.bf16 %v3988, %v3988
        %v3991 = vsel %vm2844, %v2622, 4286644096
        %v3993 = vunpack.i.l.bf16 %v3991
        %v3994 = vunpack.i.h.bf16 %v3991
        %v3995 = vmax.f32 %v3993, %v3994
        %v3996 = vrot.slane %v3995, 4
        %v3997 = vmax.f32 %v3995, %v3996
        %v3998 = vrot.slane %v3997, 2
        %v3999 = vmax.f32 %v3997, %v3998
        %v4000 = vrot.slane %v3999, 1
        %v4001 = vmax.f32 %v3999, %v4000
        %v4002 = vpack.i.bf16 %v4001, %v4001
        %v4004 = vsel %vm2844, %v2636, 4286644096
        %v4006 = vunpack.i.l.bf16 %v4004
        %v4007 = vunpack.i.h.bf16 %v4004
        %v4008 = vmax.f32 %v4006, %v4007
        %v4009 = vrot.slane %v4008, 4
        %v4010 = vmax.f32 %v4008, %v4009
        %v4011 = vrot.slane %v4010, 2
        %v4012 = vmax.f32 %v4010, %v4011
        %v4013 = vrot.slane %v4012, 1
        %v4014 = vmax.f32 %v4012, %v4013
        %v4015 = vpack.i.bf16 %v4014, %v4014
        %v4017 = vsel %vm2844, %v2644, 4286644096
        %v4019 = vunpack.i.l.bf16 %v4017
        %v4020 = vunpack.i.h.bf16 %v4017
        %v4021 = vmax.f32 %v4019, %v4020
        %v4022 = vrot.slane %v4021, 4
        %v4023 = vmax.f32 %v4021, %v4022
        %v4024 = vrot.slane %v4023, 2
        %v4025 = vmax.f32 %v4023, %v4024
        %v4026 = vrot.slane %v4025, 1
        %v4027 = vmax.f32 %v4025, %v4026
        %v4028 = vpack.i.bf16 %v4027, %v4027
        %v4030 = vsel %vm2844, %v2646, 4286644096
        %v4032 = vunpack.i.l.bf16 %v4030
        %v4033 = vunpack.i.h.bf16 %v4030
        %v4034 = vmax.f32 %v4032, %v4033
        %v4035 = vrot.slane %v4034, 4
        %v4036 = vmax.f32 %v4034, %v4035
        %v4037 = vrot.slane %v4036, 2
        %v4038 = vmax.f32 %v4036, %v4037
        %v4039 = vrot.slane %v4038, 1
        %v4040 = vmax.f32 %v4038, %v4039
        %v4041 = vpack.i.bf16 %v4040, %v4040
        %v4043 = vsel %vm2844, %v2629, 4286644096
        %v4045 = vunpack.i.l.bf16 %v4043
        %v4046 = vunpack.i.h.bf16 %v4043
        %v4047 = vmax.f32 %v4045, %v4046
        %v4048 = vrot.slane %v4047, 4
        %v4049 = vmax.f32 %v4047, %v4048
        %v4050 = vrot.slane %v4049, 2
        %v4051 = vmax.f32 %v4049, %v4050
        %v4052 = vrot.slane %v4051, 1
        %v4053 = vmax.f32 %v4051, %v4052
        %v4054 = vpack.i.bf16 %v4053, %v4053
        %v4056 = vsel %vm2844, %v2643, 4286644096
        %v4058 = vunpack.i.l.bf16 %v4056
        %v4059 = vunpack.i.h.bf16 %v4056
        %v4060 = vmax.f32 %v4058, %v4059
        %v4061 = vrot.slane %v4060, 4
        %v4062 = vmax.f32 %v4060, %v4061
        %v4063 = vrot.slane %v4062, 2
        %v4064 = vmax.f32 %v4062, %v4063
        %v4065 = vrot.slane %v4064, 1
        %v4066 = vmax.f32 %v4064, %v4065
        %v4067 = vpack.i.bf16 %v4066, %v4066
        %v4069 = vsel %vm2844, %v2645, 4286644096
        %v4071 = vunpack.i.l.bf16 %v4069
        %v4072 = vunpack.i.h.bf16 %v4069
        %v4073 = vmax.f32 %v4071, %v4072
        %v4074 = vrot.slane %v4073, 4
        %v4075 = vmax.f32 %v4073, %v4074
        %v4076 = vrot.slane %v4075, 2
        %v4077 = vmax.f32 %v4075, %v4076
        %v4078 = vrot.slane %v4077, 1
        %v4079 = vmax.f32 %v4077, %v4078
        %v4080 = vpack.i.bf16 %v4079, %v4079
        %v4082 = vsel %vm2844, %v2647, 4286644096
        %v4084 = vunpack.i.l.bf16 %v4082
        %v4085 = vunpack.i.h.bf16 %v4082
        %v4086 = vmax.f32 %v4084, %v4085
        %v4087 = vrot.slane %v4086, 4
        %v4088 = vmax.f32 %v4086, %v4087
        %v4089 = vrot.slane %v4088, 2
        %v4090 = vmax.f32 %v4088, %v4089
        %v4091 = vrot.slane %v4090, 1
        %v4092 = vmax.f32 %v4090, %v4091
        %v4093 = vpack.i.bf16 %v4092, %v4092
        %v4095 = vsel %vm2844, %v2671, 4286644096
        %v4097 = vunpack.i.l.bf16 %v4095
        %v4098 = vunpack.i.h.bf16 %v4095
        %v4099 = vmax.f32 %v4097, %v4098
        %v4100 = vrot.slane %v4099, 4
        %v4101 = vmax.f32 %v4099, %v4100
        %v4102 = vrot.slane %v4101, 2
        %v4103 = vmax.f32 %v4101, %v4102
        %v4104 = vrot.slane %v4103, 1
        %v4105 = vmax.f32 %v4103, %v4104
        %v4106 = vpack.i.bf16 %v4105, %v4105
        %v4108 = vsel %vm2844, %v2685, 4286644096
        %v4110 = vunpack.i.l.bf16 %v4108
        %v4111 = vunpack.i.h.bf16 %v4108
        %v4112 = vmax.f32 %v4110, %v4111
        %v4113 = vrot.slane %v4112, 4
        %v4114 = vmax.f32 %v4112, %v4113
        %v4115 = vrot.slane %v4114, 2
        %v4116 = vmax.f32 %v4114, %v4115
        %v4117 = vrot.slane %v4116, 1
        %v4118 = vmax.f32 %v4116, %v4117
        %v4119 = vpack.i.bf16 %v4118, %v4118
        %v4121 = vsel %vm2844, %v2693, 4286644096
        %v4123 = vunpack.i.l.bf16 %v4121
        %v4124 = vunpack.i.h.bf16 %v4121
        %v4125 = vmax.f32 %v4123, %v4124
        %v4126 = vrot.slane %v4125, 4
        %v4127 = vmax.f32 %v4125, %v4126
        %v4128 = vrot.slane %v4127, 2
        %v4129 = vmax.f32 %v4127, %v4128
        %v4130 = vrot.slane %v4129, 1
        %v4131 = vmax.f32 %v4129, %v4130
        %v4132 = vpack.i.bf16 %v4131, %v4131
        %v4134 = vsel %vm2844, %v2695, 4286644096
        %v4136 = vunpack.i.l.bf16 %v4134
        %v4137 = vunpack.i.h.bf16 %v4134
        %v4138 = vmax.f32 %v4136, %v4137
        %v4139 = vrot.slane %v4138, 4
        %v4140 = vmax.f32 %v4138, %v4139
        %v4141 = vrot.slane %v4140, 2
        %v4142 = vmax.f32 %v4140, %v4141
        %v4143 = vrot.slane %v4142, 1
        %v4144 = vmax.f32 %v4142, %v4143
        %v4145 = vpack.i.bf16 %v4144, %v4144
        %v4147 = vsel %vm2844, %v2678, 4286644096
        %v4149 = vunpack.i.l.bf16 %v4147
        %v4150 = vunpack.i.h.bf16 %v4147
        %v4151 = vmax.f32 %v4149, %v4150
        %v4152 = vrot.slane %v4151, 4
        %v4153 = vmax.f32 %v4151, %v4152
        %v4154 = vrot.slane %v4153, 2
        %v4155 = vmax.f32 %v4153, %v4154
        %v4156 = vrot.slane %v4155, 1
        %v4157 = vmax.f32 %v4155, %v4156
        %v4158 = vpack.i.bf16 %v4157, %v4157
        %v4160 = vsel %vm2844, %v2692, 4286644096
        %v4162 = vunpack.i.l.bf16 %v4160
        %v4163 = vunpack.i.h.bf16 %v4160
        %v4164 = vmax.f32 %v4162, %v4163
        %v4165 = vrot.slane %v4164, 4
        %v4166 = vmax.f32 %v4164, %v4165
        %v4167 = vrot.slane %v4166, 2
        %v4168 = vmax.f32 %v4166, %v4167
        %v4169 = vrot.slane %v4168, 1
        %v4170 = vmax.f32 %v4168, %v4169
        %v4171 = vpack.i.bf16 %v4170, %v4170
        %v4173 = vsel %vm2844, %v2694, 4286644096
        %v4175 = vunpack.i.l.bf16 %v4173
        %v4176 = vunpack.i.h.bf16 %v4173
        %v4177 = vmax.f32 %v4175, %v4176
        %v4178 = vrot.slane %v4177, 4
        %v4179 = vmax.f32 %v4177, %v4178
        %v4180 = vrot.slane %v4179, 2
        %v4181 = vmax.f32 %v4179, %v4180
        %v4182 = vrot.slane %v4181, 1
        %v4183 = vmax.f32 %v4181, %v4182
        %v4184 = vpack.i.bf16 %v4183, %v4183
        %v4186 = vsel %vm2844, %v2696, 4286644096
        %v4188 = vunpack.i.l.bf16 %v4186
        %v4189 = vunpack.i.h.bf16 %v4186
        %v4190 = vmax.f32 %v4188, %v4189
        %v4191 = vrot.slane %v4190, 4
        %v4192 = vmax.f32 %v4190, %v4191
        %v4193 = vrot.slane %v4192, 2
        %v4194 = vmax.f32 %v4192, %v4193
        %v4195 = vrot.slane %v4194, 1
        %v4196 = vmax.f32 %v4194, %v4195
        %v4197 = vpack.i.bf16 %v4196, %v4196
        %v4199 = vsel %vm2844, %v2720, 4286644096
        %v4201 = vunpack.i.l.bf16 %v4199
        %v4202 = vunpack.i.h.bf16 %v4199
        %v4203 = vmax.f32 %v4201, %v4202
        %v4204 = vrot.slane %v4203, 4
        %v4205 = vmax.f32 %v4203, %v4204
        %v4206 = vrot.slane %v4205, 2
        %v4207 = vmax.f32 %v4205, %v4206
        %v4208 = vrot.slane %v4207, 1
        %v4209 = vmax.f32 %v4207, %v4208
        %v4210 = vpack.i.bf16 %v4209, %v4209
        %v4212 = vsel %vm2844, %v2734, 4286644096
        %v4214 = vunpack.i.l.bf16 %v4212
        %v4215 = vunpack.i.h.bf16 %v4212
        %v4216 = vmax.f32 %v4214, %v4215
        %v4217 = vrot.slane %v4216, 4
        %v4218 = vmax.f32 %v4216, %v4217
        %v4219 = vrot.slane %v4218, 2
        %v4220 = vmax.f32 %v4218, %v4219
        %v4221 = vrot.slane %v4220, 1
        %v4222 = vmax.f32 %v4220, %v4221
        %v4223 = vpack.i.bf16 %v4222, %v4222
        %v4225 = vsel %vm2844, %v2742, 4286644096
        %v4227 = vunpack.i.l.bf16 %v4225
        %v4228 = vunpack.i.h.bf16 %v4225
        %v4229 = vmax.f32 %v4227, %v4228
        %v4230 = vrot.slane %v4229, 4
        %v4231 = vmax.f32 %v4229, %v4230
        %v4232 = vrot.slane %v4231, 2
        %v4233 = vmax.f32 %v4231, %v4232
        %v4234 = vrot.slane %v4233, 1
        %v4235 = vmax.f32 %v4233, %v4234
        %v4236 = vpack.i.bf16 %v4235, %v4235
        %v4238 = vsel %vm2844, %v2744, 4286644096
        %v4240 = vunpack.i.l.bf16 %v4238
        %v4241 = vunpack.i.h.bf16 %v4238
        %v4242 = vmax.f32 %v4240, %v4241
        %v4243 = vrot.slane %v4242, 4
        %v4244 = vmax.f32 %v4242, %v4243
        %v4245 = vrot.slane %v4244, 2
        %v4246 = vmax.f32 %v4244, %v4245
        %v4247 = vrot.slane %v4246, 1
        %v4248 = vmax.f32 %v4246, %v4247
        %v4249 = vpack.i.bf16 %v4248, %v4248
        %v4251 = vsel %vm2844, %v2727, 4286644096
        %v4253 = vunpack.i.l.bf16 %v4251
        %v4254 = vunpack.i.h.bf16 %v4251
        %v4255 = vmax.f32 %v4253, %v4254
        %v4256 = vrot.slane %v4255, 4
        %v4257 = vmax.f32 %v4255, %v4256
        %v4258 = vrot.slane %v4257, 2
        %v4259 = vmax.f32 %v4257, %v4258
        %v4260 = vrot.slane %v4259, 1
        %v4261 = vmax.f32 %v4259, %v4260
        %v4262 = vpack.i.bf16 %v4261, %v4261
        %v4264 = vsel %vm2844, %v2741, 4286644096
        %v4266 = vunpack.i.l.bf16 %v4264
        %v4267 = vunpack.i.h.bf16 %v4264
        %v4268 = vmax.f32 %v4266, %v4267
        %v4269 = vrot.slane %v4268, 4
        %v4270 = vmax.f32 %v4268, %v4269
        %v4271 = vrot.slane %v4270, 2
        %v4272 = vmax.f32 %v4270, %v4271
        %v4273 = vrot.slane %v4272, 1
        %v4274 = vmax.f32 %v4272, %v4273
        %v4275 = vpack.i.bf16 %v4274, %v4274
        %v4277 = vsel %vm2844, %v2743, 4286644096
        %v4279 = vunpack.i.l.bf16 %v4277
        %v4280 = vunpack.i.h.bf16 %v4277
        %v4281 = vmax.f32 %v4279, %v4280
        %v4282 = vrot.slane %v4281, 4
        %v4283 = vmax.f32 %v4281, %v4282
        %v4284 = vrot.slane %v4283, 2
        %v4285 = vmax.f32 %v4283, %v4284
        %v4286 = vrot.slane %v4285, 1
        %v4287 = vmax.f32 %v4285, %v4286
        %v4288 = vpack.i.bf16 %v4287, %v4287
        %v4290 = vsel %vm2844, %v2745, 4286644096
        %v4292 = vunpack.i.l.bf16 %v4290
        %v4293 = vunpack.i.h.bf16 %v4290
        %v4294 = vmax.f32 %v4292, %v4293
        %v4295 = vrot.slane %v4294, 4
        %v4296 = vmax.f32 %v4294, %v4295
        %v4297 = vrot.slane %v4296, 2
        %v4298 = vmax.f32 %v4296, %v4297
        %v4299 = vrot.slane %v4298, 1
        %v4300 = vmax.f32 %v4298, %v4299
        %v4301 = vpack.i.bf16 %v4300, %v4300
        %v4303 = vsel %vm2844, %v2769, 4286644096
        %v4305 = vunpack.i.l.bf16 %v4303
        %v4306 = vunpack.i.h.bf16 %v4303
        %v4307 = vmax.f32 %v4305, %v4306
        %v4308 = vrot.slane %v4307, 4
        %v4309 = vmax.f32 %v4307, %v4308
        %v4310 = vrot.slane %v4309, 2
        %v4311 = vmax.f32 %v4309, %v4310
        %v4312 = vrot.slane %v4311, 1
        %v4313 = vmax.f32 %v4311, %v4312
        %v4314 = vpack.i.bf16 %v4313, %v4313
        %v4316 = vsel %vm2844, %v2783, 4286644096
        %v4318 = vunpack.i.l.bf16 %v4316
        %v4319 = vunpack.i.h.bf16 %v4316
        %v4320 = vmax.f32 %v4318, %v4319
        %v4321 = vrot.slane %v4320, 4
        %v4322 = vmax.f32 %v4320, %v4321
        %v4323 = vrot.slane %v4322, 2
        %v4324 = vmax.f32 %v4322, %v4323
        %v4325 = vrot.slane %v4324, 1
        %v4326 = vmax.f32 %v4324, %v4325
        %v4327 = vpack.i.bf16 %v4326, %v4326
        %v4329 = vsel %vm2844, %v2791, 4286644096
        %v4331 = vunpack.i.l.bf16 %v4329
        %v4332 = vunpack.i.h.bf16 %v4329
        %v4333 = vmax.f32 %v4331, %v4332
        %v4334 = vrot.slane %v4333, 4
        %v4335 = vmax.f32 %v4333, %v4334
        %v4336 = vrot.slane %v4335, 2
        %v4337 = vmax.f32 %v4335, %v4336
        %v4338 = vrot.slane %v4337, 1
        %v4339 = vmax.f32 %v4337, %v4338
        %v4340 = vpack.i.bf16 %v4339, %v4339
        %v4342 = vsel %vm2844, %v2793, 4286644096
        %v4344 = vunpack.i.l.bf16 %v4342
        %v4345 = vunpack.i.h.bf16 %v4342
        %v4346 = vmax.f32 %v4344, %v4345
        %v4347 = vrot.slane %v4346, 4
        %v4348 = vmax.f32 %v4346, %v4347
        %v4349 = vrot.slane %v4348, 2
        %v4350 = vmax.f32 %v4348, %v4349
        %v4351 = vrot.slane %v4350, 1
        %v4352 = vmax.f32 %v4350, %v4351
        %v4353 = vpack.i.bf16 %v4352, %v4352
        %v4355 = vsel %vm2844, %v2776, 4286644096
        %v4357 = vunpack.i.l.bf16 %v4355
        %v4358 = vunpack.i.h.bf16 %v4355
        %v4359 = vmax.f32 %v4357, %v4358
        %v4360 = vrot.slane %v4359, 4
        %v4361 = vmax.f32 %v4359, %v4360
        %v4362 = vrot.slane %v4361, 2
        %v4363 = vmax.f32 %v4361, %v4362
        %v4364 = vrot.slane %v4363, 1
        %v4365 = vmax.f32 %v4363, %v4364
        %v4366 = vpack.i.bf16 %v4365, %v4365
        %v4368 = vsel %vm2844, %v2790, 4286644096
        %v4370 = vunpack.i.l.bf16 %v4368
        %v4371 = vunpack.i.h.bf16 %v4368
        %v4372 = vmax.f32 %v4370, %v4371
        %v4373 = vrot.slane %v4372, 4
        %v4374 = vmax.f32 %v4372, %v4373
        %v4375 = vrot.slane %v4374, 2
        %v4376 = vmax.f32 %v4374, %v4375
        %v4377 = vrot.slane %v4376, 1
        %v4378 = vmax.f32 %v4376, %v4377
        %v4379 = vpack.i.bf16 %v4378, %v4378
        %v4381 = vsel %vm2844, %v2792, 4286644096
        %v4383 = vunpack.i.l.bf16 %v4381
        %v4384 = vunpack.i.h.bf16 %v4381
        %v4385 = vmax.f32 %v4383, %v4384
        %v4386 = vrot.slane %v4385, 4
        %v4387 = vmax.f32 %v4385, %v4386
        %v4388 = vrot.slane %v4387, 2
        %v4389 = vmax.f32 %v4387, %v4388
        %v4390 = vrot.slane %v4389, 1
        %v4391 = vmax.f32 %v4389, %v4390
        %v4392 = vpack.i.bf16 %v4391, %v4391
        %v4394 = vsel %vm2844, %v2794, 4286644096
        %v4396 = vunpack.i.l.bf16 %v4394
        %v4397 = vunpack.i.h.bf16 %v4394
        %v4398 = vmax.f32 %v4396, %v4397
        %v4399 = vrot.slane %v4398, 4
        %v4400 = vmax.f32 %v4398, %v4399
        %v4401 = vrot.slane %v4400, 2
        %v4402 = vmax.f32 %v4400, %v4401
        %v4403 = vrot.slane %v4402, 1
        %v4404 = vmax.f32 %v4402, %v4403
        %v4405 = vpack.i.bf16 %v4404, %v4404
        %v4407 = vsel %vm2844, %v2818, 4286644096
        %v4409 = vunpack.i.l.bf16 %v4407
        %v4410 = vunpack.i.h.bf16 %v4407
        %v4411 = vmax.f32 %v4409, %v4410
        %v4412 = vrot.slane %v4411, 4
        %v4413 = vmax.f32 %v4411, %v4412
        %v4414 = vrot.slane %v4413, 2
        %v4415 = vmax.f32 %v4413, %v4414
        %v4416 = vrot.slane %v4415, 1
        %v4417 = vmax.f32 %v4415, %v4416
        %v4418 = vpack.i.bf16 %v4417, %v4417
        %v4420 = vsel %vm2844, %v2832, 4286644096
        %v4422 = vunpack.i.l.bf16 %v4420
        %v4423 = vunpack.i.h.bf16 %v4420
        %v4424 = vmax.f32 %v4422, %v4423
        %v4425 = vrot.slane %v4424, 4
        %v4426 = vmax.f32 %v4424, %v4425
        %v4427 = vrot.slane %v4426, 2
        %v4428 = vmax.f32 %v4426, %v4427
        %v4429 = vrot.slane %v4428, 1
        %v4430 = vmax.f32 %v4428, %v4429
        %v4431 = vpack.i.bf16 %v4430, %v4430
        %v4433 = vsel %vm2844, %v2840, 4286644096
        %v4435 = vunpack.i.l.bf16 %v4433
        %v4436 = vunpack.i.h.bf16 %v4433
        %v4437 = vmax.f32 %v4435, %v4436
        %v4438 = vrot.slane %v4437, 4
        %v4439 = vmax.f32 %v4437, %v4438
        %v4440 = vrot.slane %v4439, 2
        %v4441 = vmax.f32 %v4439, %v4440
        %v4442 = vrot.slane %v4441, 1
        %v4443 = vmax.f32 %v4441, %v4442
        %v4444 = vpack.i.bf16 %v4443, %v4443
        %v4446 = vsel %vm2844, %v2842, 4286644096
        %v4448 = vunpack.i.l.bf16 %v4446
        %v4449 = vunpack.i.h.bf16 %v4446
        %v4450 = vmax.f32 %v4448, %v4449
        %v4451 = vrot.slane %v4450, 4
        %v4452 = vmax.f32 %v4450, %v4451
        %v4453 = vrot.slane %v4452, 2
        %v4454 = vmax.f32 %v4452, %v4453
        %v4455 = vrot.slane %v4454, 1
        %v4456 = vmax.f32 %v4454, %v4455
        %v4457 = vpack.i.bf16 %v4456, %v4456
        %v4459 = vsel %vm2844, %v2825, 4286644096
        %v4461 = vunpack.i.l.bf16 %v4459
        %v4462 = vunpack.i.h.bf16 %v4459
        %v4463 = vmax.f32 %v4461, %v4462
        %v4464 = vrot.slane %v4463, 4
        %v4465 = vmax.f32 %v4463, %v4464
        %v4466 = vrot.slane %v4465, 2
        %v4467 = vmax.f32 %v4465, %v4466
        %v4468 = vrot.slane %v4467, 1
        %v4469 = vmax.f32 %v4467, %v4468
        %v4470 = vpack.i.bf16 %v4469, %v4469
        %v4472 = vsel %vm2844, %v2839, 4286644096
        %v4474 = vunpack.i.l.bf16 %v4472
        %v4475 = vunpack.i.h.bf16 %v4472
        %v4476 = vmax.f32 %v4474, %v4475
        %v4477 = vrot.slane %v4476, 4
        %v4478 = vmax.f32 %v4476, %v4477
        %v4479 = vrot.slane %v4478, 2
        %v4480 = vmax.f32 %v4478, %v4479
        %v4481 = vrot.slane %v4480, 1
        %v4482 = vmax.f32 %v4480, %v4481
        %v4483 = vpack.i.bf16 %v4482, %v4482
        %v4485 = vsel %vm2844, %v2841, 4286644096
        %v4487 = vunpack.i.l.bf16 %v4485
        %v4488 = vunpack.i.h.bf16 %v4485
        %v4489 = vmax.f32 %v4487, %v4488
        %v4490 = vrot.slane %v4489, 4
        %v4491 = vmax.f32 %v4489, %v4490
        %v4492 = vrot.slane %v4491, 2
        %v4493 = vmax.f32 %v4491, %v4492
        %v4494 = vrot.slane %v4493, 1
        %v4495 = vmax.f32 %v4493, %v4494
        %v4496 = vpack.i.bf16 %v4495, %v4495
        %v4498 = vsel %vm2844, %v2843, 4286644096
        %v4500 = vunpack.i.l.bf16 %v4498
        %v4501 = vunpack.i.h.bf16 %v4498
        %v4502 = vmax.f32 %v4500, %v4501
        %v4503 = vrot.slane %v4502, 4
        %v4504 = vmax.f32 %v4502, %v4503
        %v4505 = vrot.slane %v4504, 2
        %v4506 = vmax.f32 %v4504, %v4505
        %v4507 = vrot.slane %v4506, 1
        %v4508 = vmax.f32 %v4506, %v4507
        %v4509 = vpack.i.bf16 %v4508, %v4508
        %vm4510 = vcmask 523264
        %v4512 = vsel %vm4510, %v2858, 4286644096
        %v4515 = vsel %vm4510, %v2962, 4286644096
        %v4517 = vmax.bf16 %v4512, %v4515
        %v4519 = vsel %vm4510, %v2871, 4286644096
        %v4522 = vsel %vm4510, %v2975, 4286644096
        %v4524 = vmax.bf16 %v4519, %v4522
        %v4526 = vsel %vm4510, %v2884, 4286644096
        %v4529 = vsel %vm4510, %v2988, 4286644096
        %v4531 = vmax.bf16 %v4526, %v4529
        %v4533 = vsel %vm4510, %v2897, 4286644096
        %v4536 = vsel %vm4510, %v3001, 4286644096
        %v4538 = vmax.bf16 %v4533, %v4536
        %v4540 = vsel %vm4510, %v2910, 4286644096
        %v4543 = vsel %vm4510, %v3014, 4286644096
        %v4545 = vmax.bf16 %v4540, %v4543
        %v4547 = vsel %vm4510, %v2923, 4286644096
        %v4550 = vsel %vm4510, %v3027, 4286644096
        %v4552 = vmax.bf16 %v4547, %v4550
        %v4554 = vsel %vm4510, %v2936, 4286644096
        %v4557 = vsel %vm4510, %v3040, 4286644096
        %v4559 = vmax.bf16 %v4554, %v4557
        %v4561 = vsel %vm4510, %v2949, 4286644096
        %v4564 = vsel %vm4510, %v3053, 4286644096
        %v4566 = vmax.bf16 %v4561, %v4564
        %v4568 = vsel %vm4510, %v3066, 4286644096
        %v4571 = vsel %vm4510, %v3170, 4286644096
        %v4573 = vmax.bf16 %v4568, %v4571
        %v4575 = vsel %vm4510, %v3079, 4286644096
        %v4578 = vsel %vm4510, %v3183, 4286644096
        %v4580 = vmax.bf16 %v4575, %v4578
        %v4582 = vsel %vm4510, %v3092, 4286644096
        %v4585 = vsel %vm4510, %v3196, 4286644096
        %v4587 = vmax.bf16 %v4582, %v4585
        %v4589 = vsel %vm4510, %v3105, 4286644096
        %v4592 = vsel %vm4510, %v3209, 4286644096
        %v4594 = vmax.bf16 %v4589, %v4592
        %v4596 = vsel %vm4510, %v3118, 4286644096
        %v4599 = vsel %vm4510, %v3222, 4286644096
        %v4601 = vmax.bf16 %v4596, %v4599
        %v4603 = vsel %vm4510, %v3131, 4286644096
        %v4606 = vsel %vm4510, %v3235, 4286644096
        %v4608 = vmax.bf16 %v4603, %v4606
        %v4610 = vsel %vm4510, %v3144, 4286644096
        %v4613 = vsel %vm4510, %v3248, 4286644096
        %v4615 = vmax.bf16 %v4610, %v4613
        %v4617 = vsel %vm4510, %v3157, 4286644096
        %v4620 = vsel %vm4510, %v3261, 4286644096
        %v4622 = vmax.bf16 %v4617, %v4620
        %v4624 = vsel %vm4510, %v3274, 4286644096
        %v4627 = vsel %vm4510, %v3378, 4286644096
        %v4629 = vmax.bf16 %v4624, %v4627
        %v4631 = vsel %vm4510, %v3287, 4286644096
        %v4634 = vsel %vm4510, %v3391, 4286644096
        %v4636 = vmax.bf16 %v4631, %v4634
        %v4638 = vsel %vm4510, %v3300, 4286644096
        %v4641 = vsel %vm4510, %v3404, 4286644096
        %v4643 = vmax.bf16 %v4638, %v4641
        %v4645 = vsel %vm4510, %v3313, 4286644096
        %v4648 = vsel %vm4510, %v3417, 4286644096
        %v4650 = vmax.bf16 %v4645, %v4648
        %v4652 = vsel %vm4510, %v3326, 4286644096
        %v4655 = vsel %vm4510, %v3430, 4286644096
        %v4657 = vmax.bf16 %v4652, %v4655
        %v4659 = vsel %vm4510, %v3339, 4286644096
        %v4662 = vsel %vm4510, %v3443, 4286644096
        %v4664 = vmax.bf16 %v4659, %v4662
        %v4666 = vsel %vm4510, %v3352, 4286644096
        %v4669 = vsel %vm4510, %v3456, 4286644096
        %v4671 = vmax.bf16 %v4666, %v4669
        %v4673 = vsel %vm4510, %v3365, 4286644096
        %v4676 = vsel %vm4510, %v3469, 4286644096
        %v4678 = vmax.bf16 %v4673, %v4676
        %v4680 = vsel %vm4510, %v3482, 4286644096
        %v4683 = vsel %vm4510, %v3586, 4286644096
        %v4685 = vmax.bf16 %v4680, %v4683
        %v4687 = vsel %vm4510, %v3495, 4286644096
        %v4690 = vsel %vm4510, %v3599, 4286644096
        %v4692 = vmax.bf16 %v4687, %v4690
        %v4694 = vsel %vm4510, %v3508, 4286644096
        %v4697 = vsel %vm4510, %v3612, 4286644096
        %v4699 = vmax.bf16 %v4694, %v4697
        %v4701 = vsel %vm4510, %v3521, 4286644096
        %v4704 = vsel %vm4510, %v3625, 4286644096
        %v4706 = vmax.bf16 %v4701, %v4704
        %v4708 = vsel %vm4510, %v3534, 4286644096
        %v4711 = vsel %vm4510, %v3638, 4286644096
        %v4713 = vmax.bf16 %v4708, %v4711
        %v4715 = vsel %vm4510, %v3547, 4286644096
        %v4718 = vsel %vm4510, %v3651, 4286644096
        %v4720 = vmax.bf16 %v4715, %v4718
        %v4722 = vsel %vm4510, %v3560, 4286644096
        %v4725 = vsel %vm4510, %v3664, 4286644096
        %v4727 = vmax.bf16 %v4722, %v4725
        %v4729 = vsel %vm4510, %v3573, 4286644096
        %v4732 = vsel %vm4510, %v3677, 4286644096
        %v4734 = vmax.bf16 %v4729, %v4732
        %v4736 = vsel %vm4510, %v3690, 4286644096
        %v4739 = vsel %vm4510, %v3794, 4286644096
        %v4741 = vmax.bf16 %v4736, %v4739
        %v4743 = vsel %vm4510, %v3703, 4286644096
        %v4746 = vsel %vm4510, %v3807, 4286644096
        %v4748 = vmax.bf16 %v4743, %v4746
        %v4750 = vsel %vm4510, %v3716, 4286644096
        %v4753 = vsel %vm4510, %v3820, 4286644096
        %v4755 = vmax.bf16 %v4750, %v4753
        %v4757 = vsel %vm4510, %v3729, 4286644096
        %v4760 = vsel %vm4510, %v3833, 4286644096
        %v4762 = vmax.bf16 %v4757, %v4760
        %v4764 = vsel %vm4510, %v3742, 4286644096
        %v4767 = vsel %vm4510, %v3846, 4286644096
        %v4769 = vmax.bf16 %v4764, %v4767
        %v4771 = vsel %vm4510, %v3755, 4286644096
        %v4774 = vsel %vm4510, %v3859, 4286644096
        %v4776 = vmax.bf16 %v4771, %v4774
        %v4778 = vsel %vm4510, %v3768, 4286644096
        %v4781 = vsel %vm4510, %v3872, 4286644096
        %v4783 = vmax.bf16 %v4778, %v4781
        %v4785 = vsel %vm4510, %v3781, 4286644096
        %v4788 = vsel %vm4510, %v3885, 4286644096
        %v4790 = vmax.bf16 %v4785, %v4788
        %v4792 = vsel %vm4510, %v3898, 4286644096
        %v4795 = vsel %vm4510, %v4002, 4286644096
        %v4797 = vmax.bf16 %v4792, %v4795
        %v4799 = vsel %vm4510, %v3911, 4286644096
        %v4802 = vsel %vm4510, %v4015, 4286644096
        %v4804 = vmax.bf16 %v4799, %v4802
        %v4806 = vsel %vm4510, %v3924, 4286644096
        %v4809 = vsel %vm4510, %v4028, 4286644096
        %v4811 = vmax.bf16 %v4806, %v4809
        %v4813 = vsel %vm4510, %v3937, 4286644096
        %v4816 = vsel %vm4510, %v4041, 4286644096
        %v4818 = vmax.bf16 %v4813, %v4816
        %v4820 = vsel %vm4510, %v3950, 4286644096
        %v4823 = vsel %vm4510, %v4054, 4286644096
        %v4825 = vmax.bf16 %v4820, %v4823
        %v4827 = vsel %vm4510, %v3963, 4286644096
        %v4830 = vsel %vm4510, %v4067, 4286644096
        %v4832 = vmax.bf16 %v4827, %v4830
        %v4834 = vsel %vm4510, %v3976, 4286644096
        %v4837 = vsel %vm4510, %v4080, 4286644096
        %v4839 = vmax.bf16 %v4834, %v4837
        %v4841 = vsel %vm4510, %v3989, 4286644096
        %v4844 = vsel %vm4510, %v4093, 4286644096
        %v4846 = vmax.bf16 %v4841, %v4844
        %v4848 = vsel %vm4510, %v4106, 4286644096
        %v4851 = vsel %vm4510, %v4210, 4286644096
        %v4853 = vmax.bf16 %v4848, %v4851
        %v4855 = vsel %vm4510, %v4119, 4286644096
        %v4858 = vsel %vm4510, %v4223, 4286644096
        %v4860 = vmax.bf16 %v4855, %v4858
        %v4862 = vsel %vm4510, %v4132, 4286644096
        %v4865 = vsel %vm4510, %v4236, 4286644096
        %v4867 = vmax.bf16 %v4862, %v4865
        %v4869 = vsel %vm4510, %v4145, 4286644096
        %v4872 = vsel %vm4510, %v4249, 4286644096
        %v4874 = vmax.bf16 %v4869, %v4872
        %v4876 = vsel %vm4510, %v4158, 4286644096
        %v4879 = vsel %vm4510, %v4262, 4286644096
        %v4881 = vmax.bf16 %v4876, %v4879
        %v4883 = vsel %vm4510, %v4171, 4286644096
        %v4886 = vsel %vm4510, %v4275, 4286644096
        %v4888 = vmax.bf16 %v4883, %v4886
        %v4890 = vsel %vm4510, %v4184, 4286644096
        %v4893 = vsel %vm4510, %v4288, 4286644096
        %v4895 = vmax.bf16 %v4890, %v4893
        %v4897 = vsel %vm4510, %v4197, 4286644096
        %v4900 = vsel %vm4510, %v4301, 4286644096
        %v4902 = vmax.bf16 %v4897, %v4900
        %v4904 = vsel %vm4510, %v4314, 4286644096
        %v4907 = vsel %vm4510, %v4418, 4286644096
        %v4909 = vmax.bf16 %v4904, %v4907
        %v4911 = vsel %vm4510, %v4327, 4286644096
        %v4914 = vsel %vm4510, %v4431, 4286644096
        %v4916 = vmax.bf16 %v4911, %v4914
        %v4918 = vsel %vm4510, %v4340, 4286644096
        %v4921 = vsel %vm4510, %v4444, 4286644096
        %v4923 = vmax.bf16 %v4918, %v4921
        %v4925 = vsel %vm4510, %v4353, 4286644096
        %v4928 = vsel %vm4510, %v4457, 4286644096
        %v4930 = vmax.bf16 %v4925, %v4928
        %v4932 = vsel %vm4510, %v4366, 4286644096
        %v4935 = vsel %vm4510, %v4470, 4286644096
        %v4937 = vmax.bf16 %v4932, %v4935
        %v4939 = vsel %vm4510, %v4379, 4286644096
        %v4942 = vsel %vm4510, %v4483, 4286644096
        %v4944 = vmax.bf16 %v4939, %v4942
        %v4946 = vsel %vm4510, %v4392, 4286644096
        %v4949 = vsel %vm4510, %v4496, 4286644096
        %v4951 = vmax.bf16 %v4946, %v4949
        %v4953 = vsel %vm4510, %v4405, 4286644096
        %v4956 = vsel %vm4510, %v4509, 4286644096
        %v4958 = vmax.bf16 %v4953, %v4956
        %v5023 = vunpack.c.l.b16 %v4517
        %v5024 = vunpack.c.l.b16 %v4524
        %v5025 = vunpack.c.l.b16 %v4531
        %v5026 = vunpack.c.l.b16 %v4538
        %v5027 = vunpack.c.l.b16 %v4545
        %v5028 = vunpack.c.l.b16 %v4552
        %v5029 = vunpack.c.l.b16 %v4559
        %v5030 = vunpack.c.l.b16 %v4566
        %v5031 = vunpack.c.l.b16 %v4573
        %v5032 = vunpack.c.l.b16 %v4580
        %v5033 = vunpack.c.l.b16 %v4587
        %v5034 = vunpack.c.l.b16 %v4594
        %v5035 = vunpack.c.l.b16 %v4601
        %v5036 = vunpack.c.l.b16 %v4608
        %v5037 = vunpack.c.l.b16 %v4615
        %v5038 = vunpack.c.l.b16 %v4622
        %v5039 = vunpack.c.l.b16 %v4629
        %v5040 = vunpack.c.l.b16 %v4636
        %v5041 = vunpack.c.l.b16 %v4643
        %v5042 = vunpack.c.l.b16 %v4650
        %v5043 = vunpack.c.l.b16 %v4657
        %v5044 = vunpack.c.l.b16 %v4664
        %v5045 = vunpack.c.l.b16 %v4671
        %v5046 = vunpack.c.l.b16 %v4678
        %v5047 = vunpack.c.l.b16 %v4685
        %v5048 = vunpack.c.l.b16 %v4692
        %v5049 = vunpack.c.l.b16 %v4699
        %v5050 = vunpack.c.l.b16 %v4706
        %v5051 = vunpack.c.l.b16 %v4713
        %v5052 = vunpack.c.l.b16 %v4720
        %v5053 = vunpack.c.l.b16 %v4727
        %v5054 = vunpack.c.l.b16 %v4734
        %v5055 = vunpack.c.l.b16 %v4741
        %v5056 = vunpack.c.l.b16 %v4748
        %v5057 = vunpack.c.l.b16 %v4755
        %v5058 = vunpack.c.l.b16 %v4762
        %v5059 = vunpack.c.l.b16 %v4769
        %v5060 = vunpack.c.l.b16 %v4776
        %v5061 = vunpack.c.l.b16 %v4783
        %v5062 = vunpack.c.l.b16 %v4790
        %v5063 = vunpack.c.l.b16 %v4797
        %v5064 = vunpack.c.l.b16 %v4804
        %v5065 = vunpack.c.l.b16 %v4811
        %v5066 = vunpack.c.l.b16 %v4818
        %v5067 = vunpack.c.l.b16 %v4825
        %v5068 = vunpack.c.l.b16 %v4832
        %v5069 = vunpack.c.l.b16 %v4839
        %v5070 = vunpack.c.l.b16 %v4846
        %v5071 = vunpack.c.l.b16 %v4853
        %v5072 = vunpack.c.l.b16 %v4860
        %v5073 = vunpack.c.l.b16 %v4867
        %v5074 = vunpack.c.l.b16 %v4874
        %v5075 = vunpack.c.l.b16 %v4881
        %v5076 = vunpack.c.l.b16 %v4888
        %v5077 = vunpack.c.l.b16 %v4895
        %v5078 = vunpack.c.l.b16 %v4902
        %v5079 = vunpack.c.l.b16 %v4909
        %v5080 = vunpack.c.l.b16 %v4916
        %v5081 = vunpack.c.l.b16 %v4923
        %v5082 = vunpack.c.l.b16 %v4930
        %v5083 = vunpack.c.l.b16 %v4937
        %v5084 = vunpack.c.l.b16 %v4944
        %v5085 = vunpack.c.l.b16 %v4951
        %v5086 = vunpack.c.l.b16 %v4958
        %v5087 = vpack.c.b16 %v5023, %v5023
        %v5088 = vpack.c.b16 %v5024, %v5024
        %v5089 = vpack.c.b16 %v5025, %v5025
        %v5090 = vpack.c.b16 %v5026, %v5026
        %v5091 = vpack.c.b16 %v5027, %v5027
        %v5092 = vpack.c.b16 %v5028, %v5028
        %v5093 = vpack.c.b16 %v5029, %v5029
        %v5094 = vpack.c.b16 %v5030, %v5030
        %v5095 = vpack.c.b16 %v5031, %v5031
        %v5096 = vpack.c.b16 %v5032, %v5032
        %v5097 = vpack.c.b16 %v5033, %v5033
        %v5098 = vpack.c.b16 %v5034, %v5034
        %v5099 = vpack.c.b16 %v5035, %v5035
        %v5100 = vpack.c.b16 %v5036, %v5036
        %v5101 = vpack.c.b16 %v5037, %v5037
        %v5102 = vpack.c.b16 %v5038, %v5038
        %v5103 = vpack.c.b16 %v5039, %v5039
        %v5104 = vpack.c.b16 %v5040, %v5040
        %v5105 = vpack.c.b16 %v5041, %v5041
        %v5106 = vpack.c.b16 %v5042, %v5042
        %v5107 = vpack.c.b16 %v5043, %v5043
        %v5108 = vpack.c.b16 %v5044, %v5044
        %v5109 = vpack.c.b16 %v5045, %v5045
        %v5110 = vpack.c.b16 %v5046, %v5046
        %v5111 = vpack.c.b16 %v5047, %v5047
        %v5112 = vpack.c.b16 %v5048, %v5048
        %v5113 = vpack.c.b16 %v5049, %v5049
        %v5114 = vpack.c.b16 %v5050, %v5050
        %v5115 = vpack.c.b16 %v5051, %v5051
        %v5116 = vpack.c.b16 %v5052, %v5052
        %v5117 = vpack.c.b16 %v5053, %v5053
        %v5118 = vpack.c.b16 %v5054, %v5054
        %v5119 = vpack.c.b16 %v5055, %v5055
        %v5120 = vpack.c.b16 %v5056, %v5056
        %v5121 = vpack.c.b16 %v5057, %v5057
        %v5122 = vpack.c.b16 %v5058, %v5058
        %v5123 = vpack.c.b16 %v5059, %v5059
        %v5124 = vpack.c.b16 %v5060, %v5060
        %v5125 = vpack.c.b16 %v5061, %v5061
        %v5126 = vpack.c.b16 %v5062, %v5062
        %v5127 = vpack.c.b16 %v5063, %v5063
        %v5128 = vpack.c.b16 %v5064, %v5064
        %v5129 = vpack.c.b16 %v5065, %v5065
        %v5130 = vpack.c.b16 %v5066, %v5066
        %v5131 = vpack.c.b16 %v5067, %v5067
        %v5132 = vpack.c.b16 %v5068, %v5068
        %v5133 = vpack.c.b16 %v5069, %v5069
        %v5134 = vpack.c.b16 %v5070, %v5070
        %v5135 = vpack.c.b16 %v5071, %v5071
        %v5136 = vpack.c.b16 %v5072, %v5072
        %v5137 = vpack.c.b16 %v5073, %v5073
        %v5138 = vpack.c.b16 %v5074, %v5074
        %v5139 = vpack.c.b16 %v5075, %v5075
        %v5140 = vpack.c.b16 %v5076, %v5076
        %v5141 = vpack.c.b16 %v5077, %v5077
        %v5142 = vpack.c.b16 %v5078, %v5078
        %v5143 = vpack.c.b16 %v5079, %v5079
        %v5144 = vpack.c.b16 %v5080, %v5080
        %v5145 = vpack.c.b16 %v5081, %v5081
        %v5146 = vpack.c.b16 %v5082, %v5082
        %v5147 = vpack.c.b16 %v5083, %v5083
        %v5148 = vpack.c.b16 %v5084, %v5084
        %v5149 = vpack.c.b16 %v5085, %v5085
        %v5150 = vpack.c.b16 %v5086, %v5086
        %v5151 = vunpack.c.l.b16 %v5087
        %v5152 = vunpack.c.l.b16 %v5088
        %v5153 = vunpack.c.l.b16 %v5089
        %v5154 = vunpack.c.l.b16 %v5090
        %v5155 = vunpack.c.l.b16 %v5091
        %v5156 = vunpack.c.l.b16 %v5092
        %v5157 = vunpack.c.l.b16 %v5093
        %v5158 = vunpack.c.l.b16 %v5094
        %v5159 = vunpack.c.l.b16 %v5095
        %v5160 = vunpack.c.l.b16 %v5096
        %v5161 = vunpack.c.l.b16 %v5097
        %v5162 = vunpack.c.l.b16 %v5098
        %v5163 = vunpack.c.l.b16 %v5099
        %v5164 = vunpack.c.l.b16 %v5100
        %v5165 = vunpack.c.l.b16 %v5101
        %v5166 = vunpack.c.l.b16 %v5102
        %v5167 = vunpack.c.l.b16 %v5103
        %v5168 = vunpack.c.l.b16 %v5104
        %v5169 = vunpack.c.l.b16 %v5105
        %v5170 = vunpack.c.l.b16 %v5106
        %v5171 = vunpack.c.l.b16 %v5107
        %v5172 = vunpack.c.l.b16 %v5108
        %v5173 = vunpack.c.l.b16 %v5109
        %v5174 = vunpack.c.l.b16 %v5110
        %v5175 = vunpack.c.l.b16 %v5111
        %v5176 = vunpack.c.l.b16 %v5112
        %v5177 = vunpack.c.l.b16 %v5113
        %v5178 = vunpack.c.l.b16 %v5114
        %v5179 = vunpack.c.l.b16 %v5115
        %v5180 = vunpack.c.l.b16 %v5116
        %v5181 = vunpack.c.l.b16 %v5117
        %v5182 = vunpack.c.l.b16 %v5118
        %v5183 = vunpack.c.l.b16 %v5119
        %v5184 = vunpack.c.l.b16 %v5120
        %v5185 = vunpack.c.l.b16 %v5121
        %v5186 = vunpack.c.l.b16 %v5122
        %v5187 = vunpack.c.l.b16 %v5123
        %v5188 = vunpack.c.l.b16 %v5124
        %v5189 = vunpack.c.l.b16 %v5125
        %v5190 = vunpack.c.l.b16 %v5126
        %v5191 = vunpack.c.l.b16 %v5127
        %v5192 = vunpack.c.l.b16 %v5128
        %v5193 = vunpack.c.l.b16 %v5129
        %v5194 = vunpack.c.l.b16 %v5130
        %v5195 = vunpack.c.l.b16 %v5131
        %v5196 = vunpack.c.l.b16 %v5132
        %v5197 = vunpack.c.l.b16 %v5133
        %v5198 = vunpack.c.l.b16 %v5134
        %v5199 = vunpack.c.l.b16 %v5135
        %v5200 = vunpack.c.l.b16 %v5136
        %v5201 = vunpack.c.l.b16 %v5137
        %v5202 = vunpack.c.l.b16 %v5138
        %v5203 = vunpack.c.l.b16 %v5139
        %v5204 = vunpack.c.l.b16 %v5140
        %v5205 = vunpack.c.l.b16 %v5141
        %v5206 = vunpack.c.l.b16 %v5142
        %v5207 = vunpack.c.l.b16 %v5143
        %v5208 = vunpack.c.l.b16 %v5144
        %v5209 = vunpack.c.l.b16 %v5145
        %v5210 = vunpack.c.l.b16 %v5146
        %v5211 = vunpack.c.l.b16 %v5147
        %v5212 = vunpack.c.l.b16 %v5148
        %v5213 = vunpack.c.l.b16 %v5149
        %v5214 = vunpack.c.l.b16 %v5150
        %vm5215 = vcmask 1041409
        %v5216 = vsel %vm5215, %v5152, %v5151
        %vm5217 = vcmask 1042434
        %v5218 = vsel %vm5217, %v5153, %v5216
        %vm5219 = vcmask 1043459
        %v5220 = vsel %vm5219, %v5154, %v5218
        %vm5221 = vcmask 1044484
        %v5222 = vsel %vm5221, %v5155, %v5220
        %vm5223 = vcmask 1045509
        %v5224 = vsel %vm5223, %v5156, %v5222
        %vm5225 = vcmask 1046534
        %v5226 = vsel %vm5225, %v5157, %v5224
        %vm5227 = vcmask 1047559
        %v5228 = vsel %vm5227, %v5158, %v5226
        %v5229 = vsel %vm5215, %v5160, %v5159
        %v5230 = vsel %vm5217, %v5161, %v5229
        %v5231 = vsel %vm5219, %v5162, %v5230
        %v5232 = vsel %vm5221, %v5163, %v5231
        %v5233 = vsel %vm5223, %v5164, %v5232
        %v5234 = vsel %vm5225, %v5165, %v5233
        %v5235 = vsel %vm5227, %v5166, %v5234
        %v5236 = vsel %vm5215, %v5168, %v5167
        %v5237 = vsel %vm5217, %v5169, %v5236
        %v5238 = vsel %vm5219, %v5170, %v5237
        %v5239 = vsel %vm5221, %v5171, %v5238
        %v5240 = vsel %vm5223, %v5172, %v5239
        %v5241 = vsel %vm5225, %v5173, %v5240
        %v5242 = vsel %vm5227, %v5174, %v5241
        %v5243 = vsel %vm5215, %v5176, %v5175
        %v5244 = vsel %vm5217, %v5177, %v5243
        %v5245 = vsel %vm5219, %v5178, %v5244
        %v5246 = vsel %vm5221, %v5179, %v5245
        %v5247 = vsel %vm5223, %v5180, %v5246
        %v5248 = vsel %vm5225, %v5181, %v5247
        %v5249 = vsel %vm5227, %v5182, %v5248
        %v5250 = vsel %vm5215, %v5184, %v5183
        %v5251 = vsel %vm5217, %v5185, %v5250
        %v5252 = vsel %vm5219, %v5186, %v5251
        %v5253 = vsel %vm5221, %v5187, %v5252
        %v5254 = vsel %vm5223, %v5188, %v5253
        %v5255 = vsel %vm5225, %v5189, %v5254
        %v5256 = vsel %vm5227, %v5190, %v5255
        %v5257 = vsel %vm5215, %v5192, %v5191
        %v5258 = vsel %vm5217, %v5193, %v5257
        %v5259 = vsel %vm5219, %v5194, %v5258
        %v5260 = vsel %vm5221, %v5195, %v5259
        %v5261 = vsel %vm5223, %v5196, %v5260
        %v5262 = vsel %vm5225, %v5197, %v5261
        %v5263 = vsel %vm5227, %v5198, %v5262
        %v5264 = vsel %vm5215, %v5200, %v5199
        %v5265 = vsel %vm5217, %v5201, %v5264
        %v5266 = vsel %vm5219, %v5202, %v5265
        %v5267 = vsel %vm5221, %v5203, %v5266
        %v5268 = vsel %vm5223, %v5204, %v5267
        %v5269 = vsel %vm5225, %v5205, %v5268
        %v5270 = vsel %vm5227, %v5206, %v5269
        %v5271 = vsel %vm5215, %v5208, %v5207
        %v5272 = vsel %vm5217, %v5209, %v5271
        %v5273 = vsel %vm5219, %v5210, %v5272
        %v5274 = vsel %vm5221, %v5211, %v5273
        %v5275 = vsel %vm5223, %v5212, %v5274
        %v5276 = vsel %vm5225, %v5213, %v5275
        %v5277 = vsel %vm5227, %v5214, %v5276
        %v5278 = vpack.c.b16 %v5228, %v5228
        %v5279 = vpack.c.b16 %v5235, %v5235
        %v5280 = vpack.c.b16 %v5242, %v5242
        %v5281 = vpack.c.b16 %v5249, %v5249
        %v5282 = vpack.c.b16 %v5256, %v5256
        %v5283 = vpack.c.b16 %v5263, %v5263
        %v5284 = vpack.c.b16 %v5270, %v5270
        %v5285 = vpack.c.b16 %v5277, %v5277
        %vm5294 = vcmask 519168
        %5295 = vst.msk [vmem:[%s163] sm:$0xf] %vm5294, %v5278
        %5296 = vst.msk [vmem:[%s163 + $0x4] sm:$0xf] %vm5294, %v5279
        %5297 = vst.msk [vmem:[%s163 + $0x8] sm:$0xf] %vm5294, %v5280
        %5298 = vst.msk [vmem:[%s163 + $0xc] sm:$0xf] %vm5294, %v5281
        %5299 = vst.msk [vmem:[%s163 + $0x10] sm:$0xf] %vm5294, %v5282
        %5300 = vst.msk [vmem:[%s163 + $0x14] sm:$0xf] %vm5294, %v5283
        %5301 = vst.msk [vmem:[%s163 + $0x18] sm:$0xf] %vm5294, %v5284
        %5302 = vst.msk [vmem:[%s163 + $0x1c] sm:$0xf] %vm5294, %v5285
        %s5303 = sand.u32 %s93, 1
        %s5304 = scalar_lea.sflag [#allocation5], %s5303
        %s5305 = sand.u32 %s93, 1
        %s5306 = smul.addr %s5305, 32
        %s5307 = scalar_lea.vmem [#allocation4], %s5306
        // Predicated region
        $region33: #{tpu_custom_call.1} parent=31 // pred_check
          %p5308 = pneg %p103
        $region34: #{tpu_custom_call.1} parent=31 // pred_check_branch
          %5310 = sbr.rel (%p5308) target = $region36
        $region35: #{tpu_custom_call.1} parent=31 // pred_region
          %s5312 = ssub.s32 512, 512
          %5313 = vsyncadd %s5304, %s5312
          %s5314 = smul.addr %s17, 8
          %s5315 = smul.addr %s5314, 64
          %s5316 = scalar_lea.hbm %s3, %s5315
          %s5317 = sshll.u32 %s5307, 4
          %s5318 = int_to_ptr.vmem [resolvable:$true] %s5317
          %5323 = dma.vmem_to_hbm [thread:$0]  %s5318, 512, %s5316, %s5304, 64, 64, 4
        $region36: #{tpu_custom_call.1} parent=31 // pred_fallthru
          _
      $region32: #{tpu_custom_call.1} parent=5 // pred_fallthru
        _
      %p5324 = scmp.le.s32.totalorder 2, %s12
      // Predicated region
      $region37: #{tpu_custom_call.1} parent=5 // pred_check
        %p5325 = pneg %p5324
      $region38: #{tpu_custom_call.1} parent=5 // pred_check_branch
        %5327 = sbr.rel (%p5325) target = $region40
      $region39: #{tpu_custom_call.1} parent=5 // pred_region
        %s5328 = ssub.s32 %s12, 2
        // Predicated region
        $region41: #{tpu_custom_call.1} parent=39 // pred_check
          %p5329 = pneg %p109
        $region42: #{tpu_custom_call.1} parent=39 // pred_check_branch
          %5331 = sbr.rel (%p5329) target = $region44
        $region43: #{tpu_custom_call.1} parent=39 // pred_region
          %s5332 = sand.u32 %s94, 1
          %s5333 = scalar_lea.sflag [#allocation5], %s5332
          %s5334 = sand.u32 %s94, 1
          %s5335 = smul.addr %s5334, 32
          %s5336 = scalar_lea.vmem [#allocation4], %s5335
          %5337 = dma.done %s5333, 512
        $region44: #{tpu_custom_call.1} parent=39 // pred_fallthru
          _
      $region40: #{tpu_custom_call.1} parent=5 // pred_fallthru
        _
    $region6: #{tpu_custom_call.1} parent=1 // loop_footer
      %s16 = sadd.s32 1, %s12
    $region7: #{tpu_custom_call.1} parent=1 // loop_footer_branch
      %11 = sbr.rel target = $region3
    $region8: #{tpu_custom_call.1} parent=1 // loop_exit
      _
    %5338 = vsyncpa [#allocation5], 1
    %s5339 = scalar_lea.sflag [#allocation5], 1
    %5340 = vsyncpa %s5339, 1

</llo_original>
